<compile_context>
chip_gen: v7x
topology: tpu7x:2x2x1
jax: 0.10.0
libtpu: 0.0.40
codegen_flags: <defaults>
</compile_context>

<pallas_src>
import jax
import jax.numpy as jnp
from jax.experimental import pallas as pl
from jax.experimental.pallas import tpu as pltpu


def _round_up(x, m):
    return ((x + m - 1) // m) * m


# ----------------------------------------------------------------------------
# Fused decoder kernel.
#   p1 == 0:  t  = x @ W7 + b7                 (f32 acc, cast bf16)
#             o1 = t @ Wup1 + b_up1            (tm, 4*128) -> VMEM scratch
#   every p1: acc = o1[p1] @ W2h + p4[p1] @ W2p + b2      (tm, 1024) f32
#             out = acc.bf16 @ W3h_bd + p3[p1] @ W3p_bd + b3   (tm, 16)
# W3h_bd / W3p_bd are block-diagonal (one block per (r2,c2) position) copies of
# the 2x2 up3 weight, so the epilogue is just two more dense matmuls.
# ----------------------------------------------------------------------------
def _decoder_kernel(x_ref, p4_ref, p3_ref,
                    w7_ref, b7_ref, wu1_ref, bu1_ref,
                    w2h_ref, w2p_ref, b2_ref,
                    w3h_ref, w3p_ref, b3_ref,
                    o_ref, o1_scr):
    p = pl.program_id(1)

    # Stage 1: conv_7 + upsample_1, computed once per M tile, kept in VMEM.
    @pl.when(p == 0)
    def _():
        t = jnp.dot(x_ref[...], w7_ref[...], preferred_element_type=jnp.float32)
        t = (t + b7_ref[...]).astype(jnp.bfloat16)
        o1 = jnp.dot(t, wu1_ref[...], preferred_element_type=jnp.float32)
        o1 = (o1 + bu1_ref[...]).astype(jnp.bfloat16)
        for k in range(4):                       # static unroll: 4 lane slices
            o1_scr[k] = o1[:, k * 128:(k + 1) * 128]

    # Stage 2: upsample_2 (+pool_4 split-K) + upsample_3 (+pool_3 split-K).
    a1 = o1_scr[p]                               # (tm, 128), dyn leading index
    acc = jnp.dot(a1, w2h_ref[...], preferred_element_type=jnp.float32)
    acc = acc + jnp.dot(p4_ref[0], w2p_ref[...],
                        preferred_element_type=jnp.float32)
    acc = acc + b2_ref[...]                      # upsample_2 output, this p1
    acc_b = acc.astype(jnp.bfloat16)
    o = jnp.dot(acc_b, w3h_ref[...], preferred_element_type=jnp.float32)
    o = o + jnp.dot(p3_ref[0], w3p_ref[...], preferred_element_type=jnp.float32)
    o_ref[0] = o + b3_ref[...]


# ----------------------------------------------------------------------------
# Forward pass (NCHW in / NCHW out, matching the PyTorch module).
# ----------------------------------------------------------------------------
def table_decoder_forward(prep, x, pool_3_out, pool_4_out):
    N, cin, H, W = x.shape
    assert cin == 256
    C4 = pool_4_out.shape[1]
    C3 = pool_3_out.shape[1]
    assert pool_4_out.shape == (N, C4, 2 * H, 2 * W)
    assert pool_3_out.shape == (N, C3, 4 * H, 4 * W)

    M = N * H * W
    tm = 512 if M >= 512 else _round_up(M, 16)   # big M tiles (MXU + overhead)
    gm = pl.cdiv(M, tm)
    Mp = gm * tm

    def pad_rows(a, axis):
        if Mp == M:
            return a
        pw = [(0, 0)] * a.ndim
        pw[axis] = (0, Mp - M)
        return jnp.pad(a, pw)

    # x: NCHW -> (Mp, 256) bf16, rows ordered (n, h, w)
    x2d = jnp.transpose(x, (0, 2, 3, 1)).reshape(M, cin).astype(jnp.bfloat16)
    x2d = pad_rows(x2d, 0)

    # pool_4: NCHW (N,C4,2H,2W) -> (4, Mp, C4) indexed [p1=(r1,c1), (n,h,w), c]
    p4a = pool_4_out.reshape(N, C4, H, 2, W, 2)
    p4a = jnp.transpose(p4a, (3, 5, 0, 2, 4, 1)).reshape(4, M, C4)
    p4a = pad_rows(p4a.astype(jnp.bfloat16), 1)

    # pool_3: NCHW (N,C3,4H,4W) -> (4, Mp, 4*C3) indexed [p1, (n,h,w), (p2, c)]
    p3a = pool_3_out.reshape(N, C3, H, 2, 2, W, 2, 2)
    p3a = jnp.transpose(p3a, (3, 6, 0, 2, 5, 4, 7, 1)).reshape(4, M, 4 * C3)
    p3a = pad_rows(p3a.astype(jnp.bfloat16), 1)

    o3 = pl.pallas_call(
        _decoder_kernel,
        out_shape=jax.ShapeDtypeStruct((4, Mp, 16), jnp.float32),
        grid_spec=pltpu.PrefetchScalarGridSpec(
            num_scalar_prefetch=0,
            grid=(gm, 4),                         # p1 innermost: o1 reuse
            in_specs=[
                pl.BlockSpec((tm, 256), lambda i, p: (i, 0)),         # x
                pl.BlockSpec((1, tm, C4), lambda i, p: (p, i, 0)),    # pool_4
                pl.BlockSpec((1, tm, 4 * C3), lambda i, p: (p, i, 0)),# pool_3
                pl.BlockSpec((256, 256), lambda i, p: (0, 0)),        # w7
                pl.BlockSpec((1, 256), lambda i, p: (0, 0)),          # b7
                pl.BlockSpec((256, 512), lambda i, p: (0, 0)),        # wu1
                pl.BlockSpec((1, 512), lambda i, p: (0, 0)),          # bu1
                pl.BlockSpec((128, 1024), lambda i, p: (0, 0)),       # w2h
                pl.BlockSpec((C4, 1024), lambda i, p: (0, 0)),        # w2p
                pl.BlockSpec((1, 1024), lambda i, p: (0, 0)),         # b2
                pl.BlockSpec((1024, 16), lambda i, p: (0, 0)),        # w3h_bd
                pl.BlockSpec((4 * C3, 16), lambda i, p: (0, 0)),      # w3p_bd
                pl.BlockSpec((1, 16), lambda i, p: (0, 0)),           # b3
            ],
            out_specs=pl.BlockSpec((1, tm, 16), lambda i, p: (p, i, 0)),
            scratch_shapes=[pltpu.VMEM((4, tm, 128), jnp.bfloat16)],
        ),
        compiler_params=pltpu.CompilerParams(
            dimension_semantics=("parallel", "arbitrary"),
            vmem_limit_bytes=32 * 1024 * 1024),
    )(x2d, p4a, p3a, prep["w7"], prep["b7"], prep["wu1"], prep["bu1"],
      prep["w2h"], prep["w2p"], prep["b2"],
      prep["w3h_bd"], prep["w3p_bd"], prep["b3"])

    # unscramble (p1, m, (p2, p3)) -> NCHW (N, 1, 8H, 8W)
    o3 = o3[:, :M, :].reshape(2, 2, N, H, W, 2, 2, 2, 2)
    o3 = jnp.transpose(o3, (2, 3, 0, 5, 7, 4, 1, 6, 8)).reshape(N, 8 * H, 8 * W)
    return o3[:, None, :, :]


# TODO(synk): general kernel_size != stride (overlapping receptive field) conv /
# conv-transpose is not implemented; this covers the TableNet k == s config.


# ----------------------------------------------------------------------------
# Parameters (synthetic, deterministic) and kernel-ready preparation.
# ----------------------------------------------------------------------------
def init_params(key, channels=(64, 32)):
    ks = jax.random.split(key, 8)
    sd = 0.02

    def nrm(k, shape):
        return (sd * jax.random.normal(k, shape)).astype(jnp.float32)

    return {
        # conv_7_table: Conv2d(256 -> 256, k=1, s=1); weight stored (Cout, Cin)
        "w7": nrm(ks[0], (256, 256)),
        "b7": nrm(ks[1], (256,)),
        # upsample_1_table: ConvTranspose2d(256 -> 128, k=2, s=2): (Cin,Cout,kh,kw)
        "w_up1": nrm(ks[2], (256, 128, 2, 2)),
        "b_up1": nrm(ks[3], (128,)),
        # upsample_2_table: ConvTranspose2d(128+channels[0] -> 256, k=2, s=2)
        "w_up2": nrm(ks[4], (128 + channels[0], 256, 2, 2)),
        "b_up2": nrm(ks[5], (256,)),
        # upsample_3_table: ConvTranspose2d(256+channels[1] -> 1, k=2, s=2)
        "w_up3": nrm(ks[6], (256 + channels[1], 1, 2, 2)),
        "b_up3": nrm(ks[7], (1,)),
    }


def prepare_params(params, channels=(64, 32)):
    f32, bf16 = jnp.float32, jnp.bfloat16

    # conv_7: (Cout, Cin) -> matmul weight (Cin, Cout)
    w7 = params["w7"].T.astype(bf16)
    b7 = params["b7"].reshape(1, -1).astype(f32)

    def tconv_mat(w):   # (Cin, Cout, kh, kw) -> (Cin, kh*kw*Cout), cols (r,c,co)
        cin, cout, kh, kw = w.shape
        return jnp.transpose(w, (0, 2, 3, 1)).reshape(cin, kh * kw * cout)

    wu1 = tconv_mat(params["w_up1"]).astype(bf16)                # (256, 512)
    bu1 = jnp.tile(params["b_up1"], 4).reshape(1, -1).astype(f32)

    w2 = tconv_mat(params["w_up2"])                              # (128+C4, 1024)
    w2h = w2[:128].astype(bf16)
    w2p = w2[128:].astype(bf16)
    b2 = jnp.tile(params["b_up2"], 4).reshape(1, -1).astype(f32)

    w3 = tconv_mat(params["w_up3"])                              # (256+C3, 4)
    w3h, w3p = w3[:256], w3[256:]
    eye4 = jnp.eye(4, dtype=f32)
    w3h_bd = jnp.kron(eye4, w3h).astype(bf16)                    # (1024, 16)
    w3p_bd = jnp.kron(eye4, w3p).astype(bf16)                    # (4*C3, 16)
    b3 = jnp.full((1, 16), params["b_up3"][0], dtype=f32)

    return dict(w7=w7, b7=b7, wu1=wu1, bu1=bu1, w2h=w2h, w2p=w2p, b2=b2,
                w3h_bd=w3h_bd, w3p_bd=w3p_bd, b3=b3,
                # extras used only by the plain-jnp reference
                w2_full=w2.astype(bf16), w3_full=w3.astype(bf16),
                b3_scalar=params["b_up3"].astype(f32))


# ----------------------------------------------------------------------------
# Straightforward per-layer reference (explicit concat + pixel scatter) with
# the same bf16-operand / f32-accumulate numerics; validates the fused layout.
# ----------------------------------------------------------------------------
def table_decoder_reference(prep, x, pool_3_out, pool_4_out):
    bf16, f32 = jnp.bfloat16, jnp.float32
    N, _, H, W = x.shape

    def mm(a, w, b):
        return jnp.dot(a.astype(bf16), w, preferred_element_type=f32) + b

    def scatter2x2(y, n, h, w, c):   # (n*h*w, 4*c) cols (r,c,co) -> (n,2h,2w,c)
        y = y.reshape(n, h, w, 2, 2, c)
        return jnp.transpose(y, (0, 1, 3, 2, 4, 5)).reshape(n, 2 * h, 2 * w, c)

    xn = jnp.transpose(x, (0, 2, 3, 1)).reshape(-1, 256)
    t = mm(xn, prep["w7"], prep["b7"]).astype(bf16)              # conv_7
    o1 = mm(t, prep["wu1"], prep["bu1"]).astype(bf16)            # upsample_1
    o1 = scatter2x2(o1, N, H, W, 128)

    p4 = jnp.transpose(pool_4_out, (0, 2, 3, 1)).astype(bf16)
    a = jnp.concatenate([o1, p4], axis=-1)
    a = a.reshape(-1, a.shape[-1])
    o2 = mm(a, prep["w2_full"], prep["b2"]).astype(bf16)         # upsample_2
    o2 = scatter2x2(o2, N, 2 * H, 2 * W, 256)

    p3 = jnp.transpose(pool_3_out, (0, 2, 3, 1)).astype(bf16)
    a = jnp.concatenate([o2, p3], axis=-1)
    a = a.reshape(-1, a.shape[-1])
    o3 = mm(a, prep["w3_full"], prep["b3_scalar"])               # upsample_3
    o3 = scatter2x2(o3, N, 4 * H, 4 * W, 1)
    return jnp.transpose(o3, (0, 3, 1, 2))


if __name__ == "__main__":
    channels = (64, 32)          # (pool_4 channels, pool_3 channels)
    B, H, W = 2, 4, 4            # small spatial; decoder upsamples 4 -> 32

    key = jax.random.PRNGKey(0)
    kx, k3, k4 = jax.random.split(key, 3)
    x = jax.random.normal(kx, (B, 256, H, W), dtype=jnp.float32)
    pool_4_out = jax.random.normal(k4, (B, channels[0], 2 * H, 2 * W),
                                   dtype=jnp.float32)
    pool_3_out = jax.random.normal(k3, (B, channels[1], 4 * H, 4 * W),
                                   dtype=jnp.float32)

    prep = prepare_params(init_params(jax.random.PRNGKey(42), channels),
                          channels)

    out = jax.jit(table_decoder_forward)(prep, x, pool_3_out, pool_4_out)
    out = jax.block_until_ready(out)

    # Shape / sanity: matches PyTorch output (B, 1, 8H, 8W).
    assert out.shape == (B, 1, 8 * H, 8 * W), out.shape
    assert bool(jnp.all(jnp.isfinite(out)))

    # Cross-check the fused Pallas pipeline against the straightforward
    # concat + scatter reference (same bf16/f32 numerics).
    ref = jax.block_until_ready(
        jax.jit(table_decoder_reference)(prep, x, pool_3_out, pool_4_out))
    err = float(jnp.max(jnp.abs(out - ref)))
    assert err < 1e-2, f"max abs diff vs reference: {err}"

    print("KERNEL_OK")
</pallas_src>

<mosaic_0001>
module attributes {stable_mosaic.version = 11 : i64} {
  func.func @_decoder_kernel(%arg0: i32, %arg1: i32, %arg2: memref<32x256xbf16, #tpu.memory_space<vmem>>, %arg3: memref<1x32x64xbf16, #tpu.memory_space<vmem>>, %arg4: memref<1x32x128xbf16, #tpu.memory_space<vmem>>, %arg5: memref<256x256xbf16, #tpu.memory_space<vmem>>, %arg6: memref<1x256xf32, #tpu.memory_space<vmem>>, %arg7: memref<256x512xbf16, #tpu.memory_space<vmem>>, %arg8: memref<1x512xf32, #tpu.memory_space<vmem>>, %arg9: memref<128x1024xbf16, #tpu.memory_space<vmem>>, %arg10: memref<64x1024xbf16, #tpu.memory_space<vmem>>, %arg11: memref<1x1024xf32, #tpu.memory_space<vmem>>, %arg12: memref<1024x16xbf16, #tpu.memory_space<vmem>>, %arg13: memref<128x16xbf16, #tpu.memory_space<vmem>>, %arg14: memref<1x16xf32, #tpu.memory_space<vmem>>, %arg15: memref<1x32x16xf32, #tpu.memory_space<vmem>>, %arg16: memref<4x32x128xbf16, #tpu.memory_space<vmem>>) attributes {dimension_semantics = [#tpu.dimension_semantics<parallel>, #tpu.dimension_semantics<arbitrary>], iteration_bounds = array<i64: 1, 4>, scalar_prefetch = 0 : i64, scratch_operands = 1 : i64, tpu.core_type = #tpu.core_type<tc>, window_params = [{transform_indices = @transform_0, window_bounds = array<i64: 32, 256>}, {transform_indices = @transform_1, window_bounds = array<i64: 1, 32, 64>}, {transform_indices = @transform_2, window_bounds = array<i64: 1, 32, 128>}, {pipeline_mode = #tpu.pipeline_mode<synchronous>, transform_indices = @transform_3, window_bounds = array<i64: 256, 256>}, {pipeline_mode = #tpu.pipeline_mode<synchronous>, transform_indices = @transform_4, window_bounds = array<i64: 1, 256>}, {pipeline_mode = #tpu.pipeline_mode<synchronous>, transform_indices = @transform_5, window_bounds = array<i64: 256, 512>}, {pipeline_mode = #tpu.pipeline_mode<synchronous>, transform_indices = @transform_6, window_bounds = array<i64: 1, 512>}, {pipeline_mode = #tpu.pipeline_mode<synchronous>, transform_indices = @transform_7, window_bounds = array<i64: 128, 1024>}, {pipeline_mode = #tpu.pipeline_mode<synchronous>, transform_indices = @transform_8, window_bounds = array<i64: 64, 1024>}, {pipeline_mode = #tpu.pipeline_mode<synchronous>, transform_indices = @transform_9, window_bounds = array<i64: 1, 1024>}, {pipeline_mode = #tpu.pipeline_mode<synchronous>, transform_indices = @transform_10, window_bounds = array<i64: 1024, 16>}, {pipeline_mode = #tpu.pipeline_mode<synchronous>, transform_indices = @transform_11, window_bounds = array<i64: 128, 16>}, {pipeline_mode = #tpu.pipeline_mode<synchronous>, transform_indices = @transform_12, window_bounds = array<i64: 1, 16>}, {transform_indices = @transform_13, window_bounds = array<i64: 1, 32, 16>}]} {
    %c0_i32 = arith.constant 0 : i32
    %0 = arith.cmpi eq, %arg1, %c0_i32 : i32
    %1 = arith.extui %0 : i1 to i32
    %c0_i32_0 = arith.constant 0 : i32
    %2 = arith.cmpi ne, %1, %c0_i32_0 : i32
    scf.if %2 {
      %c0_26 = arith.constant 0 : index
      %c0_27 = arith.constant 0 : index
      %30 = vector.load %arg2[%c0_26, %c0_27] : memref<32x256xbf16, #tpu.memory_space<vmem>>, vector<32x256xbf16>
      %c0_28 = arith.constant 0 : index
      %c0_29 = arith.constant 0 : index
      %31 = vector.load %arg5[%c0_28, %c0_29] : memref<256x256xbf16, #tpu.memory_space<vmem>>, vector<256x256xbf16>
      %cst_30 = arith.constant dense<0.000000e+00> : vector<32x256xf32>
      %32 = tpu.matmul %30, %31, %cst_30 {dimension_numbers = #tpu.dot_dimension_numbers<[1], [0], [0], [1], [0, 0, 1, 1], [], []>} : vector<32x256xbf16>, vector<256x256xbf16>, vector<32x256xf32> -> vector<32x256xf32>
      %c0_31 = arith.constant 0 : index
      %c0_32 = arith.constant 0 : index
      %33 = vector.load %arg6[%c0_31, %c0_32] : memref<1x256xf32, #tpu.memory_space<vmem>>, vector<1x256xf32>
      %34 = vector.broadcast %33 : vector<1x256xf32> to vector<32x256xf32>
      %35 = arith.addf %32, %34 : vector<32x256xf32>
      %36 = arith.truncf %35 : vector<32x256xf32> to vector<32x256xbf16>
      %c0_33 = arith.constant 0 : index
      %c0_34 = arith.constant 0 : index
      %37 = vector.load %arg7[%c0_33, %c0_34] : memref<256x512xbf16, #tpu.memory_space<vmem>>, vector<256x512xbf16>
      %cst_35 = arith.constant dense<0.000000e+00> : vector<32x512xf32>
      %38 = tpu.matmul %36, %37, %cst_35 {dimension_numbers = #tpu.dot_dimension_numbers<[1], [0], [0], [1], [0, 0, 1, 1], [], []>} : vector<32x256xbf16>, vector<256x512xbf16>, vector<32x512xf32> -> vector<32x512xf32>
      %c0_36 = arith.constant 0 : index
      %c0_37 = arith.constant 0 : index
      %39 = vector.load %arg8[%c0_36, %c0_37] : memref<1x512xf32, #tpu.memory_space<vmem>>, vector<1x512xf32>
      %40 = vector.broadcast %39 : vector<1x512xf32> to vector<32x512xf32>
      %41 = arith.addf %38, %40 : vector<32x512xf32>
      %42 = arith.truncf %41 : vector<32x512xf32> to vector<32x512xbf16>
      %43 = vector.extract_strided_slice %42 {offsets = [0, 0], sizes = [32, 128], strides = [1, 1]} : vector<32x512xbf16> to vector<32x128xbf16>
      %c0_38 = arith.constant 0 : index
      %c0_39 = arith.constant 0 : index
      %c0_40 = arith.constant 0 : index
      %44 = vector.load %arg16[%c0_38, %c0_39, %c0_40] : memref<4x32x128xbf16, #tpu.memory_space<vmem>>, vector<1x32x128xbf16>
      %45 = vector.shape_cast %44 : vector<1x32x128xbf16> to vector<32x128xbf16>
      %46 = vector.shape_cast %43 : vector<32x128xbf16> to vector<1x32x128xbf16>
      tpu.vector_store %arg16[%c0_38, %c0_39, %c0_40], %46 {strides = array<i32>} : memref<4x32x128xbf16, #tpu.memory_space<vmem>>, vector<1x32x128xbf16>,
      %47 = vector.extract_strided_slice %42 {offsets = [0, 128], sizes = [32, 128], strides = [1, 1]} : vector<32x512xbf16> to vector<32x128xbf16>
      %c1 = arith.constant 1 : index
      %c0_41 = arith.constant 0 : index
      %c0_42 = arith.constant 0 : index
      %48 = vector.load %arg16[%c1, %c0_41, %c0_42] : memref<4x32x128xbf16, #tpu.memory_space<vmem>>, vector<1x32x128xbf16>
      %49 = vector.shape_cast %48 : vector<1x32x128xbf16> to vector<32x128xbf16>
      %50 = vector.shape_cast %47 : vector<32x128xbf16> to vector<1x32x128xbf16>
      tpu.vector_store %arg16[%c1, %c0_41, %c0_42], %50 {strides = array<i32>} : memref<4x32x128xbf16, #tpu.memory_space<vmem>>, vector<1x32x128xbf16>,
      %51 = vector.extract_strided_slice %42 {offsets = [0, 256], sizes = [32, 128], strides = [1, 1]} : vector<32x512xbf16> to vector<32x128xbf16>
      %c2 = arith.constant 2 : index
      %c0_43 = arith.constant 0 : index
      %c0_44 = arith.constant 0 : index
      %52 = vector.load %arg16[%c2, %c0_43, %c0_44] : memref<4x32x128xbf16, #tpu.memory_space<vmem>>, vector<1x32x128xbf16>
      %53 = vector.shape_cast %52 : vector<1x32x128xbf16> to vector<32x128xbf16>
      %54 = vector.shape_cast %51 : vector<32x128xbf16> to vector<1x32x128xbf16>
      tpu.vector_store %arg16[%c2, %c0_43, %c0_44], %54 {strides = array<i32>} : memref<4x32x128xbf16, #tpu.memory_space<vmem>>, vector<1x32x128xbf16>,
      %55 = vector.extract_strided_slice %42 {offsets = [0, 384], sizes = [32, 128], strides = [1, 1]} : vector<32x512xbf16> to vector<32x128xbf16>
      %c3 = arith.constant 3 : index
      %c0_45 = arith.constant 0 : index
      %c0_46 = arith.constant 0 : index
      %56 = vector.load %arg16[%c3, %c0_45, %c0_46] : memref<4x32x128xbf16, #tpu.memory_space<vmem>>, vector<1x32x128xbf16>
      %57 = vector.shape_cast %56 : vector<1x32x128xbf16> to vector<32x128xbf16>
      %58 = vector.shape_cast %55 : vector<32x128xbf16> to vector<1x32x128xbf16>
      tpu.vector_store %arg16[%c3, %c0_45, %c0_46], %58 {strides = array<i32>} : memref<4x32x128xbf16, #tpu.memory_space<vmem>>, vector<1x32x128xbf16>,
    } else {
    }
    %3 = arith.index_cast %arg1 : i32 to index
    %c0 = arith.constant 0 : index
    %c0_1 = arith.constant 0 : index
    %4 = vector.load %arg16[%3, %c0, %c0_1] : memref<4x32x128xbf16, #tpu.memory_space<vmem>>, vector<1x32x128xbf16>
    %5 = vector.shape_cast %4 : vector<1x32x128xbf16> to vector<32x128xbf16>
    %c0_2 = arith.constant 0 : index
    %c0_3 = arith.constant 0 : index
    %6 = vector.load %arg9[%c0_2, %c0_3] : memref<128x1024xbf16, #tpu.memory_space<vmem>>, vector<128x1024xbf16>
    %cst = arith.constant dense<0.000000e+00> : vector<32x1024xf32>
    %7 = tpu.matmul %5, %6, %cst {dimension_numbers = #tpu.dot_dimension_numbers<[1], [0], [0], [1], [0, 0, 1, 1], [], []>} : vector<32x128xbf16>, vector<128x1024xbf16>, vector<32x1024xf32> -> vector<32x1024xf32>
    %c0_4 = arith.constant 0 : index
    %c0_5 = arith.constant 0 : index
    %c0_6 = arith.constant 0 : index
    %8 = vector.load %arg3[%c0_4, %c0_5, %c0_6] : memref<1x32x64xbf16, #tpu.memory_space<vmem>>, vector<1x32x64xbf16>
    %9 = vector.shape_cast %8 : vector<1x32x64xbf16> to vector<32x64xbf16>
    %c0_7 = arith.constant 0 : index
    %c0_8 = arith.constant 0 : index
    %10 = vector.load %arg10[%c0_7, %c0_8] : memref<64x1024xbf16, #tpu.memory_space<vmem>>, vector<64x1024xbf16>
    %cst_9 = arith.constant dense<0.000000e+00> : vector<32x1024xf32>
    %11 = tpu.matmul %9, %10, %cst_9 {dimension_numbers = #tpu.dot_dimension_numbers<[1], [0], [0], [1], [0, 0, 1, 1], [], []>} : vector<32x64xbf16>, vector<64x1024xbf16>, vector<32x1024xf32> -> vector<32x1024xf32>
    %12 = arith.addf %7, %11 : vector<32x1024xf32>
    %c0_10 = arith.constant 0 : index
    %c0_11 = arith.constant 0 : index
    %13 = vector.load %arg11[%c0_10, %c0_11] : memref<1x1024xf32, #tpu.memory_space<vmem>>, vector<1x1024xf32>
    %14 = vector.broadcast %13 : vector<1x1024xf32> to vector<32x1024xf32>
    %15 = arith.addf %12, %14 : vector<32x1024xf32>
    %16 = arith.truncf %15 : vector<32x1024xf32> to vector<32x1024xbf16>
    %c0_12 = arith.constant 0 : index
    %c0_13 = arith.constant 0 : index
    %17 = vector.load %arg12[%c0_12, %c0_13] : memref<1024x16xbf16, #tpu.memory_space<vmem>>, vector<1024x16xbf16>
    %cst_14 = arith.constant dense<0.000000e+00> : vector<32x16xf32>
    %18 = tpu.matmul %16, %17, %cst_14 {dimension_numbers = #tpu.dot_dimension_numbers<[1], [0], [0], [1], [0, 0, 1, 1], [], []>} : vector<32x1024xbf16>, vector<1024x16xbf16>, vector<32x16xf32> -> vector<32x16xf32>
    %c0_15 = arith.constant 0 : index
    %c0_16 = arith.constant 0 : index
    %c0_17 = arith.constant 0 : index
    %19 = vector.load %arg4[%c0_15, %c0_16, %c0_17] : memref<1x32x128xbf16, #tpu.memory_space<vmem>>, vector<1x32x128xbf16>
    %20 = vector.shape_cast %19 : vector<1x32x128xbf16> to vector<32x128xbf16>
    %c0_18 = arith.constant 0 : index
    %c0_19 = arith.constant 0 : index
    %21 = vector.load %arg13[%c0_18, %c0_19] : memref<128x16xbf16, #tpu.memory_space<vmem>>, vector<128x16xbf16>
    %cst_20 = arith.constant dense<0.000000e+00> : vector<32x16xf32>
    %22 = tpu.matmul %20, %21, %cst_20 {dimension_numbers = #tpu.dot_dimension_numbers<[1], [0], [0], [1], [0, 0, 1, 1], [], []>} : vector<32x128xbf16>, vector<128x16xbf16>, vector<32x16xf32> -> vector<32x16xf32>
    %23 = arith.addf %18, %22 : vector<32x16xf32>
    %c0_21 = arith.constant 0 : index
    %c0_22 = arith.constant 0 : index
    %24 = vector.load %arg14[%c0_21, %c0_22] : memref<1x16xf32, #tpu.memory_space<vmem>>, vector<1x16xf32>
    %25 = vector.broadcast %24 : vector<1x16xf32> to vector<32x16xf32>
    %26 = arith.addf %23, %25 : vector<32x16xf32>
    %c0_23 = arith.constant 0 : index
    %c0_24 = arith.constant 0 : index
    %c0_25 = arith.constant 0 : index
    %27 = vector.load %arg15[%c0_23, %c0_24, %c0_25] : memref<1x32x16xf32, #tpu.memory_space<vmem>>, vector<1x32x16xf32>
    %28 = vector.shape_cast %27 : vector<1x32x16xf32> to vector<32x16xf32>
    %29 = vector.shape_cast %26 : vector<32x16xf32> to vector<1x32x16xf32>
    tpu.vector_store %arg15[%c0_23, %c0_24, %c0_25], %29 {strides = array<i32>} : memref<1x32x16xf32, #tpu.memory_space<vmem>>, vector<1x32x16xf32>,
    return
  }
  func.func @transform_0(%arg0: i32, %arg1: i32) -> (i32, i32) {
    %c0_i32 = arith.constant 0 : i32
    %c0_i32_0 = arith.constant 0 : i32
    return %arg0, %c0_i32 : i32, i32
  }
  func.func @transform_1(%arg0: i32, %arg1: i32) -> (i32, i32, i32) {
    %c0_i32 = arith.constant 0 : i32
    %c0_i32_0 = arith.constant 0 : i32
    return %arg1, %arg0, %c0_i32 : i32, i32, i32
  }
  func.func @transform_2(%arg0: i32, %arg1: i32) -> (i32, i32, i32) {
    %c0_i32 = arith.constant 0 : i32
    %c0_i32_0 = arith.constant 0 : i32
    return %arg1, %arg0, %c0_i32 : i32, i32, i32
  }
  func.func @transform_3(%arg0: i32, %arg1: i32) -> (i32, i32) {
    %c0_i32 = arith.constant 0 : i32
    %c0_i32_0 = arith.constant 0 : i32
    %c0_i32_1 = arith.constant 0 : i32
    return %c0_i32, %c0_i32_0 : i32, i32
  }
  func.func @transform_4(%arg0: i32, %arg1: i32) -> (i32, i32) {
    %c0_i32 = arith.constant 0 : i32
    %c0_i32_0 = arith.constant 0 : i32
    %c0_i32_1 = arith.constant 0 : i32
    return %c0_i32, %c0_i32_0 : i32, i32
  }
  func.func @transform_5(%arg0: i32, %arg1: i32) -> (i32, i32) {
    %c0_i32 = arith.constant 0 : i32
    %c0_i32_0 = arith.constant 0 : i32
    %c0_i32_1 = arith.constant 0 : i32
    return %c0_i32, %c0_i32_0 : i32, i32
  }
  func.func @transform_6(%arg0: i32, %arg1: i32) -> (i32, i32) {
    %c0_i32 = arith.constant 0 : i32
    %c0_i32_0 = arith.constant 0 : i32
    %c0_i32_1 = arith.constant 0 : i32
    return %c0_i32, %c0_i32_0 : i32, i32
  }
  func.func @transform_7(%arg0: i32, %arg1: i32) -> (i32, i32) {
    %c0_i32 = arith.constant 0 : i32
    %c0_i32_0 = arith.constant 0 : i32
    %c0_i32_1 = arith.constant 0 : i32
    return %c0_i32, %c0_i32_0 : i32, i32
  }
  func.func @transform_8(%arg0: i32, %arg1: i32) -> (i32, i32) {
    %c0_i32 = arith.constant 0 : i32
    %c0_i32_0 = arith.constant 0 : i32
    %c0_i32_1 = arith.constant 0 : i32
    return %c0_i32, %c0_i32_0 : i32, i32
  }
  func.func @transform_9(%arg0: i32, %arg1: i32) -> (i32, i32) {
    %c0_i32 = arith.constant 0 : i32
    %c0_i32_0 = arith.constant 0 : i32
    %c0_i32_1 = arith.constant 0 : i32
    return %c0_i32, %c0_i32_0 : i32, i32
  }
  func.func @transform_10(%arg0: i32, %arg1: i32) -> (i32, i32) {
    %c0_i32 = arith.constant 0 : i32
    %c0_i32_0 = arith.constant 0 : i32
    %c0_i32_1 = arith.constant 0 : i32
    return %c0_i32, %c0_i32_0 : i32, i32
  }
  func.func @transform_11(%arg0: i32, %arg1: i32) -> (i32, i32) {
    %c0_i32 = arith.constant 0 : i32
    %c0_i32_0 = arith.constant 0 : i32
    %c0_i32_1 = arith.constant 0 : i32
    return %c0_i32, %c0_i32_0 : i32, i32
  }
  func.func @transform_12(%arg0: i32, %arg1: i32) -> (i32, i32) {
    %c0_i32 = arith.constant 0 : i32
    %c0_i32_0 = arith.constant 0 : i32
    %c0_i32_1 = arith.constant 0 : i32
    return %c0_i32, %c0_i32_0 : i32, i32
  }
  func.func @transform_13(%arg0: i32, %arg1: i32) -> (i32, i32, i32) {
    %c0_i32 = arith.constant 0 : i32
    %c0_i32_0 = arith.constant 0 : i32
    return %arg1, %arg0, %c0_i32 : i32, i32, i32
  }
}

</mosaic_0001>

<llo_original>
// kernel: table_decoder_forward.1
$region0: #{table_decoder_forward.1}
  #allocation0 [shape = 'u32[]', space=smem, size = 0x4, offset = 0x4, fixed_abs, tag = 'smem constant byte address 0x4 - core index']
  #allocation1 [shape = 'u32[144,128]{1,0:T(1,128)}', space=vmem, size = 0x12000, scoped, tag = 'internal scratch']
  #allocation2 [shape = 'bf16[4,32,128]{2,1,0:T(16,128)(2,1)}', space=vmem, size = 0x8000, scoped, tag = 'scratch operand']
  %s0 = inlined_call_operand.vmem [shape: bf16[32,256], index: 0, kind: input, shape index: {}]
  %s1 = inlined_call_operand.vmem [shape: bf16[4,32,64], index: 1, kind: input, shape index: {}]
  %s2 = inlined_call_operand.vmem [shape: bf16[4,32,128], index: 2, kind: input, shape index: {}]
  %s3 = inlined_call_operand.vmem [shape: bf16[256,256], index: 3, kind: input, shape index: {}]
  %s4 = inlined_call_operand.vmem [shape: f32[1,256], index: 4, kind: input, shape index: {}]
  %s5 = inlined_call_operand.vmem [shape: bf16[256,512], index: 5, kind: input, shape index: {}]
  %s6 = inlined_call_operand.vmem [shape: f32[1,512], index: 6, kind: input, shape index: {}]
  %s7 = inlined_call_operand.vmem [shape: bf16[128,1024], index: 7, kind: input, shape index: {}]
  %s8 = inlined_call_operand.vmem [shape: bf16[64,1024], index: 8, kind: input, shape index: {}]
  %s9 = inlined_call_operand.vmem [shape: f32[1,1024], index: 9, kind: input, shape index: {}]
  %s10 = inlined_call_operand.vmem [shape: bf16[1024,16], index: 10, kind: input, shape index: {}]
  %s11 = inlined_call_operand.vmem [shape: bf16[128,16], index: 11, kind: input, shape index: {}]
  %s12 = inlined_call_operand.vmem [shape: f32[1,16], index: 12, kind: input, shape index: {}]
  %s13 = inlined_call_operand.vmem [shape: f32[4,32,16], index: 13, kind: output, shape index: {}]
  %s14 = sld [smem:[#allocation0]]
  $region89: #{table_decoder_forward.1} parent=0
    _
  %s16 = ssub.s32 1, %s14
  %s17 = scalar_select 0, %s16, %s14
  loop: start=0, step=1, limit=6
  $region2: #{table_decoder_forward.1} parent=0 // loop_pre_header
    _
  $region3: #{table_decoder_forward.1} parent=0 // loop_header
    %s19 = sphi 0, %s23
    %p20 = scmp.ge.s32.totalorder %s19, 6
    %s26 = sphi 0, %s38
    %s27 = sphi 0, %s34
    %s28 = sphi 0, %s26
    %s29 = sphi 0, %s27
    %s30 = sphi 0, %s28
    %s31 = sphi 0, %s29
    %s41 = sphi 0, %s43
    %s44 = sphi 0, %s41
    %s45 = sphi 0, %s44
    %s61 = sphi 0, %s45
    %s69 = sphi 0, %s71
    %s72 = sphi 0, %s69
    %s73 = sphi 0, %s72
    %s89 = sphi 0, %s73
    %s97 = sphi 0, %s99
    %s100 = sphi 0, %s97
    %s101 = sphi 0, %s100
    %s117 = sphi 0, %s101
    %s121 = sphi 0, %s121
    %s123 = sphi 0, %s121
    %s124 = sphi 0, %s123
    %s138 = sphi 0, %s124
    %s142 = sphi 0, %s142
    %s144 = sphi 0, %s142
    %s145 = sphi 0, %s144
    %s159 = sphi 0, %s145
    %s163 = sphi 0, %s163
    %s165 = sphi 0, %s163
    %s166 = sphi 0, %s165
    %s180 = sphi 0, %s166
    %s184 = sphi 0, %s184
    %s186 = sphi 0, %s184
    %s187 = sphi 0, %s186
    %s201 = sphi 0, %s187
    %s205 = sphi 0, %s205
    %s207 = sphi 0, %s205
    %s208 = sphi 0, %s207
    %s222 = sphi 0, %s208
    %s226 = sphi 0, %s226
    %s228 = sphi 0, %s226
    %s229 = sphi 0, %s228
    %s243 = sphi 0, %s229
    %s247 = sphi 0, %s247
    %s249 = sphi 0, %s247
    %s250 = sphi 0, %s249
    %s264 = sphi 0, %s250
    %s268 = sphi 0, %s268
    %s270 = sphi 0, %s268
    %s271 = sphi 0, %s270
    %s285 = sphi 0, %s271
    %s289 = sphi 0, %s289
    %s291 = sphi 0, %s289
    %s292 = sphi 0, %s291
    %s306 = sphi 0, %s292
    %s310 = sphi 0, %s310
    %s312 = sphi 0, %s310
    %s313 = sphi 0, %s312
    %s327 = sphi 0, %s313
    %s335 = sphi 0, %s337
    %s338 = sphi 0, %s335
    %s339 = sphi 0, %s338
    %s355 = sphi 0, %s339
  $region4: #{table_decoder_forward.1} parent=0 // loop_header_branch
    %22 = sbr.rel (%p20) target = $region8
  $region5: #{table_decoder_forward.1} parent=0 // loop_body
    %s24 = ssub.s32 %s19, 1
    %s25 = ssub.s32 %s19, 2
    %s32 = sadd.s32 1, %s27
    %p33 = scmp.ge.s32.totalorder %s32, 4
    %s34 = scalar_select %p33, 0, %s32
    %s35 = sadd.s32 1, %s26
    %s36 = scalar_select %p33, %s35, %s26
    %p37 = scmp.ge.s32.totalorder %s36, 1
    %s38 = scalar_select %p37, 0, %s36
    %s39 = ssub.s32 %s26, %s38
    %p40 = scmp.eq.s32.totalorder %s39, 0
    %s42 = sadd.s32 %s41, 1
    %s43 = scalar_select %p40, %s41, %s42
    %p46 = pneg %p40
    %p47 = scmp.eq.s32.totalorder %s19, 3
    %p48 = por %p46, %p47
    %p49 = scmp.ne.s32.totalorder %s41, %s44
    %p50 = scmp.eq.s32.totalorder %s19, 0
    %p51 = por %p49, %p50
    %p52 = scmp.ne.s32.totalorder %s41, %s44
    %p53 = scmp.eq.s32.totalorder %s24, 3
    %p54 = por %p52, %p53
    %p55 = scmp.ne.s32.totalorder %s44, %s45
    %p56 = scmp.eq.s32.totalorder %s24, 0
    %p57 = por %p55, %p56
    %p58 = scmp.ne.s32.totalorder %s44, %s45
    %p59 = scmp.eq.s32.totalorder %s25, 3
    %p60 = por %p58, %p59
    %p62 = scmp.ne.s32.totalorder %s45, %s61
    %p63 = scmp.eq.s32.totalorder %s25, 0
    %p64 = por %p62, %p63
    %s65 = ssub.s32 %s27, %s34
    %s66 = ssub.s32 %s26, %s38
    %s67 = sor.u32 %s65, %s66
    %p68 = scmp.eq.s32.totalorder %s67, 0
    %s70 = sadd.s32 %s69, 1
    %s71 = scalar_select %p68, %s69, %s70
    %p74 = pneg %p68
    %p75 = scmp.eq.s32.totalorder %s19, 3
    %p76 = por %p74, %p75
    %p77 = scmp.ne.s32.totalorder %s69, %s72
    %p78 = scmp.eq.s32.totalorder %s19, 0
    %p79 = por %p77, %p78
    %p80 = scmp.ne.s32.totalorder %s69, %s72
    %p81 = scmp.eq.s32.totalorder %s24, 3
    %p82 = por %p80, %p81
    %p83 = scmp.ne.s32.totalorder %s72, %s73
    %p84 = scmp.eq.s32.totalorder %s24, 0
    %p85 = por %p83, %p84
    %p86 = scmp.ne.s32.totalorder %s72, %s73
    %p87 = scmp.eq.s32.totalorder %s25, 3
    %p88 = por %p86, %p87
    %p90 = scmp.ne.s32.totalorder %s73, %s89
    %p91 = scmp.eq.s32.totalorder %s25, 0
    %p92 = por %p90, %p91
    %s93 = ssub.s32 %s27, %s34
    %s94 = ssub.s32 %s26, %s38
    %s95 = sor.u32 %s93, %s94
    %p96 = scmp.eq.s32.totalorder %s95, 0
    %s98 = sadd.s32 %s97, 1
    %s99 = scalar_select %p96, %s97, %s98
    %p102 = pneg %p96
    %p103 = scmp.eq.s32.totalorder %s19, 3
    %p104 = por %p102, %p103
    %p105 = scmp.ne.s32.totalorder %s97, %s100
    %p106 = scmp.eq.s32.totalorder %s19, 0
    %p107 = por %p105, %p106
    %p108 = scmp.ne.s32.totalorder %s97, %s100
    %p109 = scmp.eq.s32.totalorder %s24, 3
    %p110 = por %p108, %p109
    %p111 = scmp.ne.s32.totalorder %s100, %s101
    %p112 = scmp.eq.s32.totalorder %s24, 0
    %p113 = por %p111, %p112
    %p114 = scmp.ne.s32.totalorder %s100, %s101
    %p115 = scmp.eq.s32.totalorder %s25, 3
    %p116 = por %p114, %p115
    %p118 = scmp.ne.s32.totalorder %s101, %s117
    %p119 = scmp.eq.s32.totalorder %s25, 0
    %p120 = por %p118, %p119
    %s122 = sadd.s32 %s121, 1
    %p125 = scmp.eq.s32.totalorder %s19, 3
    %p126 = scmp.ne.s32.totalorder %s121, %s123
    %p127 = scmp.eq.s32.totalorder %s19, 0
    %p128 = por %p126, %p127
    %p129 = scmp.ne.s32.totalorder %s121, %s123
    %p130 = scmp.eq.s32.totalorder %s24, 3
    %p131 = por %p129, %p130
    %p132 = scmp.ne.s32.totalorder %s123, %s124
    %p133 = scmp.eq.s32.totalorder %s24, 0
    %p134 = por %p132, %p133
    %p135 = scmp.ne.s32.totalorder %s123, %s124
    %p136 = scmp.eq.s32.totalorder %s25, 3
    %p137 = por %p135, %p136
    %p139 = scmp.ne.s32.totalorder %s124, %s138
    %p140 = scmp.eq.s32.totalorder %s25, 0
    %p141 = por %p139, %p140
    %s143 = sadd.s32 %s142, 1
    %p146 = scmp.eq.s32.totalorder %s19, 3
    %p147 = scmp.ne.s32.totalorder %s142, %s144
    %p148 = scmp.eq.s32.totalorder %s19, 0
    %p149 = por %p147, %p148
    %p150 = scmp.ne.s32.totalorder %s142, %s144
    %p151 = scmp.eq.s32.totalorder %s24, 3
    %p152 = por %p150, %p151
    %p153 = scmp.ne.s32.totalorder %s144, %s145
    %p154 = scmp.eq.s32.totalorder %s24, 0
    %p155 = por %p153, %p154
    %p156 = scmp.ne.s32.totalorder %s144, %s145
    %p157 = scmp.eq.s32.totalorder %s25, 3
    %p158 = por %p156, %p157
    %p160 = scmp.ne.s32.totalorder %s145, %s159
    %p161 = scmp.eq.s32.totalorder %s25, 0
    %p162 = por %p160, %p161
    %s164 = sadd.s32 %s163, 1
    %p167 = scmp.eq.s32.totalorder %s19, 3
    %p168 = scmp.ne.s32.totalorder %s163, %s165
    %p169 = scmp.eq.s32.totalorder %s19, 0
    %p170 = por %p168, %p169
    %p171 = scmp.ne.s32.totalorder %s163, %s165
    %p172 = scmp.eq.s32.totalorder %s24, 3
    %p173 = por %p171, %p172
    %p174 = scmp.ne.s32.totalorder %s165, %s166
    %p175 = scmp.eq.s32.totalorder %s24, 0
    %p176 = por %p174, %p175
    %p177 = scmp.ne.s32.totalorder %s165, %s166
    %p178 = scmp.eq.s32.totalorder %s25, 3
    %p179 = por %p177, %p178
    %p181 = scmp.ne.s32.totalorder %s166, %s180
    %p182 = scmp.eq.s32.totalorder %s25, 0
    %p183 = por %p181, %p182
    %s185 = sadd.s32 %s184, 1
    %p188 = scmp.eq.s32.totalorder %s19, 3
    %p189 = scmp.ne.s32.totalorder %s184, %s186
    %p190 = scmp.eq.s32.totalorder %s19, 0
    %p191 = por %p189, %p190
    %p192 = scmp.ne.s32.totalorder %s184, %s186
    %p193 = scmp.eq.s32.totalorder %s24, 3
    %p194 = por %p192, %p193
    %p195 = scmp.ne.s32.totalorder %s186, %s187
    %p196 = scmp.eq.s32.totalorder %s24, 0
    %p197 = por %p195, %p196
    %p198 = scmp.ne.s32.totalorder %s186, %s187
    %p199 = scmp.eq.s32.totalorder %s25, 3
    %p200 = por %p198, %p199
    %p202 = scmp.ne.s32.totalorder %s187, %s201
    %p203 = scmp.eq.s32.totalorder %s25, 0
    %p204 = por %p202, %p203
    %s206 = sadd.s32 %s205, 1
    %p209 = scmp.eq.s32.totalorder %s19, 3
    %p210 = scmp.ne.s32.totalorder %s205, %s207
    %p211 = scmp.eq.s32.totalorder %s19, 0
    %p212 = por %p210, %p211
    %p213 = scmp.ne.s32.totalorder %s205, %s207
    %p214 = scmp.eq.s32.totalorder %s24, 3
    %p215 = por %p213, %p214
    %p216 = scmp.ne.s32.totalorder %s207, %s208
    %p217 = scmp.eq.s32.totalorder %s24, 0
    %p218 = por %p216, %p217
    %p219 = scmp.ne.s32.totalorder %s207, %s208
    %p220 = scmp.eq.s32.totalorder %s25, 3
    %p221 = por %p219, %p220
    %p223 = scmp.ne.s32.totalorder %s208, %s222
    %p224 = scmp.eq.s32.totalorder %s25, 0
    %p225 = por %p223, %p224
    %s227 = sadd.s32 %s226, 1
    %p230 = scmp.eq.s32.totalorder %s19, 3
    %p231 = scmp.ne.s32.totalorder %s226, %s228
    %p232 = scmp.eq.s32.totalorder %s19, 0
    %p233 = por %p231, %p232
    %p234 = scmp.ne.s32.totalorder %s226, %s228
    %p235 = scmp.eq.s32.totalorder %s24, 3
    %p236 = por %p234, %p235
    %p237 = scmp.ne.s32.totalorder %s228, %s229
    %p238 = scmp.eq.s32.totalorder %s24, 0
    %p239 = por %p237, %p238
    %p240 = scmp.ne.s32.totalorder %s228, %s229
    %p241 = scmp.eq.s32.totalorder %s25, 3
    %p242 = por %p240, %p241
    %p244 = scmp.ne.s32.totalorder %s229, %s243
    %p245 = scmp.eq.s32.totalorder %s25, 0
    %p246 = por %p244, %p245
    %s248 = sadd.s32 %s247, 1
    %p251 = scmp.eq.s32.totalorder %s19, 3
    %p252 = scmp.ne.s32.totalorder %s247, %s249
    %p253 = scmp.eq.s32.totalorder %s19, 0
    %p254 = por %p252, %p253
    %p255 = scmp.ne.s32.totalorder %s247, %s249
    %p256 = scmp.eq.s32.totalorder %s24, 3
    %p257 = por %p255, %p256
    %p258 = scmp.ne.s32.totalorder %s249, %s250
    %p259 = scmp.eq.s32.totalorder %s24, 0
    %p260 = por %p258, %p259
    %p261 = scmp.ne.s32.totalorder %s249, %s250
    %p262 = scmp.eq.s32.totalorder %s25, 3
    %p263 = por %p261, %p262
    %p265 = scmp.ne.s32.totalorder %s250, %s264
    %p266 = scmp.eq.s32.totalorder %s25, 0
    %p267 = por %p265, %p266
    %s269 = sadd.s32 %s268, 1
    %p272 = scmp.eq.s32.totalorder %s19, 3
    %p273 = scmp.ne.s32.totalorder %s268, %s270
    %p274 = scmp.eq.s32.totalorder %s19, 0
    %p275 = por %p273, %p274
    %p276 = scmp.ne.s32.totalorder %s268, %s270
    %p277 = scmp.eq.s32.totalorder %s24, 3
    %p278 = por %p276, %p277
    %p279 = scmp.ne.s32.totalorder %s270, %s271
    %p280 = scmp.eq.s32.totalorder %s24, 0
    %p281 = por %p279, %p280
    %p282 = scmp.ne.s32.totalorder %s270, %s271
    %p283 = scmp.eq.s32.totalorder %s25, 3
    %p284 = por %p282, %p283
    %p286 = scmp.ne.s32.totalorder %s271, %s285
    %p287 = scmp.eq.s32.totalorder %s25, 0
    %p288 = por %p286, %p287
    %s290 = sadd.s32 %s289, 1
    %p293 = scmp.eq.s32.totalorder %s19, 3
    %p294 = scmp.ne.s32.totalorder %s289, %s291
    %p295 = scmp.eq.s32.totalorder %s19, 0
    %p296 = por %p294, %p295
    %p297 = scmp.ne.s32.totalorder %s289, %s291
    %p298 = scmp.eq.s32.totalorder %s24, 3
    %p299 = por %p297, %p298
    %p300 = scmp.ne.s32.totalorder %s291, %s292
    %p301 = scmp.eq.s32.totalorder %s24, 0
    %p302 = por %p300, %p301
    %p303 = scmp.ne.s32.totalorder %s291, %s292
    %p304 = scmp.eq.s32.totalorder %s25, 3
    %p305 = por %p303, %p304
    %p307 = scmp.ne.s32.totalorder %s292, %s306
    %p308 = scmp.eq.s32.totalorder %s25, 0
    %p309 = por %p307, %p308
    %s311 = sadd.s32 %s310, 1
    %p314 = scmp.eq.s32.totalorder %s19, 3
    %p315 = scmp.ne.s32.totalorder %s310, %s312
    %p316 = scmp.eq.s32.totalorder %s19, 0
    %p317 = por %p315, %p316
    %p318 = scmp.ne.s32.totalorder %s310, %s312
    %p319 = scmp.eq.s32.totalorder %s24, 3
    %p320 = por %p318, %p319
    %p321 = scmp.ne.s32.totalorder %s312, %s313
    %p322 = scmp.eq.s32.totalorder %s24, 0
    %p323 = por %p321, %p322
    %p324 = scmp.ne.s32.totalorder %s312, %s313
    %p325 = scmp.eq.s32.totalorder %s25, 3
    %p326 = por %p324, %p325
    %p328 = scmp.ne.s32.totalorder %s313, %s327
    %p329 = scmp.eq.s32.totalorder %s25, 0
    %p330 = por %p328, %p329
    %s331 = ssub.s32 %s27, %s34
    %s332 = ssub.s32 %s26, %s38
    %s333 = sor.u32 %s331, %s332
    %p334 = scmp.eq.s32.totalorder %s333, 0
    %s336 = sadd.s32 %s335, 1
    %s337 = scalar_select %p334, %s335, %s336
    %p340 = pneg %p334
    %p341 = scmp.eq.s32.totalorder %s19, 3
    %p342 = por %p340, %p341
    %p343 = scmp.ne.s32.totalorder %s335, %s338
    %p344 = scmp.eq.s32.totalorder %s19, 0
    %p345 = por %p343, %p344
    %p346 = scmp.ne.s32.totalorder %s335, %s338
    %p347 = scmp.eq.s32.totalorder %s24, 3
    %p348 = por %p346, %p347
    %p349 = scmp.ne.s32.totalorder %s338, %s339
    %p350 = scmp.eq.s32.totalorder %s24, 0
    %p351 = por %p349, %p350
    %p352 = scmp.ne.s32.totalorder %s338, %s339
    %p353 = scmp.eq.s32.totalorder %s25, 3
    %p354 = por %p352, %p353
    %p356 = scmp.ne.s32.totalorder %s339, %s355
    %p357 = scmp.eq.s32.totalorder %s25, 0
    %p358 = por %p356, %p357
    %p359 = scmp.le.s32.totalorder 1, %s19
    %p360 = scmp.lt.s32.totalorder %s19, 5
    %p361 = pnand %p359, %p360
    %p362 = pneg %p361
    // Predicated region
    $region9: #{table_decoder_forward.1} parent=5 // pred_check
      _
    $region10: #{table_decoder_forward.1} parent=5 // pred_check_branch
      %364 = sbr.rel (%p361) target = $region12
    $region11: #{table_decoder_forward.1} parent=5 // pred_region
      %s365 = ssub.s32 %s19, 1
      // Predicated region
      $region13: #{table_decoder_forward.1} parent=11 // pred_check
        %p366 = pneg %p57
      $region14: #{table_decoder_forward.1} parent=11 // pred_check_branch
        %368 = sbr.rel (%p366) target = $region16
      $region15: #{table_decoder_forward.1} parent=11 // pred_region
        %s369 = smul.u32 4, %s28
        %p370 = scmp.lt.s32.totalorder %s369, 3
        %s371 = scalar_select %p370, %s369, 3
        %s372 = smul.addr %s371, 2
        %s373 = smul.addr %s372, 4
        %s374 = scalar_lea.vmem %s0, %s373
        %s375 = smul.u32 4, %s28
      $region16: #{table_decoder_forward.1} parent=11 // pred_fallthru
        _
      // Predicated region
      $region17: #{table_decoder_forward.1} parent=11 // pred_check
        %p376 = pneg %p134
      $region18: #{table_decoder_forward.1} parent=11 // pred_check_branch
        %378 = sbr.rel (%p376) target = $region20
      $region19: #{table_decoder_forward.1} parent=11 // pred_region
        _
      $region20: #{table_decoder_forward.1} parent=11 // pred_fallthru
        _
      // Predicated region
      $region21: #{table_decoder_forward.1} parent=11 // pred_check
        %p379 = pneg %p155
      $region22: #{table_decoder_forward.1} parent=11 // pred_check_branch
        %381 = sbr.rel (%p379) target = $region24
      $region23: #{table_decoder_forward.1} parent=11 // pred_region
        _
      $region24: #{table_decoder_forward.1} parent=11 // pred_fallthru
        _
      // Predicated region
      $region25: #{table_decoder_forward.1} parent=11 // pred_check
        %p382 = pneg %p176
      $region26: #{table_decoder_forward.1} parent=11 // pred_check_branch
        %384 = sbr.rel (%p382) target = $region28
      $region27: #{table_decoder_forward.1} parent=11 // pred_region
        _
      $region28: #{table_decoder_forward.1} parent=11 // pred_fallthru
        _
      // Predicated region
      $region29: #{table_decoder_forward.1} parent=11 // pred_check
        %p385 = pneg %p197
      $region30: #{table_decoder_forward.1} parent=11 // pred_check_branch
        %387 = sbr.rel (%p385) target = $region32
      $region31: #{table_decoder_forward.1} parent=11 // pred_region
        _
      $region32: #{table_decoder_forward.1} parent=11 // pred_fallthru
        _
      // Predicated region
      $region33: #{table_decoder_forward.1} parent=11 // pred_check
        %p388 = pneg %p218
      $region34: #{table_decoder_forward.1} parent=11 // pred_check_branch
        %390 = sbr.rel (%p388) target = $region36
      $region35: #{table_decoder_forward.1} parent=11 // pred_region
        _
      $region36: #{table_decoder_forward.1} parent=11 // pred_fallthru
        _
      // Predicated region
      $region37: #{table_decoder_forward.1} parent=11 // pred_check
        %p391 = pneg %p239
      $region38: #{table_decoder_forward.1} parent=11 // pred_check_branch
        %393 = sbr.rel (%p391) target = $region40
      $region39: #{table_decoder_forward.1} parent=11 // pred_region
        _
      $region40: #{table_decoder_forward.1} parent=11 // pred_fallthru
        _
      // Predicated region
      $region41: #{table_decoder_forward.1} parent=11 // pred_check
        %p394 = pneg %p260
      $region42: #{table_decoder_forward.1} parent=11 // pred_check_branch
        %396 = sbr.rel (%p394) target = $region44
      $region43: #{table_decoder_forward.1} parent=11 // pred_region
        _
      $region44: #{table_decoder_forward.1} parent=11 // pred_fallthru
        _
      // Predicated region
      $region45: #{table_decoder_forward.1} parent=11 // pred_check
        %p397 = pneg %p281
      $region46: #{table_decoder_forward.1} parent=11 // pred_check_branch
        %399 = sbr.rel (%p397) target = $region48
      $region47: #{table_decoder_forward.1} parent=11 // pred_region
        _
      $region48: #{table_decoder_forward.1} parent=11 // pred_fallthru
        _
      // Predicated region
      $region49: #{table_decoder_forward.1} parent=11 // pred_check
        %p400 = pneg %p302
      $region50: #{table_decoder_forward.1} parent=11 // pred_check_branch
        %402 = sbr.rel (%p400) target = $region52
      $region51: #{table_decoder_forward.1} parent=11 // pred_region
        _
      $region52: #{table_decoder_forward.1} parent=11 // pred_fallthru
        _
      // Predicated region
      $region53: #{table_decoder_forward.1} parent=11 // pred_check
        %p403 = pneg %p323
      $region54: #{table_decoder_forward.1} parent=11 // pred_check_branch
        %405 = sbr.rel (%p403) target = $region56
      $region55: #{table_decoder_forward.1} parent=11 // pred_region
        _
      $region56: #{table_decoder_forward.1} parent=11 // pred_fallthru
        _
    $region12: #{table_decoder_forward.1} parent=5 // pred_fallthru
      _
    %p406 = scmp.lt.s32.totalorder %s19, 4
    // Predicated region
    $region57: #{table_decoder_forward.1} parent=5 // pred_check
      %p407 = pneg %p406
    $region58: #{table_decoder_forward.1} parent=5 // pred_check_branch
      %409 = sbr.rel (%p407) target = $region60
    $region59: #{table_decoder_forward.1} parent=5 // pred_region
      // Predicated region
      $region61: #{table_decoder_forward.1} parent=59 // pred_check
        %p410 = pneg %p79
      $region62: #{table_decoder_forward.1} parent=59 // pred_check_branch
        %412 = sbr.rel (%p410) target = $region64
      $region63: #{table_decoder_forward.1} parent=59 // pred_region
        %s413 = smul.u32 4, %s26
        %p414 = scmp.lt.s32.totalorder %s27, 3
        %s415 = scalar_select %p414, %s27, 3
        %p416 = scmp.lt.s32.totalorder %s413, 3
        %s417 = scalar_select %p416, %s413, 3
        %s418 = smul.addr %s415, 4
        %s419 = sadd.s32 %s417, %s418
        %s420 = smul.addr %s419, 4
        %s421 = scalar_lea.vmem %s1, %s420
        %s422 = smul.u32 4, %s26
      $region64: #{table_decoder_forward.1} parent=59 // pred_fallthru
        _
      // Predicated region
      $region65: #{table_decoder_forward.1} parent=59 // pred_check
        %p423 = pneg %p107
      $region66: #{table_decoder_forward.1} parent=59 // pred_check_branch
        %425 = sbr.rel (%p423) target = $region68
      $region67: #{table_decoder_forward.1} parent=59 // pred_region
        %s426 = smul.u32 4, %s26
        %p427 = scmp.lt.s32.totalorder %s27, 3
        %s428 = scalar_select %p427, %s27, 3
        %p429 = scmp.lt.s32.totalorder %s426, 3
        %s430 = scalar_select %p429, %s426, 3
        %s431 = smul.addr %s428, 4
        %s432 = sadd.s32 %s430, %s431
        %s433 = smul.addr %s432, 4
        %s434 = scalar_lea.vmem %s2, %s433
        %s435 = smul.u32 4, %s26
      $region68: #{table_decoder_forward.1} parent=59 // pred_fallthru
        _
    $region60: #{table_decoder_forward.1} parent=5 // pred_fallthru
      _
    %p436 = scmp.le.s32.totalorder 1, %s19
    %p437 = scmp.lt.s32.totalorder %s19, 5
    %p438 = pnand %p436, %p437
    %p439 = pneg %p438
    // Predicated region
    $region69: #{table_decoder_forward.1} parent=5 // pred_check
      _
    $region70: #{table_decoder_forward.1} parent=5 // pred_check_branch
      %441 = sbr.rel (%p438) target = $region72
    $region71: #{table_decoder_forward.1} parent=5 // pred_region
      %s442 = ssub.s32 %s19, 1
      %s443 = smul.u32 4, %s28
      %p444 = scmp.lt.s32.totalorder %s443, 3
      %s445 = scalar_select %p444, %s443, 3
      %s446 = smul.addr %s445, 2
      %s447 = smul.addr %s446, 4
      %s448 = scalar_lea.vmem %s0, %s447
      %p449 = pneg %p57
      %p450 = pneg %p54
      %s451 = smul.u32 4, %s28
      %p452 = scmp.lt.s32.totalorder %s29, 3
      %s453 = scalar_select %p452, %s29, 3
      %p454 = scmp.lt.s32.totalorder %s451, 3
      %s455 = scalar_select %p454, %s451, 3
      %s456 = smul.addr %s453, 4
      %s457 = sadd.s32 %s455, %s456
      %s458 = smul.addr %s457, 4
      %s459 = scalar_lea.vmem %s1, %s458
      %p460 = pneg %p85
      %p461 = pneg %p82
      %s462 = smul.u32 4, %s28
      %p463 = scmp.lt.s32.totalorder %s29, 3
      %s464 = scalar_select %p463, %s29, 3
      %p465 = scmp.lt.s32.totalorder %s462, 3
      %s466 = scalar_select %p465, %s462, 3
      %s467 = smul.addr %s464, 4
      %s468 = sadd.s32 %s466, %s467
      %s469 = smul.addr %s468, 4
      %s470 = scalar_lea.vmem %s2, %s469
      %p471 = pneg %p113
      %p472 = pneg %p110
      %p473 = pneg %p134
      %p474 = pneg %p131
      %p475 = pneg %p155
      %p476 = pneg %p152
      %p477 = pneg %p176
      %p478 = pneg %p173
      %p479 = pneg %p197
      %p480 = pneg %p194
      %p481 = pneg %p218
      %p482 = pneg %p215
      %p483 = pneg %p239
      %p484 = pneg %p236
      %p485 = pneg %p260
      %p486 = pneg %p257
      %p487 = pneg %p281
      %p488 = pneg %p278
      %p489 = pneg %p302
      %p490 = pneg %p299
      %p491 = pneg %p323
      %p492 = pneg %p320
      %p493 = pneg %p351
      %p494 = pneg %p348
      %s495 = smul.u32 4, %s28
      %p496 = scmp.lt.s32.totalorder %s29, 3
      %s497 = scalar_select %p496, %s29, 3
      %p498 = scmp.lt.s32.totalorder %s495, 3
      %s499 = scalar_select %p498, %s495, 3
      %s500 = smul.addr %s497, 4
      %s501 = sadd.s32 %s499, %s500
      %s502 = smul.addr %s501, 8
      %s503 = scalar_lea.vmem %s13, %s502
      %s504 = smul.u32 4, %s28
      %p505 = scmp.lt.s32.totalorder %s504, 3
      %s506 = scalar_select %p505, %s504, 3
      %s507 = smul.addr %s506, 2
      %s508 = smul.addr %s507, 4
      %s509 = scalar_lea.vmem %s0, %s508
      %s510 = smul.u32 4, %s28
      %s511 = smul.u32 4, %s28
      %p512 = scmp.lt.s32.totalorder %s29, 3
      %s513 = scalar_select %p512, %s29, 3
      %p514 = scmp.lt.s32.totalorder %s511, 3
      %s515 = scalar_select %p514, %s511, 3
      %s516 = smul.addr %s513, 4
      %s517 = sadd.s32 %s515, %s516
      %s518 = smul.addr %s517, 4
      %s519 = scalar_lea.vmem %s1, %s518
      %s520 = smul.u32 4, %s28
      %s521 = smul.u32 4, %s28
      %p522 = scmp.lt.s32.totalorder %s29, 3
      %s523 = scalar_select %p522, %s29, 3
      %p524 = scmp.lt.s32.totalorder %s521, 3
      %s525 = scalar_select %p524, %s521, 3
      %s526 = smul.addr %s523, 4
      %s527 = sadd.s32 %s525, %s526
      %s528 = smul.addr %s527, 4
      %s529 = scalar_lea.vmem %s2, %s528
      %s530 = smul.u32 4, %s28
      %s531 = smul.u32 4, %s28
      %p532 = scmp.lt.s32.totalorder %s29, 3
      %s533 = scalar_select %p532, %s29, 3
      %p534 = scmp.lt.s32.totalorder %s531, 3
      %s535 = scalar_select %p534, %s531, 3
      %s536 = smul.addr %s533, 4
      %s537 = sadd.s32 %s535, %s536
      %s538 = smul.addr %s537, 8
      %s539 = scalar_lea.vmem %s13, %s538
      %s540 = smul.u32 4, %s28
      %p542 = scmp.eq.s32.totalorder %s29, 0
      // Predicated region
      $region73: #{table_decoder_forward.1} parent=71 // pred_check
        %p543 = pneg %p542
      $region74: #{table_decoder_forward.1} parent=71 // pred_check_branch
        %545 = sbr.rel (%p543) target = $region76
      $region75: #{table_decoder_forward.1} parent=71 // pred_region
        %v546 = vld [vmem:[%s509] sm:$0xff]
        %v547 = vld [vmem:[%s509 + $0x8] sm:$0xff]
        %v548 = vld [vmem:[%s509 + $0x10] sm:$0xff]
        %v549 = vld [vmem:[%s509 + $0x18] sm:$0xff]
        %v550 = vld [vmem:[%s3] sm:$0xff]
        %v551 = vld [vmem:[%s3 + $0x8] sm:$0xff]
        %v552 = vld [vmem:[%s3 + $0x10] sm:$0xff]
        %v553 = vld [vmem:[%s3 + $0x18] sm:$0xff]
        %v554 = vld [vmem:[%s3 + $0x20] sm:$0xff]
        %v555 = vld [vmem:[%s3 + $0x28] sm:$0xff]
        %v556 = vld [vmem:[%s3 + $0x30] sm:$0xff]
        %v557 = vld [vmem:[%s3 + $0x38] sm:$0xff]
        %v558 = vld [vmem:[%s3 + $0x40] sm:$0xff]
        %v559 = vld [vmem:[%s3 + $0x48] sm:$0xff]
        %v560 = vld [vmem:[%s3 + $0x50] sm:$0xff]
        %v561 = vld [vmem:[%s3 + $0x58] sm:$0xff]
        %v562 = vld [vmem:[%s3 + $0x60] sm:$0xff]
        %v563 = vld [vmem:[%s3 + $0x68] sm:$0xff]
        %v564 = vld [vmem:[%s3 + $0x70] sm:$0xff]
        %v565 = vld [vmem:[%s3 + $0x78] sm:$0xff]
        %v566 = vld [vmem:[%s3 + $0x80] sm:$0xff]
        %v567 = vld [vmem:[%s3 + $0x88] sm:$0xff]
        %v568 = vld [vmem:[%s3 + $0x90] sm:$0xff]
        %v569 = vld [vmem:[%s3 + $0x98] sm:$0xff]
        %v570 = vld [vmem:[%s3 + $0xa0] sm:$0xff]
        %v571 = vld [vmem:[%s3 + $0xa8] sm:$0xff]
        %v572 = vld [vmem:[%s3 + $0xb0] sm:$0xff]
        %v573 = vld [vmem:[%s3 + $0xb8] sm:$0xff]
        %v574 = vld [vmem:[%s3 + $0xc0] sm:$0xff]
        %v575 = vld [vmem:[%s3 + $0xc8] sm:$0xff]
        %v576 = vld [vmem:[%s3 + $0xd0] sm:$0xff]
        %v577 = vld [vmem:[%s3 + $0xd8] sm:$0xff]
        %v578 = vld [vmem:[%s3 + $0xe0] sm:$0xff]
        %v579 = vld [vmem:[%s3 + $0xe8] sm:$0xff]
        %v580 = vld [vmem:[%s3 + $0xf0] sm:$0xff]
        %v581 = vld [vmem:[%s3 + $0xf8] sm:$0xff]
        %v582 = vld [vmem:[%s4] sm:$0x3]
        %v584 = vlaneseq
        %v585 = vshrl.u32 %v584, 7
        %v586 = vsub.s32 0, %v585
        %v587 = vrot.slane %v582, %v586
        %v588 = vlaneseq
        %v589 = vshrl.u32 %v588, 7
        %v590 = vsub.s32 1, %v589
        %v591 = vrot.slane %v582, %v590
        %v598 = vunpack.c.l.b16 %v546
        %v599 = vunpack.c.h.b16 %v546
        %v600 = vunpack.c.l.b16 %v547
        %v601 = vunpack.c.h.b16 %v547
        %v602 = vunpack.c.l.b16 %v548
        %v603 = vunpack.c.h.b16 %v548
        %v604 = vunpack.c.l.b16 %v549
        %v605 = vunpack.c.h.b16 %v549
        %v606 = vpack.c.b16 %v600, %v598
        %v607 = vpack.c.b16 %v601, %v599
        %v608 = vpack.c.b16 %v604, %v602
        %v609 = vpack.c.b16 %v605, %v603
        %v646 = vunpack.c.l.b16 %v550
        %v647 = vunpack.c.h.b16 %v550
        %v648 = vunpack.c.l.b16 %v551
        %v649 = vunpack.c.h.b16 %v551
        %v650 = vunpack.c.l.b16 %v552
        %v651 = vunpack.c.h.b16 %v552
        %v652 = vunpack.c.l.b16 %v553
        %v653 = vunpack.c.h.b16 %v553
        %v654 = vunpack.c.l.b16 %v554
        %v655 = vunpack.c.h.b16 %v554
        %v656 = vunpack.c.l.b16 %v555
        %v657 = vunpack.c.h.b16 %v555
        %v658 = vunpack.c.l.b16 %v556
        %v659 = vunpack.c.h.b16 %v556
        %v660 = vunpack.c.l.b16 %v557
        %v661 = vunpack.c.h.b16 %v557
        %v662 = vunpack.c.l.b16 %v558
        %v663 = vunpack.c.h.b16 %v558
        %v664 = vunpack.c.l.b16 %v559
        %v665 = vunpack.c.h.b16 %v559
        %v666 = vunpack.c.l.b16 %v560
        %v667 = vunpack.c.h.b16 %v560
        %v668 = vunpack.c.l.b16 %v561
        %v669 = vunpack.c.h.b16 %v561
        %v670 = vunpack.c.l.b16 %v562
        %v671 = vunpack.c.h.b16 %v562
        %v672 = vunpack.c.l.b16 %v563
        %v673 = vunpack.c.h.b16 %v563
        %v674 = vunpack.c.l.b16 %v564
        %v675 = vunpack.c.h.b16 %v564
        %v676 = vunpack.c.l.b16 %v565
        %v677 = vunpack.c.h.b16 %v565
        %v678 = vunpack.c.l.b16 %v566
        %v679 = vunpack.c.h.b16 %v566
        %v680 = vunpack.c.l.b16 %v567
        %v681 = vunpack.c.h.b16 %v567
        %v682 = vunpack.c.l.b16 %v568
        %v683 = vunpack.c.h.b16 %v568
        %v684 = vunpack.c.l.b16 %v569
        %v685 = vunpack.c.h.b16 %v569
        %v686 = vunpack.c.l.b16 %v570
        %v687 = vunpack.c.h.b16 %v570
        %v688 = vunpack.c.l.b16 %v571
        %v689 = vunpack.c.h.b16 %v571
        %v690 = vunpack.c.l.b16 %v572
        %v691 = vunpack.c.h.b16 %v572
        %v692 = vunpack.c.l.b16 %v573
        %v693 = vunpack.c.h.b16 %v573
        %v694 = vunpack.c.l.b16 %v574
        %v695 = vunpack.c.h.b16 %v574
        %v696 = vunpack.c.l.b16 %v575
        %v697 = vunpack.c.h.b16 %v575
        %v698 = vunpack.c.l.b16 %v576
        %v699 = vunpack.c.h.b16 %v576
        %v700 = vunpack.c.l.b16 %v577
        %v701 = vunpack.c.h.b16 %v577
        %v702 = vunpack.c.l.b16 %v578
        %v703 = vunpack.c.h.b16 %v578
        %v704 = vunpack.c.l.b16 %v579
        %v705 = vunpack.c.h.b16 %v579
        %v706 = vunpack.c.l.b16 %v580
        %v707 = vunpack.c.h.b16 %v580
        %v708 = vunpack.c.l.b16 %v581
        %v709 = vunpack.c.h.b16 %v581
        %v710 = vpack.c.b16 %v648, %v646
        %v711 = vpack.c.b16 %v649, %v647
        %v712 = vpack.c.b16 %v652, %v650
        %v713 = vpack.c.b16 %v653, %v651
        %v714 = vpack.c.b16 %v656, %v654
        %v715 = vpack.c.b16 %v657, %v655
        %v716 = vpack.c.b16 %v660, %v658
        %v717 = vpack.c.b16 %v661, %v659
        %v718 = vpack.c.b16 %v664, %v662
        %v719 = vpack.c.b16 %v665, %v663
        %v720 = vpack.c.b16 %v668, %v666
        %v721 = vpack.c.b16 %v669, %v667
        %v722 = vpack.c.b16 %v672, %v670
        %v723 = vpack.c.b16 %v673, %v671
        %v724 = vpack.c.b16 %v676, %v674
        %v725 = vpack.c.b16 %v677, %v675
        %v726 = vpack.c.b16 %v680, %v678
        %v727 = vpack.c.b16 %v681, %v679
        %v728 = vpack.c.b16 %v684, %v682
        %v729 = vpack.c.b16 %v685, %v683
        %v730 = vpack.c.b16 %v688, %v686
        %v731 = vpack.c.b16 %v689, %v687
        %v732 = vpack.c.b16 %v692, %v690
        %v733 = vpack.c.b16 %v693, %v691
        %v734 = vpack.c.b16 %v696, %v694
        %v735 = vpack.c.b16 %v697, %v695
        %v736 = vpack.c.b16 %v700, %v698
        %v737 = vpack.c.b16 %v701, %v699
        %v738 = vpack.c.b16 %v704, %v702
        %v739 = vpack.c.b16 %v705, %v703
        %v740 = vpack.c.b16 %v708, %v706
        %v741 = vpack.c.b16 %v709, %v707
        %774 = vmatprep.subr.bf16.mxu0 %v711
        %775 = vmatpush1.bf16.msra.mxu0 %v710
        %776 = vmatprep.subr.bf16.mxu0 %v713
        %777 = vmatpush1.bf16.msra.mxu0 %v712
        %778 = vmatprep.subr.bf16.mxu0 %v715
        %779 = vmatpush1.bf16.msra.mxu0 %v714
        %780 = vmatprep.subr.bf16.mxu0 %v717
        %781 = vmatpush1.bf16.msra.mxu0 %v716
        %782 = vmatprep.subr.bf16.mxu0 %v719
        %783 = vmatpush1.bf16.msra.mxu0 %v718
        %784 = vmatprep.subr.bf16.mxu0 %v721
        %785 = vmatpush1.bf16.msra.mxu0 %v720
        %786 = vmatprep.subr.bf16.mxu0 %v723
        %787 = vmatpush1.bf16.msra.mxu0 %v722
        %788 = vmatprep.subr.bf16.mxu0 %v725
        %789 = vmatpush1.bf16.msra.mxu0 %v724
        %790 = vmatprep.subr.bf16.mxu0 %v727
        %791 = vmatpush1.bf16.msra.mxu0 %v726
        %792 = vmatprep.subr.bf16.mxu0 %v729
        %793 = vmatpush1.bf16.msra.mxu0 %v728
        %794 = vmatprep.subr.bf16.mxu0 %v731
        %795 = vmatpush1.bf16.msra.mxu0 %v730
        %796 = vmatprep.subr.bf16.mxu0 %v733
        %797 = vmatpush1.bf16.msra.mxu0 %v732
        %798 = vmatprep.subr.bf16.mxu0 %v735
        %799 = vmatpush1.bf16.msra.mxu0 %v734
        %800 = vmatprep.subr.bf16.mxu0 %v737
        %801 = vmatpush1.bf16.msra.mxu0 %v736
        %802 = vmatprep.subr.bf16.mxu0 %v739
        %803 = vmatpush1.bf16.msra.mxu0 %v738
        %804 = vmatprep.subr.bf16.mxu0 %v741
        %805 = vmatpush1.bf16.msra.mxu0 %v740
        %806 = vmatprep.mubr.bf16.mxu0 %v607
        %807 = vmatmul.mubr.bf16.gmra.mrb[0].mxu0 %v606
        %v808 = vpop.f32.mrb[0].mxu0
        %v809 = vadd.f32 %v587, %v808
        %v810 = vpop.f32.mrb[0].mxu0
        %v811 = vadd.f32 %v591, %v810
        %v812 = vpop.f32.mrb[0].mxu0
        %v813 = vadd.f32 %v587, %v812
        %v814 = vpop.f32.mrb[0].mxu0
        %v815 = vadd.f32 %v591, %v814
        %816 = vmatprep.mubr.bf16.mxu0 %v609
        %817 = vmatmul.mubr.bf16.gmra.mrb[0].mxu0 %v608
        %v818 = vpop.f32.mrb[0].mxu0
        %v819 = vadd.f32 %v587, %v818
        %v820 = vpop.f32.mrb[0].mxu0
        %v821 = vadd.f32 %v591, %v820
        %v822 = vpop.f32.mrb[0].mxu0
        %v823 = vadd.f32 %v587, %v822
        %v824 = vpop.f32.mrb[0].mxu0
        %v825 = vadd.f32 %v591, %v824
        %826 = vdwg.mxu0
        %v827 = vpack.c.bf16 %v813, %v809
        %v828 = vpack.c.bf16 %v815, %v811
        %v829 = vpack.c.bf16 %v823, %v819
        %v830 = vpack.c.bf16 %v825, %v821
        %v831 = vld [vmem:[%s5] sm:$0xff]
        %v832 = vld [vmem:[%s5 + $0x8] sm:$0xff]
        %v833 = vld [vmem:[%s5 + $0x10] sm:$0xff]
        %v834 = vld [vmem:[%s5 + $0x18] sm:$0xff]
        %v835 = vld [vmem:[%s5 + $0x20] sm:$0xff]
        %v836 = vld [vmem:[%s5 + $0x28] sm:$0xff]
        %v837 = vld [vmem:[%s5 + $0x30] sm:$0xff]
        %v838 = vld [vmem:[%s5 + $0x38] sm:$0xff]
        %v839 = vld [vmem:[%s5 + $0x40] sm:$0xff]
        %v840 = vld [vmem:[%s5 + $0x48] sm:$0xff]
        %v841 = vld [vmem:[%s5 + $0x50] sm:$0xff]
        %v842 = vld [vmem:[%s5 + $0x58] sm:$0xff]
        %v843 = vld [vmem:[%s5 + $0x60] sm:$0xff]
        %v844 = vld [vmem:[%s5 + $0x68] sm:$0xff]
        %v845 = vld [vmem:[%s5 + $0x70] sm:$0xff]
        %v846 = vld [vmem:[%s5 + $0x78] sm:$0xff]
        %v847 = vld [vmem:[%s5 + $0x80] sm:$0xff]
        %v848 = vld [vmem:[%s5 + $0x88] sm:$0xff]
        %v849 = vld [vmem:[%s5 + $0x90] sm:$0xff]
        %v850 = vld [vmem:[%s5 + $0x98] sm:$0xff]
        %v851 = vld [vmem:[%s5 + $0xa0] sm:$0xff]
        %v852 = vld [vmem:[%s5 + $0xa8] sm:$0xff]
        %v853 = vld [vmem:[%s5 + $0xb0] sm:$0xff]
        %v854 = vld [vmem:[%s5 + $0xb8] sm:$0xff]
        %v855 = vld [vmem:[%s5 + $0xc0] sm:$0xff]
        %v856 = vld [vmem:[%s5 + $0xc8] sm:$0xff]
        %v857 = vld [vmem:[%s5 + $0xd0] sm:$0xff]
        %v858 = vld [vmem:[%s5 + $0xd8] sm:$0xff]
        %v859 = vld [vmem:[%s5 + $0xe0] sm:$0xff]
        %v860 = vld [vmem:[%s5 + $0xe8] sm:$0xff]
        %v861 = vld [vmem:[%s5 + $0xf0] sm:$0xff]
        %v862 = vld [vmem:[%s5 + $0xf8] sm:$0xff]
        %v863 = vld [vmem:[%s5 + $0x100] sm:$0xff]
        %v864 = vld [vmem:[%s5 + $0x108] sm:$0xff]
        %v865 = vld [vmem:[%s5 + $0x110] sm:$0xff]
        %v866 = vld [vmem:[%s5 + $0x118] sm:$0xff]
        %v867 = vld [vmem:[%s5 + $0x120] sm:$0xff]
        %v868 = vld [vmem:[%s5 + $0x128] sm:$0xff]
        %v869 = vld [vmem:[%s5 + $0x130] sm:$0xff]
        %v870 = vld [vmem:[%s5 + $0x138] sm:$0xff]
        %v871 = vld [vmem:[%s5 + $0x140] sm:$0xff]
        %v872 = vld [vmem:[%s5 + $0x148] sm:$0xff]
        %v873 = vld [vmem:[%s5 + $0x150] sm:$0xff]
        %v874 = vld [vmem:[%s5 + $0x158] sm:$0xff]
        %v875 = vld [vmem:[%s5 + $0x160] sm:$0xff]
        %v876 = vld [vmem:[%s5 + $0x168] sm:$0xff]
        %v877 = vld [vmem:[%s5 + $0x170] sm:$0xff]
        %v878 = vld [vmem:[%s5 + $0x178] sm:$0xff]
        %v879 = vld [vmem:[%s5 + $0x180] sm:$0xff]
        %v880 = vld [vmem:[%s5 + $0x188] sm:$0xff]
        %v881 = vld [vmem:[%s5 + $0x190] sm:$0xff]
        %v882 = vld [vmem:[%s5 + $0x198] sm:$0xff]
        %v883 = vld [vmem:[%s5 + $0x1a0] sm:$0xff]
        %v884 = vld [vmem:[%s5 + $0x1a8] sm:$0xff]
        %v885 = vld [vmem:[%s5 + $0x1b0] sm:$0xff]
        %v886 = vld [vmem:[%s5 + $0x1b8] sm:$0xff]
        %v887 = vld [vmem:[%s5 + $0x1c0] sm:$0xff]
        %v888 = vld [vmem:[%s5 + $0x1c8] sm:$0xff]
        %v889 = vld [vmem:[%s5 + $0x1d0] sm:$0xff]
        %v890 = vld [vmem:[%s5 + $0x1d8] sm:$0xff]
        %v891 = vld [vmem:[%s5 + $0x1e0] sm:$0xff]
        %v892 = vld [vmem:[%s5 + $0x1e8] sm:$0xff]
        %v893 = vld [vmem:[%s5 + $0x1f0] sm:$0xff]
        %v894 = vld [vmem:[%s5 + $0x1f8] sm:$0xff]
        %v895 = vld [vmem:[%s6] sm:$0xf]
        %v897 = vlaneseq
        %v898 = vshrl.u32 %v897, 7
        %v899 = vsub.s32 0, %v898
        %v900 = vrot.slane %v895, %v899
        %v901 = vlaneseq
        %v902 = vshrl.u32 %v901, 7
        %v903 = vsub.s32 1, %v902
        %v904 = vrot.slane %v895, %v903
        %v905 = vlaneseq
        %v906 = vshrl.u32 %v905, 7
        %v907 = vsub.s32 2, %v906
        %v908 = vrot.slane %v895, %v907
        %v909 = vlaneseq
        %v910 = vshrl.u32 %v909, 7
        %v911 = vsub.s32 3, %v910
        %v912 = vrot.slane %v895, %v911
        %v981 = vunpack.c.l.b16 %v831
        %v982 = vunpack.c.h.b16 %v831
        %v983 = vunpack.c.l.b16 %v832
        %v984 = vunpack.c.h.b16 %v832
        %v985 = vunpack.c.l.b16 %v833
        %v986 = vunpack.c.h.b16 %v833
        %v987 = vunpack.c.l.b16 %v834
        %v988 = vunpack.c.h.b16 %v834
        %v989 = vunpack.c.l.b16 %v835
        %v990 = vunpack.c.h.b16 %v835
        %v991 = vunpack.c.l.b16 %v836
        %v992 = vunpack.c.h.b16 %v836
        %v993 = vunpack.c.l.b16 %v837
        %v994 = vunpack.c.h.b16 %v837
        %v995 = vunpack.c.l.b16 %v838
        %v996 = vunpack.c.h.b16 %v838
        %v997 = vunpack.c.l.b16 %v839
        %v998 = vunpack.c.h.b16 %v839
        %v999 = vunpack.c.l.b16 %v840
        %v1000 = vunpack.c.h.b16 %v840
        %v1001 = vunpack.c.l.b16 %v841
        %v1002 = vunpack.c.h.b16 %v841
        %v1003 = vunpack.c.l.b16 %v842
        %v1004 = vunpack.c.h.b16 %v842
        %v1005 = vunpack.c.l.b16 %v843
        %v1006 = vunpack.c.h.b16 %v843
        %v1007 = vunpack.c.l.b16 %v844
        %v1008 = vunpack.c.h.b16 %v844
        %v1009 = vunpack.c.l.b16 %v845
        %v1010 = vunpack.c.h.b16 %v845
        %v1011 = vunpack.c.l.b16 %v846
        %v1012 = vunpack.c.h.b16 %v846
        %v1013 = vunpack.c.l.b16 %v847
        %v1014 = vunpack.c.h.b16 %v847
        %v1015 = vunpack.c.l.b16 %v848
        %v1016 = vunpack.c.h.b16 %v848
        %v1017 = vunpack.c.l.b16 %v849
        %v1018 = vunpack.c.h.b16 %v849
        %v1019 = vunpack.c.l.b16 %v850
        %v1020 = vunpack.c.h.b16 %v850
        %v1021 = vunpack.c.l.b16 %v851
        %v1022 = vunpack.c.h.b16 %v851
        %v1023 = vunpack.c.l.b16 %v852
        %v1024 = vunpack.c.h.b16 %v852
        %v1025 = vunpack.c.l.b16 %v853
        %v1026 = vunpack.c.h.b16 %v853
        %v1027 = vunpack.c.l.b16 %v854
        %v1028 = vunpack.c.h.b16 %v854
        %v1029 = vunpack.c.l.b16 %v855
        %v1030 = vunpack.c.h.b16 %v855
        %v1031 = vunpack.c.l.b16 %v856
        %v1032 = vunpack.c.h.b16 %v856
        %v1033 = vunpack.c.l.b16 %v857
        %v1034 = vunpack.c.h.b16 %v857
        %v1035 = vunpack.c.l.b16 %v858
        %v1036 = vunpack.c.h.b16 %v858
        %v1037 = vunpack.c.l.b16 %v859
        %v1038 = vunpack.c.h.b16 %v859
        %v1039 = vunpack.c.l.b16 %v860
        %v1040 = vunpack.c.h.b16 %v860
        %v1041 = vunpack.c.l.b16 %v861
        %v1042 = vunpack.c.h.b16 %v861
        %v1043 = vunpack.c.l.b16 %v862
        %v1044 = vunpack.c.h.b16 %v862
        %v1045 = vunpack.c.l.b16 %v863
        %v1046 = vunpack.c.h.b16 %v863
        %v1047 = vunpack.c.l.b16 %v864
        %v1048 = vunpack.c.h.b16 %v864
        %v1049 = vunpack.c.l.b16 %v865
        %v1050 = vunpack.c.h.b16 %v865
        %v1051 = vunpack.c.l.b16 %v866
        %v1052 = vunpack.c.h.b16 %v866
        %v1053 = vunpack.c.l.b16 %v867
        %v1054 = vunpack.c.h.b16 %v867
        %v1055 = vunpack.c.l.b16 %v868
        %v1056 = vunpack.c.h.b16 %v868
        %v1057 = vunpack.c.l.b16 %v869
        %v1058 = vunpack.c.h.b16 %v869
        %v1059 = vunpack.c.l.b16 %v870
        %v1060 = vunpack.c.h.b16 %v870
        %v1061 = vunpack.c.l.b16 %v871
        %v1062 = vunpack.c.h.b16 %v871
        %v1063 = vunpack.c.l.b16 %v872
        %v1064 = vunpack.c.h.b16 %v872
        %v1065 = vunpack.c.l.b16 %v873
        %v1066 = vunpack.c.h.b16 %v873
        %v1067 = vunpack.c.l.b16 %v874
        %v1068 = vunpack.c.h.b16 %v874
        %v1069 = vunpack.c.l.b16 %v875
        %v1070 = vunpack.c.h.b16 %v875
        %v1071 = vunpack.c.l.b16 %v876
        %v1072 = vunpack.c.h.b16 %v876
        %v1073 = vunpack.c.l.b16 %v877
        %v1074 = vunpack.c.h.b16 %v877
        %v1075 = vunpack.c.l.b16 %v878
        %v1076 = vunpack.c.h.b16 %v878
        %v1077 = vunpack.c.l.b16 %v879
        %v1078 = vunpack.c.h.b16 %v879
        %v1079 = vunpack.c.l.b16 %v880
        %v1080 = vunpack.c.h.b16 %v880
        %v1081 = vunpack.c.l.b16 %v881
        %v1082 = vunpack.c.h.b16 %v881
        %v1083 = vunpack.c.l.b16 %v882
        %v1084 = vunpack.c.h.b16 %v882
        %v1085 = vunpack.c.l.b16 %v883
        %v1086 = vunpack.c.h.b16 %v883
        %v1087 = vunpack.c.l.b16 %v884
        %v1088 = vunpack.c.h.b16 %v884
        %v1089 = vunpack.c.l.b16 %v885
        %v1090 = vunpack.c.h.b16 %v885
        %v1091 = vunpack.c.l.b16 %v886
        %v1092 = vunpack.c.h.b16 %v886
        %v1093 = vunpack.c.l.b16 %v887
        %v1094 = vunpack.c.h.b16 %v887
        %v1095 = vunpack.c.l.b16 %v888
        %v1096 = vunpack.c.h.b16 %v888
        %v1097 = vunpack.c.l.b16 %v889
        %v1098 = vunpack.c.h.b16 %v889
        %v1099 = vunpack.c.l.b16 %v890
        %v1100 = vunpack.c.h.b16 %v890
        %v1101 = vunpack.c.l.b16 %v891
        %v1102 = vunpack.c.h.b16 %v891
        %v1103 = vunpack.c.l.b16 %v892
        %v1104 = vunpack.c.h.b16 %v892
        %v1105 = vunpack.c.l.b16 %v893
        %v1106 = vunpack.c.h.b16 %v893
        %v1107 = vunpack.c.l.b16 %v894
        %v1108 = vunpack.c.h.b16 %v894
        %v1109 = vpack.c.b16 %v985, %v981
        %v1110 = vpack.c.b16 %v986, %v982
        %v1111 = vpack.c.b16 %v987, %v983
        %v1112 = vpack.c.b16 %v988, %v984
        %v1113 = vpack.c.b16 %v993, %v989
        %v1114 = vpack.c.b16 %v994, %v990
        %v1115 = vpack.c.b16 %v995, %v991
        %v1116 = vpack.c.b16 %v996, %v992
        %v1117 = vpack.c.b16 %v1001, %v997
        %v1118 = vpack.c.b16 %v1002, %v998
        %v1119 = vpack.c.b16 %v1003, %v999
        %v1120 = vpack.c.b16 %v1004, %v1000
        %v1121 = vpack.c.b16 %v1009, %v1005
        %v1122 = vpack.c.b16 %v1010, %v1006
        %v1123 = vpack.c.b16 %v1011, %v1007
        %v1124 = vpack.c.b16 %v1012, %v1008
        %v1125 = vpack.c.b16 %v1017, %v1013
        %v1126 = vpack.c.b16 %v1018, %v1014
        %v1127 = vpack.c.b16 %v1019, %v1015
        %v1128 = vpack.c.b16 %v1020, %v1016
        %v1129 = vpack.c.b16 %v1025, %v1021
        %v1130 = vpack.c.b16 %v1026, %v1022
        %v1131 = vpack.c.b16 %v1027, %v1023
        %v1132 = vpack.c.b16 %v1028, %v1024
        %v1133 = vpack.c.b16 %v1033, %v1029
        %v1134 = vpack.c.b16 %v1034, %v1030
        %v1135 = vpack.c.b16 %v1035, %v1031
        %v1136 = vpack.c.b16 %v1036, %v1032
        %v1137 = vpack.c.b16 %v1041, %v1037
        %v1138 = vpack.c.b16 %v1042, %v1038
        %v1139 = vpack.c.b16 %v1043, %v1039
        %v1140 = vpack.c.b16 %v1044, %v1040
        %v1141 = vpack.c.b16 %v1049, %v1045
        %v1142 = vpack.c.b16 %v1050, %v1046
        %v1143 = vpack.c.b16 %v1051, %v1047
        %v1144 = vpack.c.b16 %v1052, %v1048
        %v1145 = vpack.c.b16 %v1057, %v1053
        %v1146 = vpack.c.b16 %v1058, %v1054
        %v1147 = vpack.c.b16 %v1059, %v1055
        %v1148 = vpack.c.b16 %v1060, %v1056
        %v1149 = vpack.c.b16 %v1065, %v1061
        %v1150 = vpack.c.b16 %v1066, %v1062
        %v1151 = vpack.c.b16 %v1067, %v1063
        %v1152 = vpack.c.b16 %v1068, %v1064
        %v1153 = vpack.c.b16 %v1073, %v1069
        %v1154 = vpack.c.b16 %v1074, %v1070
        %v1155 = vpack.c.b16 %v1075, %v1071
        %v1156 = vpack.c.b16 %v1076, %v1072
        %v1157 = vpack.c.b16 %v1081, %v1077
        %v1158 = vpack.c.b16 %v1082, %v1078
        %v1159 = vpack.c.b16 %v1083, %v1079
        %v1160 = vpack.c.b16 %v1084, %v1080
        %v1161 = vpack.c.b16 %v1089, %v1085
        %v1162 = vpack.c.b16 %v1090, %v1086
        %v1163 = vpack.c.b16 %v1091, %v1087
        %v1164 = vpack.c.b16 %v1092, %v1088
        %v1165 = vpack.c.b16 %v1097, %v1093
        %v1166 = vpack.c.b16 %v1098, %v1094
        %v1167 = vpack.c.b16 %v1099, %v1095
        %v1168 = vpack.c.b16 %v1100, %v1096
        %v1169 = vpack.c.b16 %v1105, %v1101
        %v1170 = vpack.c.b16 %v1106, %v1102
        %v1171 = vpack.c.b16 %v1107, %v1103
        %v1172 = vpack.c.b16 %v1108, %v1104
        %1237 = vmatprep.subr.bf16.mxu0 %v1110
        %1238 = vmatpush1.bf16.msra.mxu0 %v1109
        %1239 = vmatprep.subr.bf16.mxu0 %v1114
        %1240 = vmatpush1.bf16.msra.mxu0 %v1113
        %1241 = vmatprep.subr.bf16.mxu0 %v1118
        %1242 = vmatpush1.bf16.msra.mxu0 %v1117
        %1243 = vmatprep.subr.bf16.mxu0 %v1122
        %1244 = vmatpush1.bf16.msra.mxu0 %v1121
        %1245 = vmatprep.subr.bf16.mxu0 %v1126
        %1246 = vmatpush1.bf16.msra.mxu0 %v1125
        %1247 = vmatprep.subr.bf16.mxu0 %v1130
        %1248 = vmatpush1.bf16.msra.mxu0 %v1129
        %1249 = vmatprep.subr.bf16.mxu0 %v1134
        %1250 = vmatpush1.bf16.msra.mxu0 %v1133
        %1251 = vmatprep.subr.bf16.mxu0 %v1138
        %1252 = vmatpush1.bf16.msra.mxu0 %v1137
        %1253 = vmatprep.subr.bf16.mxu0 %v1142
        %1254 = vmatpush1.bf16.msra.mxu0 %v1141
        %1255 = vmatprep.subr.bf16.mxu0 %v1146
        %1256 = vmatpush1.bf16.msra.mxu0 %v1145
        %1257 = vmatprep.subr.bf16.mxu0 %v1150
        %1258 = vmatpush1.bf16.msra.mxu0 %v1149
        %1259 = vmatprep.subr.bf16.mxu0 %v1154
        %1260 = vmatpush1.bf16.msra.mxu0 %v1153
        %1261 = vmatprep.subr.bf16.mxu0 %v1158
        %1262 = vmatpush1.bf16.msra.mxu0 %v1157
        %1263 = vmatprep.subr.bf16.mxu0 %v1162
        %1264 = vmatpush1.bf16.msra.mxu0 %v1161
        %1265 = vmatprep.subr.bf16.mxu0 %v1166
        %1266 = vmatpush1.bf16.msra.mxu0 %v1165
        %1267 = vmatprep.subr.bf16.mxu0 %v1170
        %1268 = vmatpush1.bf16.msra.mxu0 %v1169
        %1269 = vmatprep.mubr.bf16.mxu0 %v828
        %1270 = vmatmul.mubr.bf16.gmra.mrb[0].mxu0 %v827
        %v1271 = vpop.f32.mrb[0].mxu0
        %v1272 = vadd.f32 %v900, %v1271
        %v1273 = vpop.f32.mrb[0].mxu0
        %v1274 = vadd.f32 %v904, %v1273
        %v1275 = vpop.f32.mrb[0].mxu0
        %v1276 = vadd.f32 %v900, %v1275
        %v1277 = vpop.f32.mrb[0].mxu0
        %v1278 = vadd.f32 %v904, %v1277
        %1279 = vmatprep.mubr.bf16.mxu0 %v830
        %1280 = vmatmul.mubr.bf16.gmra.mrb[0].mxu0 %v829
        %v1281 = vpop.f32.mrb[0].mxu0
        %v1282 = vadd.f32 %v900, %v1281
        %v1283 = vpop.f32.mrb[0].mxu0
        %v1284 = vadd.f32 %v904, %v1283
        %v1285 = vpop.f32.mrb[0].mxu0
        %v1286 = vadd.f32 %v900, %v1285
        %v1287 = vpop.f32.mrb[0].mxu0
        %v1288 = vadd.f32 %v904, %v1287
        %1289 = vdwg.mxu0
        %1290 = vmatprep.subr.bf16.mxu0 %v1112
        %1291 = vmatpush1.bf16.msra.mxu0 %v1111
        %1292 = vmatprep.subr.bf16.mxu0 %v1116
        %1293 = vmatpush1.bf16.msra.mxu0 %v1115
        %1294 = vmatprep.subr.bf16.mxu0 %v1120
        %1295 = vmatpush1.bf16.msra.mxu0 %v1119
        %1296 = vmatprep.subr.bf16.mxu0 %v1124
        %1297 = vmatpush1.bf16.msra.mxu0 %v1123
        %1298 = vmatprep.subr.bf16.mxu0 %v1128
        %1299 = vmatpush1.bf16.msra.mxu0 %v1127
        %1300 = vmatprep.subr.bf16.mxu0 %v1132
        %1301 = vmatpush1.bf16.msra.mxu0 %v1131
        %1302 = vmatprep.subr.bf16.mxu0 %v1136
        %1303 = vmatpush1.bf16.msra.mxu0 %v1135
        %1304 = vmatprep.subr.bf16.mxu0 %v1140
        %1305 = vmatpush1.bf16.msra.mxu0 %v1139
        %1306 = vmatprep.subr.bf16.mxu0 %v1144
        %1307 = vmatpush1.bf16.msra.mxu0 %v1143
        %1308 = vmatprep.subr.bf16.mxu0 %v1148
        %1309 = vmatpush1.bf16.msra.mxu0 %v1147
        %1310 = vmatprep.subr.bf16.mxu0 %v1152
        %1311 = vmatpush1.bf16.msra.mxu0 %v1151
        %1312 = vmatprep.subr.bf16.mxu0 %v1156
        %1313 = vmatpush1.bf16.msra.mxu0 %v1155
        %1314 = vmatprep.subr.bf16.mxu0 %v1160
        %1315 = vmatpush1.bf16.msra.mxu0 %v1159
        %1316 = vmatprep.subr.bf16.mxu0 %v1164
        %1317 = vmatpush1.bf16.msra.mxu0 %v1163
        %1318 = vmatprep.subr.bf16.mxu0 %v1168
        %1319 = vmatpush1.bf16.msra.mxu0 %v1167
        %1320 = vmatprep.subr.bf16.mxu0 %v1172
        %1321 = vmatpush1.bf16.msra.mxu0 %v1171
        %1322 = vmatprep.mubr.bf16.mxu0 %v828
        %1323 = vmatmul.mubr.bf16.gmra.mrb[0].mxu0 %v827
        %v1324 = vpop.f32.mrb[0].mxu0
        %v1325 = vadd.f32 %v908, %v1324
        %v1326 = vpop.f32.mrb[0].mxu0
        %v1327 = vadd.f32 %v912, %v1326
        %v1328 = vpop.f32.mrb[0].mxu0
        %v1329 = vadd.f32 %v908, %v1328
        %v1330 = vpop.f32.mrb[0].mxu0
        %v1331 = vadd.f32 %v912, %v1330
        %1332 = vmatprep.mubr.bf16.mxu0 %v830
        %1333 = vmatmul.mubr.bf16.gmra.mrb[0].mxu0 %v829
        %v1334 = vpop.f32.mrb[0].mxu0
        %v1335 = vadd.f32 %v908, %v1334
        %v1336 = vpop.f32.mrb[0].mxu0
        %v1337 = vadd.f32 %v912, %v1336
        %v1338 = vpop.f32.mrb[0].mxu0
        %v1339 = vadd.f32 %v908, %v1338
        %v1340 = vpop.f32.mrb[0].mxu0
        %v1341 = vadd.f32 %v912, %v1340
        %1342 = vdwg.mxu0
        %v1343 = vpack.c.bf16 %v1276, %v1272
        %v1344 = vpack.c.bf16 %v1278, %v1274
        %v1345 = vpack.c.bf16 %v1329, %v1325
        %v1346 = vpack.c.bf16 %v1331, %v1327
        %v1347 = vpack.c.bf16 %v1286, %v1282
        %v1348 = vpack.c.bf16 %v1288, %v1284
        %v1349 = vpack.c.bf16 %v1339, %v1335
        %v1350 = vpack.c.bf16 %v1341, %v1337
        %1351 = vst [vmem:[#allocation2] sm:$0xff] %v1343
        %1352 = vst [vmem:[#allocation2 + $0x8] sm:$0xff] %v1347
        %s1353 = scalar_lea.vmem [#allocation2], 16
        %1354 = vst [vmem:[%s1353] sm:$0xff] %v1344
        %1355 = vst [vmem:[%s1353 + $0x8] sm:$0xff] %v1348
        %s1356 = scalar_lea.vmem [#allocation2], 32
        %1357 = vst [vmem:[%s1356] sm:$0xff] %v1345
        %1358 = vst [vmem:[%s1356 + $0x8] sm:$0xff] %v1349
        %s1359 = scalar_lea.vmem [#allocation2], 48
        %1360 = vst [vmem:[%s1359] sm:$0xff] %v1346
        %1361 = vst [vmem:[%s1359 + $0x8] sm:$0xff] %v1350
      $region76: #{table_decoder_forward.1} parent=71 // pred_fallthru
        _
      %s1362 = smul.u32 %s29, 2
      %s1363 = smul.addr %s1362, 8
      %s1364 = scalar_lea.vmem [#allocation2], %s1363
      %v1365 = vld [vmem:[%s1364] sm:$0xff]
      %v1366 = vld [vmem:[%s1364 + $0x8] sm:$0xff]
      %v1367 = vld [vmem:[%s7] sm:$0xff]
      %v1368 = vld [vmem:[%s7 + $0x8] sm:$0xff]
      %v1369 = vld [vmem:[%s7 + $0x10] sm:$0xff]
      %v1370 = vld [vmem:[%s7 + $0x18] sm:$0xff]
      %v1371 = vld [vmem:[%s7 + $0x20] sm:$0xff]
      %v1372 = vld [vmem:[%s7 + $0x28] sm:$0xff]
      %v1373 = vld [vmem:[%s7 + $0x30] sm:$0xff]
      %v1374 = vld [vmem:[%s7 + $0x38] sm:$0xff]
      %v1375 = vld [vmem:[%s7 + $0x40] sm:$0xff]
      %v1376 = vld [vmem:[%s7 + $0x48] sm:$0xff]
      %v1377 = vld [vmem:[%s7 + $0x50] sm:$0xff]
      %v1378 = vld [vmem:[%s7 + $0x58] sm:$0xff]
      %v1379 = vld [vmem:[%s7 + $0x60] sm:$0xff]
      %v1380 = vld [vmem:[%s7 + $0x68] sm:$0xff]
      %v1381 = vld [vmem:[%s7 + $0x70] sm:$0xff]
      %v1382 = vld [vmem:[%s7 + $0x78] sm:$0xff]
      %v1383 = vld [vmem:[%s7 + $0x80] sm:$0xff]
      %v1384 = vld [vmem:[%s7 + $0x88] sm:$0xff]
      %v1385 = vld [vmem:[%s7 + $0x90] sm:$0xff]
      %v1386 = vld [vmem:[%s7 + $0x98] sm:$0xff]
      %v1387 = vld [vmem:[%s7 + $0xa0] sm:$0xff]
      %v1388 = vld [vmem:[%s7 + $0xa8] sm:$0xff]
      %v1389 = vld [vmem:[%s7 + $0xb0] sm:$0xff]
      %v1390 = vld [vmem:[%s7 + $0xb8] sm:$0xff]
      %v1391 = vld [vmem:[%s7 + $0xc0] sm:$0xff]
      %v1392 = vld [vmem:[%s7 + $0xc8] sm:$0xff]
      %v1393 = vld [vmem:[%s7 + $0xd0] sm:$0xff]
      %v1394 = vld [vmem:[%s7 + $0xd8] sm:$0xff]
      %v1395 = vld [vmem:[%s7 + $0xe0] sm:$0xff]
      %v1396 = vld [vmem:[%s7 + $0xe8] sm:$0xff]
      %v1397 = vld [vmem:[%s7 + $0xf0] sm:$0xff]
      %v1398 = vld [vmem:[%s7 + $0xf8] sm:$0xff]
      %v1399 = vld [vmem:[%s7 + $0x100] sm:$0xff]
      %v1400 = vld [vmem:[%s7 + $0x108] sm:$0xff]
      %v1401 = vld [vmem:[%s7 + $0x110] sm:$0xff]
      %v1402 = vld [vmem:[%s7 + $0x118] sm:$0xff]
      %v1403 = vld [vmem:[%s7 + $0x120] sm:$0xff]
      %v1404 = vld [vmem:[%s7 + $0x128] sm:$0xff]
      %v1405 = vld [vmem:[%s7 + $0x130] sm:$0xff]
      %v1406 = vld [vmem:[%s7 + $0x138] sm:$0xff]
      %v1407 = vld [vmem:[%s7 + $0x140] sm:$0xff]
      %v1408 = vld [vmem:[%s7 + $0x148] sm:$0xff]
      %v1409 = vld [vmem:[%s7 + $0x150] sm:$0xff]
      %v1410 = vld [vmem:[%s7 + $0x158] sm:$0xff]
      %v1411 = vld [vmem:[%s7 + $0x160] sm:$0xff]
      %v1412 = vld [vmem:[%s7 + $0x168] sm:$0xff]
      %v1413 = vld [vmem:[%s7 + $0x170] sm:$0xff]
      %v1414 = vld [vmem:[%s7 + $0x178] sm:$0xff]
      %v1415 = vld [vmem:[%s7 + $0x180] sm:$0xff]
      %v1416 = vld [vmem:[%s7 + $0x188] sm:$0xff]
      %v1417 = vld [vmem:[%s7 + $0x190] sm:$0xff]
      %v1418 = vld [vmem:[%s7 + $0x198] sm:$0xff]
      %v1419 = vld [vmem:[%s7 + $0x1a0] sm:$0xff]
      %v1420 = vld [vmem:[%s7 + $0x1a8] sm:$0xff]
      %v1421 = vld [vmem:[%s7 + $0x1b0] sm:$0xff]
      %v1422 = vld [vmem:[%s7 + $0x1b8] sm:$0xff]
      %v1423 = vld [vmem:[%s7 + $0x1c0] sm:$0xff]
      %v1424 = vld [vmem:[%s7 + $0x1c8] sm:$0xff]
      %v1425 = vld [vmem:[%s7 + $0x1d0] sm:$0xff]
      %v1426 = vld [vmem:[%s7 + $0x1d8] sm:$0xff]
      %v1427 = vld [vmem:[%s7 + $0x1e0] sm:$0xff]
      %v1428 = vld [vmem:[%s7 + $0x1e8] sm:$0xff]
      %v1429 = vld [vmem:[%s7 + $0x1f0] sm:$0xff]
      %v1430 = vld [vmem:[%s7 + $0x1f8] sm:$0xff]
      %v1431 = vld [vmem:[%s519] sm:$0xf]
      %v1432 = vld [vmem:[%s519 + $0x4] sm:$0xf]
      %v1433 = vld [vmem:[%s519 + $0x8] sm:$0xf]
      %v1434 = vld [vmem:[%s519 + $0xc] sm:$0xf]
      %v1435 = vld [vmem:[%s8] sm:$0xff]
      %v1436 = vld [vmem:[%s8 + $0x8] sm:$0xff]
      %v1437 = vld [vmem:[%s8 + $0x10] sm:$0xff]
      %v1438 = vld [vmem:[%s8 + $0x18] sm:$0xff]
      %v1439 = vld [vmem:[%s8 + $0x20] sm:$0xff]
      %v1440 = vld [vmem:[%s8 + $0x28] sm:$0xff]
      %v1441 = vld [vmem:[%s8 + $0x30] sm:$0xff]
      %v1442 = vld [vmem:[%s8 + $0x38] sm:$0xff]
      %v1443 = vld [vmem:[%s8 + $0x40] sm:$0xff]
      %v1444 = vld [vmem:[%s8 + $0x48] sm:$0xff]
      %v1445 = vld [vmem:[%s8 + $0x50] sm:$0xff]
      %v1446 = vld [vmem:[%s8 + $0x58] sm:$0xff]
      %v1447 = vld [vmem:[%s8 + $0x60] sm:$0xff]
      %v1448 = vld [vmem:[%s8 + $0x68] sm:$0xff]
      %v1449 = vld [vmem:[%s8 + $0x70] sm:$0xff]
      %v1450 = vld [vmem:[%s8 + $0x78] sm:$0xff]
      %v1451 = vld [vmem:[%s8 + $0x80] sm:$0xff]
      %v1452 = vld [vmem:[%s8 + $0x88] sm:$0xff]
      %v1453 = vld [vmem:[%s8 + $0x90] sm:$0xff]
      %v1454 = vld [vmem:[%s8 + $0x98] sm:$0xff]
      %v1455 = vld [vmem:[%s8 + $0xa0] sm:$0xff]
      %v1456 = vld [vmem:[%s8 + $0xa8] sm:$0xff]
      %v1457 = vld [vmem:[%s8 + $0xb0] sm:$0xff]
      %v1458 = vld [vmem:[%s8 + $0xb8] sm:$0xff]
      %v1459 = vld [vmem:[%s8 + $0xc0] sm:$0xff]
      %v1460 = vld [vmem:[%s8 + $0xc8] sm:$0xff]
      %v1461 = vld [vmem:[%s8 + $0xd0] sm:$0xff]
      %v1462 = vld [vmem:[%s8 + $0xd8] sm:$0xff]
      %v1463 = vld [vmem:[%s8 + $0xe0] sm:$0xff]
      %v1464 = vld [vmem:[%s8 + $0xe8] sm:$0xff]
      %v1465 = vld [vmem:[%s8 + $0xf0] sm:$0xff]
      %v1466 = vld [vmem:[%s8 + $0xf8] sm:$0xff]
      %v1471 = vunpack.c.l.b16 %v1431
      %v1472 = vunpack.c.l.b16 %v1432
      %v1473 = vunpack.c.l.b16 %v1433
      %v1474 = vunpack.c.l.b16 %v1434
      %v1475 = vpack.c.b16 %v1472, %v1471
      %v1476 = vpack.c.b16 %v1474, %v1473
      %v1509 = vunpack.c.l.b16 %v1435
      %v1510 = vunpack.c.h.b16 %v1435
      %v1511 = vunpack.c.l.b16 %v1436
      %v1512 = vunpack.c.h.b16 %v1436
      %v1513 = vunpack.c.l.b16 %v1437
      %v1514 = vunpack.c.h.b16 %v1437
      %v1515 = vunpack.c.l.b16 %v1438
      %v1516 = vunpack.c.h.b16 %v1438
      %v1517 = vunpack.c.l.b16 %v1439
      %v1518 = vunpack.c.h.b16 %v1439
      %v1519 = vunpack.c.l.b16 %v1440
      %v1520 = vunpack.c.h.b16 %v1440
      %v1521 = vunpack.c.l.b16 %v1441
      %v1522 = vunpack.c.h.b16 %v1441
      %v1523 = vunpack.c.l.b16 %v1442
      %v1524 = vunpack.c.h.b16 %v1442
      %v1525 = vunpack.c.l.b16 %v1443
      %v1526 = vunpack.c.h.b16 %v1443
      %v1527 = vunpack.c.l.b16 %v1444
      %v1528 = vunpack.c.h.b16 %v1444
      %v1529 = vunpack.c.l.b16 %v1445
      %v1530 = vunpack.c.h.b16 %v1445
      %v1531 = vunpack.c.l.b16 %v1446
      %v1532 = vunpack.c.h.b16 %v1446
      %v1533 = vunpack.c.l.b16 %v1447
      %v1534 = vunpack.c.h.b16 %v1447
      %v1535 = vunpack.c.l.b16 %v1448
      %v1536 = vunpack.c.h.b16 %v1448
      %v1537 = vunpack.c.l.b16 %v1449
      %v1538 = vunpack.c.h.b16 %v1449
      %v1539 = vunpack.c.l.b16 %v1450
      %v1540 = vunpack.c.h.b16 %v1450
      %v1541 = vunpack.c.l.b16 %v1451
      %v1542 = vunpack.c.h.b16 %v1451
      %v1543 = vunpack.c.l.b16 %v1452
      %v1544 = vunpack.c.h.b16 %v1452
      %v1545 = vunpack.c.l.b16 %v1453
      %v1546 = vunpack.c.h.b16 %v1453
      %v1547 = vunpack.c.l.b16 %v1454
      %v1548 = vunpack.c.h.b16 %v1454
      %v1549 = vunpack.c.l.b16 %v1455
      %v1550 = vunpack.c.h.b16 %v1455
      %v1551 = vunpack.c.l.b16 %v1456
      %v1552 = vunpack.c.h.b16 %v1456
      %v1553 = vunpack.c.l.b16 %v1457
      %v1554 = vunpack.c.h.b16 %v1457
      %v1555 = vunpack.c.l.b16 %v1458
      %v1556 = vunpack.c.h.b16 %v1458
      %v1557 = vunpack.c.l.b16 %v1459
      %v1558 = vunpack.c.h.b16 %v1459
      %v1559 = vunpack.c.l.b16 %v1460
      %v1560 = vunpack.c.h.b16 %v1460
      %v1561 = vunpack.c.l.b16 %v1461
      %v1562 = vunpack.c.h.b16 %v1461
      %v1563 = vunpack.c.l.b16 %v1462
      %v1564 = vunpack.c.h.b16 %v1462
      %v1565 = vunpack.c.l.b16 %v1463
      %v1566 = vunpack.c.h.b16 %v1463
      %v1567 = vunpack.c.l.b16 %v1464
      %v1568 = vunpack.c.h.b16 %v1464
      %v1569 = vunpack.c.l.b16 %v1465
      %v1570 = vunpack.c.h.b16 %v1465
      %v1571 = vunpack.c.l.b16 %v1466
      %v1572 = vunpack.c.h.b16 %v1466
      %v1573 = vpack.c.b16 %v1517, %v1509
      %v1574 = vpack.c.b16 %v1518, %v1510
      %v1575 = vpack.c.b16 %v1519, %v1511
      %v1576 = vpack.c.b16 %v1520, %v1512
      %v1577 = vpack.c.b16 %v1521, %v1513
      %v1578 = vpack.c.b16 %v1522, %v1514
      %v1579 = vpack.c.b16 %v1523, %v1515
      %v1580 = vpack.c.b16 %v1524, %v1516
      %v1581 = vpack.c.b16 %v1533, %v1525
      %v1582 = vpack.c.b16 %v1534, %v1526
      %v1583 = vpack.c.b16 %v1535, %v1527
      %v1584 = vpack.c.b16 %v1536, %v1528
      %v1585 = vpack.c.b16 %v1537, %v1529
      %v1586 = vpack.c.b16 %v1538, %v1530
      %v1587 = vpack.c.b16 %v1539, %v1531
      %v1588 = vpack.c.b16 %v1540, %v1532
      %v1589 = vpack.c.b16 %v1549, %v1541
      %v1590 = vpack.c.b16 %v1550, %v1542
      %v1591 = vpack.c.b16 %v1551, %v1543
      %v1592 = vpack.c.b16 %v1552, %v1544
      %v1593 = vpack.c.b16 %v1553, %v1545
      %v1594 = vpack.c.b16 %v1554, %v1546
      %v1595 = vpack.c.b16 %v1555, %v1547
      %v1596 = vpack.c.b16 %v1556, %v1548
      %v1597 = vpack.c.b16 %v1565, %v1557
      %v1598 = vpack.c.b16 %v1566, %v1558
      %v1599 = vpack.c.b16 %v1567, %v1559
      %v1600 = vpack.c.b16 %v1568, %v1560
      %v1601 = vpack.c.b16 %v1569, %v1561
      %v1602 = vpack.c.b16 %v1570, %v1562
      %v1603 = vpack.c.b16 %v1571, %v1563
      %v1604 = vpack.c.b16 %v1572, %v1564
      %vm1637 = vcmask 523264
      %v1639 = vsel %vm1637, %v1475, 0
      %v1642 = vsel %vm1637, %v1476, 0
      %1644 = vmatprep.subr.bf16.mxu0 %v1574
      %1645 = vmatpush1.bf16.msra.mxu0 %v1573
      %1646 = vmatprep.subr.bf16.mxu0 %v1582
      %1647 = vmatpush1.bf16.msra.mxu0 %v1581
      %1648 = vmatprep.subr.bf16.mxu0 %v1590
      %1649 = vmatpush1.bf16.msra.mxu0 %v1589
      %1650 = vmatprep.subr.bf16.mxu0 %v1598
      %1651 = vmatpush1.bf16.msra.mxu0 %v1597
      %1652 = vmatprep.subr.bf16.mxu0 0
      %1653 = vmatpush1.bf16.msra.mxu0 0
      %1654 = vmatprep.subr.bf16.mxu0 0
      %1655 = vmatpush1.bf16.msra.mxu0 0
      %1656 = vmatprep.subr.bf16.mxu0 0
      %1657 = vmatpush1.bf16.msra.mxu0 0
      %1658 = vmatprep.subr.bf16.mxu0 0
      %1659 = vmatpush1.bf16.msra.mxu0 0
      %1660 = vmatprep.subr.bf16.mxu0 0
      %1661 = vmatpush1.bf16.msra.mxu0 0
      %1662 = vmatprep.subr.bf16.mxu0 0
      %1663 = vmatpush1.bf16.msra.mxu0 0
      %1664 = vmatprep.subr.bf16.mxu0 0
      %1665 = vmatpush1.bf16.msra.mxu0 0
      %1666 = vmatprep.subr.bf16.mxu0 0
      %1667 = vmatpush1.bf16.msra.mxu0 0
      %1668 = vmatprep.subr.bf16.mxu0 0
      %1669 = vmatpush1.bf16.msra.mxu0 0
      %1670 = vmatprep.subr.bf16.mxu0 0
      %1671 = vmatpush1.bf16.msra.mxu0 0
      %1672 = vmatprep.subr.bf16.mxu0 0
      %1673 = vmatpush1.bf16.msra.mxu0 0
      %1674 = vmatprep.subr.bf16.mxu0 0
      %1675 = vmatpush1.bf16.msra.mxu0 0
      %1676 = vmatprep.mubr.bf16.mxu0 0
      %1677 = vmatmul.mubr.bf16.gmra.mrb[0].mxu0 %v1639
      %v1678 = vpop.f32.mrb[0].mxu0
      %v1679 = vadd.f32 0.0, %v1678
      %v1680 = vpop.f32.mrb[0].mxu0
      %v1681 = vadd.f32 0.0, %v1680
      %v1682 = vpop.f32.mrb[0].mxu0
      %v1683 = vadd.f32 0.0, %v1682
      %v1684 = vpop.f32.mrb[0].mxu0
      %v1685 = vadd.f32 0.0, %v1684
      %1686 = vmatprep.mubr.bf16.mxu0 0
      %1687 = vmatmul.mubr.bf16.gmra.mrb[0].mxu0 %v1642
      %v1688 = vpop.f32.mrb[0].mxu0
      %v1689 = vadd.f32 0.0, %v1688
      %v1690 = vpop.f32.mrb[0].mxu0
      %v1691 = vadd.f32 0.0, %v1690
      %v1692 = vpop.f32.mrb[0].mxu0
      %v1693 = vadd.f32 0.0, %v1692
      %v1694 = vpop.f32.mrb[0].mxu0
      %v1695 = vadd.f32 0.0, %v1694
      %1696 = vdwg.mxu0
      %1697 = vmatprep.subr.bf16.mxu0 %v1576
      %1698 = vmatpush1.bf16.msra.mxu0 %v1575
      %1699 = vmatprep.subr.bf16.mxu0 %v1584
      %1700 = vmatpush1.bf16.msra.mxu0 %v1583
      %1701 = vmatprep.subr.bf16.mxu0 %v1592
      %1702 = vmatpush1.bf16.msra.mxu0 %v1591
      %1703 = vmatprep.subr.bf16.mxu0 %v1600
      %1704 = vmatpush1.bf16.msra.mxu0 %v1599
      %1705 = vmatprep.subr.bf16.mxu0 0
      %1706 = vmatpush1.bf16.msra.mxu0 0
      %1707 = vmatprep.subr.bf16.mxu0 0
      %1708 = vmatpush1.bf16.msra.mxu0 0
      %1709 = vmatprep.subr.bf16.mxu0 0
      %1710 = vmatpush1.bf16.msra.mxu0 0
      %1711 = vmatprep.subr.bf16.mxu0 0
      %1712 = vmatpush1.bf16.msra.mxu0 0
      %1713 = vmatprep.subr.bf16.mxu0 0
      %1714 = vmatpush1.bf16.msra.mxu0 0
      %1715 = vmatprep.subr.bf16.mxu0 0
      %1716 = vmatpush1.bf16.msra.mxu0 0
      %1717 = vmatprep.subr.bf16.mxu0 0
      %1718 = vmatpush1.bf16.msra.mxu0 0
      %1719 = vmatprep.subr.bf16.mxu0 0
      %1720 = vmatpush1.bf16.msra.mxu0 0
      %1721 = vmatprep.subr.bf16.mxu0 0
      %1722 = vmatpush1.bf16.msra.mxu0 0
      %1723 = vmatprep.subr.bf16.mxu0 0
      %1724 = vmatpush1.bf16.msra.mxu0 0
      %1725 = vmatprep.subr.bf16.mxu0 0
      %1726 = vmatpush1.bf16.msra.mxu0 0
      %1727 = vmatprep.subr.bf16.mxu0 0
      %1728 = vmatpush1.bf16.msra.mxu0 0
      %1729 = vmatprep.mubr.bf16.mxu0 0
      %1730 = vmatmul.mubr.bf16.gmra.mrb[0].mxu0 %v1639
      %v1731 = vpop.f32.mrb[0].mxu0
      %v1732 = vadd.f32 0.0, %v1731
      %v1733 = vpop.f32.mrb[0].mxu0
      %v1734 = vadd.f32 0.0, %v1733
      %v1735 = vpop.f32.mrb[0].mxu0
      %v1736 = vadd.f32 0.0, %v1735
      %v1737 = vpop.f32.mrb[0].mxu0
      %v1738 = vadd.f32 0.0, %v1737
      %1739 = vmatprep.mubr.bf16.mxu0 0
      %1740 = vmatmul.mubr.bf16.gmra.mrb[0].mxu0 %v1642
      %v1741 = vpop.f32.mrb[0].mxu0
      %v1742 = vadd.f32 0.0, %v1741
      %v1743 = vpop.f32.mrb[0].mxu0
      %v1744 = vadd.f32 0.0, %v1743
      %v1745 = vpop.f32.mrb[0].mxu0
      %v1746 = vadd.f32 0.0, %v1745
      %v1747 = vpop.f32.mrb[0].mxu0
      %v1748 = vadd.f32 0.0, %v1747
      %1749 = vdwg.mxu0
      %1750 = vmatprep.subr.bf16.mxu0 %v1578
      %1751 = vmatpush1.bf16.msra.mxu0 %v1577
      %1752 = vmatprep.subr.bf16.mxu0 %v1586
      %1753 = vmatpush1.bf16.msra.mxu0 %v1585
      %1754 = vmatprep.subr.bf16.mxu0 %v1594
      %1755 = vmatpush1.bf16.msra.mxu0 %v1593
      %1756 = vmatprep.subr.bf16.mxu0 %v1602
      %1757 = vmatpush1.bf16.msra.mxu0 %v1601
      %1758 = vmatprep.subr.bf16.mxu0 0
      %1759 = vmatpush1.bf16.msra.mxu0 0
      %1760 = vmatprep.subr.bf16.mxu0 0
      %1761 = vmatpush1.bf16.msra.mxu0 0
      %1762 = vmatprep.subr.bf16.mxu0 0
      %1763 = vmatpush1.bf16.msra.mxu0 0
      %1764 = vmatprep.subr.bf16.mxu0 0
      %1765 = vmatpush1.bf16.msra.mxu0 0
      %1766 = vmatprep.subr.bf16.mxu0 0
      %1767 = vmatpush1.bf16.msra.mxu0 0
      %1768 = vmatprep.subr.bf16.mxu0 0
      %1769 = vmatpush1.bf16.msra.mxu0 0
      %1770 = vmatprep.subr.bf16.mxu0 0
      %1771 = vmatpush1.bf16.msra.mxu0 0
      %1772 = vmatprep.subr.bf16.mxu0 0
      %1773 = vmatpush1.bf16.msra.mxu0 0
      %1774 = vmatprep.subr.bf16.mxu0 0
      %1775 = vmatpush1.bf16.msra.mxu0 0
      %1776 = vmatprep.subr.bf16.mxu0 0
      %1777 = vmatpush1.bf16.msra.mxu0 0
      %1778 = vmatprep.subr.bf16.mxu0 0
      %1779 = vmatpush1.bf16.msra.mxu0 0
      %1780 = vmatprep.subr.bf16.mxu0 0
      %1781 = vmatpush1.bf16.msra.mxu0 0
      %1782 = vmatprep.mubr.bf16.mxu0 0
      %1783 = vmatmul.mubr.bf16.gmra.mrb[0].mxu0 %v1639
      %v1784 = vpop.f32.mrb[0].mxu0
      %v1785 = vadd.f32 0.0, %v1784
      %v1786 = vpop.f32.mrb[0].mxu0
      %v1787 = vadd.f32 0.0, %v1786
      %v1788 = vpop.f32.mrb[0].mxu0
      %v1789 = vadd.f32 0.0, %v1788
      %v1790 = vpop.f32.mrb[0].mxu0
      %v1791 = vadd.f32 0.0, %v1790
      %1792 = vmatprep.mubr.bf16.mxu0 0
      %1793 = vmatmul.mubr.bf16.gmra.mrb[0].mxu0 %v1642
      %v1794 = vpop.f32.mrb[0].mxu0
      %v1795 = vadd.f32 0.0, %v1794
      %v1796 = vpop.f32.mrb[0].mxu0
      %v1797 = vadd.f32 0.0, %v1796
      %v1798 = vpop.f32.mrb[0].mxu0
      %v1799 = vadd.f32 0.0, %v1798
      %v1800 = vpop.f32.mrb[0].mxu0
      %v1801 = vadd.f32 0.0, %v1800
      %1802 = vdwg.mxu0
      %1803 = vmatprep.subr.bf16.mxu0 %v1580
      %1804 = vmatpush1.bf16.msra.mxu0 %v1579
      %1805 = vmatprep.subr.bf16.mxu0 %v1588
      %1806 = vmatpush1.bf16.msra.mxu0 %v1587
      %1807 = vmatprep.subr.bf16.mxu0 %v1596
      %1808 = vmatpush1.bf16.msra.mxu0 %v1595
      %1809 = vmatprep.subr.bf16.mxu0 %v1604
      %1810 = vmatpush1.bf16.msra.mxu0 %v1603
      %1811 = vmatprep.subr.bf16.mxu0 0
      %1812 = vmatpush1.bf16.msra.mxu0 0
      %1813 = vmatprep.subr.bf16.mxu0 0
      %1814 = vmatpush1.bf16.msra.mxu0 0
      %1815 = vmatprep.subr.bf16.mxu0 0
      %1816 = vmatpush1.bf16.msra.mxu0 0
      %1817 = vmatprep.subr.bf16.mxu0 0
      %1818 = vmatpush1.bf16.msra.mxu0 0
      %1819 = vmatprep.subr.bf16.mxu0 0
      %1820 = vmatpush1.bf16.msra.mxu0 0
      %1821 = vmatprep.subr.bf16.mxu0 0
      %1822 = vmatpush1.bf16.msra.mxu0 0
      %1823 = vmatprep.subr.bf16.mxu0 0
      %1824 = vmatpush1.bf16.msra.mxu0 0
      %1825 = vmatprep.subr.bf16.mxu0 0
      %1826 = vmatpush1.bf16.msra.mxu0 0
      %1827 = vmatprep.subr.bf16.mxu0 0
      %1828 = vmatpush1.bf16.msra.mxu0 0
      %1829 = vmatprep.subr.bf16.mxu0 0
      %1830 = vmatpush1.bf16.msra.mxu0 0
      %1831 = vmatprep.subr.bf16.mxu0 0
      %1832 = vmatpush1.bf16.msra.mxu0 0
      %1833 = vmatprep.subr.bf16.mxu0 0
      %1834 = vmatpush1.bf16.msra.mxu0 0
      %1835 = vmatprep.mubr.bf16.mxu0 0
      %1836 = vmatmul.mubr.bf16.gmra.mrb[0].mxu0 %v1639
      %v1837 = vpop.f32.mrb[0].mxu0
      %v1838 = vadd.f32 0.0, %v1837
      %v1839 = vpop.f32.mrb[0].mxu0
      %v1840 = vadd.f32 0.0, %v1839
      %v1841 = vpop.f32.mrb[0].mxu0
      %v1842 = vadd.f32 0.0, %v1841
      %v1843 = vpop.f32.mrb[0].mxu0
      %v1844 = vadd.f32 0.0, %v1843
      %1845 = vmatprep.mubr.bf16.mxu0 0
      %1846 = vmatmul.mubr.bf16.gmra.mrb[0].mxu0 %v1642
      %v1847 = vpop.f32.mrb[0].mxu0
      %v1848 = vadd.f32 0.0, %v1847
      %v1849 = vpop.f32.mrb[0].mxu0
      %v1850 = vadd.f32 0.0, %v1849
      %v1851 = vpop.f32.mrb[0].mxu0
      %v1852 = vadd.f32 0.0, %v1851
      %v1853 = vpop.f32.mrb[0].mxu0
      %v1854 = vadd.f32 0.0, %v1853
      %1855 = vdwg.mxu0
      %v1920 = vunpack.c.l.b16 %v1367
      %v1921 = vunpack.c.h.b16 %v1367
      %v1922 = vunpack.c.l.b16 %v1368
      %v1923 = vunpack.c.h.b16 %v1368
      %v1924 = vunpack.c.l.b16 %v1369
      %v1925 = vunpack.c.h.b16 %v1369
      %v1926 = vunpack.c.l.b16 %v1370
      %v1927 = vunpack.c.h.b16 %v1370
      %v1928 = vunpack.c.l.b16 %v1371
      %v1929 = vunpack.c.h.b16 %v1371
      %v1930 = vunpack.c.l.b16 %v1372
      %v1931 = vunpack.c.h.b16 %v1372
      %v1932 = vunpack.c.l.b16 %v1373
      %v1933 = vunpack.c.h.b16 %v1373
      %v1934 = vunpack.c.l.b16 %v1374
      %v1935 = vunpack.c.h.b16 %v1374
      %v1936 = vunpack.c.l.b16 %v1375
      %v1937 = vunpack.c.h.b16 %v1375
      %v1938 = vunpack.c.l.b16 %v1376
      %v1939 = vunpack.c.h.b16 %v1376
      %v1940 = vunpack.c.l.b16 %v1377
      %v1941 = vunpack.c.h.b16 %v1377
      %v1942 = vunpack.c.l.b16 %v1378
      %v1943 = vunpack.c.h.b16 %v1378
      %v1944 = vunpack.c.l.b16 %v1379
      %v1945 = vunpack.c.h.b16 %v1379
      %v1946 = vunpack.c.l.b16 %v1380
      %v1947 = vunpack.c.h.b16 %v1380
      %v1948 = vunpack.c.l.b16 %v1381
      %v1949 = vunpack.c.h.b16 %v1381
      %v1950 = vunpack.c.l.b16 %v1382
      %v1951 = vunpack.c.h.b16 %v1382
      %v1952 = vunpack.c.l.b16 %v1383
      %v1953 = vunpack.c.h.b16 %v1383
      %v1954 = vunpack.c.l.b16 %v1384
      %v1955 = vunpack.c.h.b16 %v1384
      %v1956 = vunpack.c.l.b16 %v1385
      %v1957 = vunpack.c.h.b16 %v1385
      %v1958 = vunpack.c.l.b16 %v1386
      %v1959 = vunpack.c.h.b16 %v1386
      %v1960 = vunpack.c.l.b16 %v1387
      %v1961 = vunpack.c.h.b16 %v1387
      %v1962 = vunpack.c.l.b16 %v1388
      %v1963 = vunpack.c.h.b16 %v1388
      %v1964 = vunpack.c.l.b16 %v1389
      %v1965 = vunpack.c.h.b16 %v1389
      %v1966 = vunpack.c.l.b16 %v1390
      %v1967 = vunpack.c.h.b16 %v1390
      %v1968 = vunpack.c.l.b16 %v1391
      %v1969 = vunpack.c.h.b16 %v1391
      %v1970 = vunpack.c.l.b16 %v1392
      %v1971 = vunpack.c.h.b16 %v1392
      %v1972 = vunpack.c.l.b16 %v1393
      %v1973 = vunpack.c.h.b16 %v1393
      %v1974 = vunpack.c.l.b16 %v1394
      %v1975 = vunpack.c.h.b16 %v1394
      %v1976 = vunpack.c.l.b16 %v1395
      %v1977 = vunpack.c.h.b16 %v1395
      %v1978 = vunpack.c.l.b16 %v1396
      %v1979 = vunpack.c.h.b16 %v1396
      %v1980 = vunpack.c.l.b16 %v1397
      %v1981 = vunpack.c.h.b16 %v1397
      %v1982 = vunpack.c.l.b16 %v1398
      %v1983 = vunpack.c.h.b16 %v1398
      %v1984 = vunpack.c.l.b16 %v1399
      %v1985 = vunpack.c.h.b16 %v1399
      %v1986 = vunpack.c.l.b16 %v1400
      %v1987 = vunpack.c.h.b16 %v1400
      %v1988 = vunpack.c.l.b16 %v1401
      %v1989 = vunpack.c.h.b16 %v1401
      %v1990 = vunpack.c.l.b16 %v1402
      %v1991 = vunpack.c.h.b16 %v1402
      %v1992 = vunpack.c.l.b16 %v1403
      %v1993 = vunpack.c.h.b16 %v1403
      %v1994 = vunpack.c.l.b16 %v1404
      %v1995 = vunpack.c.h.b16 %v1404
      %v1996 = vunpack.c.l.b16 %v1405
      %v1997 = vunpack.c.h.b16 %v1405
      %v1998 = vunpack.c.l.b16 %v1406
      %v1999 = vunpack.c.h.b16 %v1406
      %v2000 = vunpack.c.l.b16 %v1407
      %v2001 = vunpack.c.h.b16 %v1407
      %v2002 = vunpack.c.l.b16 %v1408
      %v2003 = vunpack.c.h.b16 %v1408
      %v2004 = vunpack.c.l.b16 %v1409
      %v2005 = vunpack.c.h.b16 %v1409
      %v2006 = vunpack.c.l.b16 %v1410
      %v2007 = vunpack.c.h.b16 %v1410
      %v2008 = vunpack.c.l.b16 %v1411
      %v2009 = vunpack.c.h.b16 %v1411
      %v2010 = vunpack.c.l.b16 %v1412
      %v2011 = vunpack.c.h.b16 %v1412
      %v2012 = vunpack.c.l.b16 %v1413
      %v2013 = vunpack.c.h.b16 %v1413
      %v2014 = vunpack.c.l.b16 %v1414
      %v2015 = vunpack.c.h.b16 %v1414
      %v2016 = vunpack.c.l.b16 %v1415
      %v2017 = vunpack.c.h.b16 %v1415
      %v2018 = vunpack.c.l.b16 %v1416
      %v2019 = vunpack.c.h.b16 %v1416
      %v2020 = vunpack.c.l.b16 %v1417
      %v2021 = vunpack.c.h.b16 %v1417
      %v2022 = vunpack.c.l.b16 %v1418
      %v2023 = vunpack.c.h.b16 %v1418
      %v2024 = vunpack.c.l.b16 %v1419
      %v2025 = vunpack.c.h.b16 %v1419
      %v2026 = vunpack.c.l.b16 %v1420
      %v2027 = vunpack.c.h.b16 %v1420
      %v2028 = vunpack.c.l.b16 %v1421
      %v2029 = vunpack.c.h.b16 %v1421
      %v2030 = vunpack.c.l.b16 %v1422
      %v2031 = vunpack.c.h.b16 %v1422
      %v2032 = vunpack.c.l.b16 %v1423
      %v2033 = vunpack.c.h.b16 %v1423
      %v2034 = vunpack.c.l.b16 %v1424
      %v2035 = vunpack.c.h.b16 %v1424
      %v2036 = vunpack.c.l.b16 %v1425
      %v2037 = vunpack.c.h.b16 %v1425
      %v2038 = vunpack.c.l.b16 %v1426
      %v2039 = vunpack.c.h.b16 %v1426
      %v2040 = vunpack.c.l.b16 %v1427
      %v2041 = vunpack.c.h.b16 %v1427
      %v2042 = vunpack.c.l.b16 %v1428
      %v2043 = vunpack.c.h.b16 %v1428
      %v2044 = vunpack.c.l.b16 %v1429
      %v2045 = vunpack.c.h.b16 %v1429
      %v2046 = vunpack.c.l.b16 %v1430
      %v2047 = vunpack.c.h.b16 %v1430
      %v2048 = vpack.c.b16 %v1928, %v1920
      %v2049 = vpack.c.b16 %v1929, %v1921
      %v2050 = vpack.c.b16 %v1930, %v1922
      %v2051 = vpack.c.b16 %v1931, %v1923
      %v2052 = vpack.c.b16 %v1932, %v1924
      %v2053 = vpack.c.b16 %v1933, %v1925
      %v2054 = vpack.c.b16 %v1934, %v1926
      %v2055 = vpack.c.b16 %v1935, %v1927
      %v2056 = vpack.c.b16 %v1944, %v1936
      %v2057 = vpack.c.b16 %v1945, %v1937
      %v2058 = vpack.c.b16 %v1946, %v1938
      %v2059 = vpack.c.b16 %v1947, %v1939
      %v2060 = vpack.c.b16 %v1948, %v1940
      %v2061 = vpack.c.b16 %v1949, %v1941
      %v2062 = vpack.c.b16 %v1950, %v1942
      %v2063 = vpack.c.b16 %v1951, %v1943
      %v2064 = vpack.c.b16 %v1960, %v1952
      %v2065 = vpack.c.b16 %v1961, %v1953
      %v2066 = vpack.c.b16 %v1962, %v1954
      %v2067 = vpack.c.b16 %v1963, %v1955
      %v2068 = vpack.c.b16 %v1964, %v1956
      %v2069 = vpack.c.b16 %v1965, %v1957
      %v2070 = vpack.c.b16 %v1966, %v1958
      %v2071 = vpack.c.b16 %v1967, %v1959
      %v2072 = vpack.c.b16 %v1976, %v1968
      %v2073 = vpack.c.b16 %v1977, %v1969
      %v2074 = vpack.c.b16 %v1978, %v1970
      %v2075 = vpack.c.b16 %v1979, %v1971
      %v2076 = vpack.c.b16 %v1980, %v1972
      %v2077 = vpack.c.b16 %v1981, %v1973
      %v2078 = vpack.c.b16 %v1982, %v1974
      %v2079 = vpack.c.b16 %v1983, %v1975
      %v2080 = vpack.c.b16 %v1992, %v1984
      %v2081 = vpack.c.b16 %v1993, %v1985
      %v2082 = vpack.c.b16 %v1994, %v1986
      %v2083 = vpack.c.b16 %v1995, %v1987
      %v2084 = vpack.c.b16 %v1996, %v1988
      %v2085 = vpack.c.b16 %v1997, %v1989
      %v2086 = vpack.c.b16 %v1998, %v1990
      %v2087 = vpack.c.b16 %v1999, %v1991
      %v2088 = vpack.c.b16 %v2008, %v2000
      %v2089 = vpack.c.b16 %v2009, %v2001
      %v2090 = vpack.c.b16 %v2010, %v2002
      %v2091 = vpack.c.b16 %v2011, %v2003
      %v2092 = vpack.c.b16 %v2012, %v2004
      %v2093 = vpack.c.b16 %v2013, %v2005
      %v2094 = vpack.c.b16 %v2014, %v2006
      %v2095 = vpack.c.b16 %v2015, %v2007
      %v2096 = vpack.c.b16 %v2024, %v2016
      %v2097 = vpack.c.b16 %v2025, %v2017
      %v2098 = vpack.c.b16 %v2026, %v2018
      %v2099 = vpack.c.b16 %v2027, %v2019
      %v2100 = vpack.c.b16 %v2028, %v2020
      %v2101 = vpack.c.b16 %v2029, %v2021
      %v2102 = vpack.c.b16 %v2030, %v2022
      %v2103 = vpack.c.b16 %v2031, %v2023
      %v2104 = vpack.c.b16 %v2040, %v2032
      %v2105 = vpack.c.b16 %v2041, %v2033
      %v2106 = vpack.c.b16 %v2042, %v2034
      %v2107 = vpack.c.b16 %v2043, %v2035
      %v2108 = vpack.c.b16 %v2044, %v2036
      %v2109 = vpack.c.b16 %v2045, %v2037
      %v2110 = vpack.c.b16 %v2046, %v2038
      %v2111 = vpack.c.b16 %v2047, %v2039
      %2176 = vmatprep.subr.bf16.mxu0 %v2049
      %2177 = vmatpush1.bf16.msra.mxu0 %v2048
      %2178 = vmatprep.subr.bf16.mxu0 %v2057
      %2179 = vmatpush1.bf16.msra.mxu0 %v2056
      %2180 = vmatprep.subr.bf16.mxu0 %v2065
      %2181 = vmatpush1.bf16.msra.mxu0 %v2064
      %2182 = vmatprep.subr.bf16.mxu0 %v2073
      %2183 = vmatpush1.bf16.msra.mxu0 %v2072
      %2184 = vmatprep.subr.bf16.mxu0 %v2081
      %2185 = vmatpush1.bf16.msra.mxu0 %v2080
      %2186 = vmatprep.subr.bf16.mxu0 %v2089
      %2187 = vmatpush1.bf16.msra.mxu0 %v2088
      %2188 = vmatprep.subr.bf16.mxu0 %v2097
      %2189 = vmatpush1.bf16.msra.mxu0 %v2096
      %2190 = vmatprep.subr.bf16.mxu0 %v2105
      %2191 = vmatpush1.bf16.msra.mxu0 %v2104
      %2192 = vmatprep.subr.bf16.mxu0 0
      %2193 = vmatpush1.bf16.msra.mxu0 0
      %2194 = vmatprep.subr.bf16.mxu0 0
      %2195 = vmatpush1.bf16.msra.mxu0 0
      %2196 = vmatprep.subr.bf16.mxu0 0
      %2197 = vmatpush1.bf16.msra.mxu0 0
      %2198 = vmatprep.subr.bf16.mxu0 0
      %2199 = vmatpush1.bf16.msra.mxu0 0
      %2200 = vmatprep.subr.bf16.mxu0 0
      %2201 = vmatpush1.bf16.msra.mxu0 0
      %2202 = vmatprep.subr.bf16.mxu0 0
      %2203 = vmatpush1.bf16.msra.mxu0 0
      %2204 = vmatprep.subr.bf16.mxu0 0
      %2205 = vmatpush1.bf16.msra.mxu0 0
      %2206 = vmatprep.subr.bf16.mxu0 0
      %2207 = vmatpush1.bf16.msra.mxu0 0
      %2208 = vmatprep.mubr.bf16.mxu0 0
      %2209 = vmatmul.mubr.bf16.gmra.mrb[0].mxu0 %v1365
      %v2210 = vpop.f32.mrb[0].mxu0
      %v2211 = vadd.f32 %v1679, %v2210
      %v2212 = vpop.f32.mrb[0].mxu0
      %v2213 = vadd.f32 %v1681, %v2212
      %v2214 = vpop.f32.mrb[0].mxu0
      %v2215 = vadd.f32 %v1683, %v2214
      %v2216 = vpop.f32.mrb[0].mxu0
      %v2217 = vadd.f32 %v1685, %v2216
      %2218 = vmatprep.mubr.bf16.mxu0 0
      %2219 = vmatmul.mubr.bf16.gmra.mrb[0].mxu0 %v1366
      %v2220 = vpop.f32.mrb[0].mxu0
      %v2221 = vadd.f32 %v1689, %v2220
      %v2222 = vpop.f32.mrb[0].mxu0
      %v2223 = vadd.f32 %v1691, %v2222
      %v2224 = vpop.f32.mrb[0].mxu0
      %v2225 = vadd.f32 %v1693, %v2224
      %v2226 = vpop.f32.mrb[0].mxu0
      %v2227 = vadd.f32 %v1695, %v2226
      %2228 = vdwg.mxu0
      %2229 = vmatprep.subr.bf16.mxu0 %v2051
      %2230 = vmatpush1.bf16.msra.mxu0 %v2050
      %2231 = vmatprep.subr.bf16.mxu0 %v2059
      %2232 = vmatpush1.bf16.msra.mxu0 %v2058
      %2233 = vmatprep.subr.bf16.mxu0 %v2067
      %2234 = vmatpush1.bf16.msra.mxu0 %v2066
      %2235 = vmatprep.subr.bf16.mxu0 %v2075
      %2236 = vmatpush1.bf16.msra.mxu0 %v2074
      %2237 = vmatprep.subr.bf16.mxu0 %v2083
      %2238 = vmatpush1.bf16.msra.mxu0 %v2082
      %2239 = vmatprep.subr.bf16.mxu0 %v2091
      %2240 = vmatpush1.bf16.msra.mxu0 %v2090
      %2241 = vmatprep.subr.bf16.mxu0 %v2099
      %2242 = vmatpush1.bf16.msra.mxu0 %v2098
      %2243 = vmatprep.subr.bf16.mxu0 %v2107
      %2244 = vmatpush1.bf16.msra.mxu0 %v2106
      %2245 = vmatprep.subr.bf16.mxu0 0
      %2246 = vmatpush1.bf16.msra.mxu0 0
      %2247 = vmatprep.subr.bf16.mxu0 0
      %2248 = vmatpush1.bf16.msra.mxu0 0
      %2249 = vmatprep.subr.bf16.mxu0 0
      %2250 = vmatpush1.bf16.msra.mxu0 0
      %2251 = vmatprep.subr.bf16.mxu0 0
      %2252 = vmatpush1.bf16.msra.mxu0 0
      %2253 = vmatprep.subr.bf16.mxu0 0
      %2254 = vmatpush1.bf16.msra.mxu0 0
      %2255 = vmatprep.subr.bf16.mxu0 0
      %2256 = vmatpush1.bf16.msra.mxu0 0
      %2257 = vmatprep.subr.bf16.mxu0 0
      %2258 = vmatpush1.bf16.msra.mxu0 0
      %2259 = vmatprep.subr.bf16.mxu0 0
      %2260 = vmatpush1.bf16.msra.mxu0 0
      %2261 = vmatprep.mubr.bf16.mxu0 0
      %2262 = vmatmul.mubr.bf16.gmra.mrb[0].mxu0 %v1365
      %v2263 = vpop.f32.mrb[0].mxu0
      %v2264 = vadd.f32 %v1732, %v2263
      %v2265 = vpop.f32.mrb[0].mxu0
      %v2266 = vadd.f32 %v1734, %v2265
      %v2267 = vpop.f32.mrb[0].mxu0
      %v2268 = vadd.f32 %v1736, %v2267
      %v2269 = vpop.f32.mrb[0].mxu0
      %v2270 = vadd.f32 %v1738, %v2269
      %2271 = vmatprep.mubr.bf16.mxu0 0
      %2272 = vmatmul.mubr.bf16.gmra.mrb[0].mxu0 %v1366
      %v2273 = vpop.f32.mrb[0].mxu0
      %v2274 = vadd.f32 %v1742, %v2273
      %v2275 = vpop.f32.mrb[0].mxu0
      %v2276 = vadd.f32 %v1744, %v2275
      %v2277 = vpop.f32.mrb[0].mxu0
      %v2278 = vadd.f32 %v1746, %v2277
      %v2279 = vpop.f32.mrb[0].mxu0
      %v2280 = vadd.f32 %v1748, %v2279
      %2281 = vdwg.mxu0
      %2282 = vmatprep.subr.bf16.mxu0 %v2053
      %2283 = vmatpush1.bf16.msra.mxu0 %v2052
      %2284 = vmatprep.subr.bf16.mxu0 %v2061
      %2285 = vmatpush1.bf16.msra.mxu0 %v2060
      %2286 = vmatprep.subr.bf16.mxu0 %v2069
      %2287 = vmatpush1.bf16.msra.mxu0 %v2068
      %2288 = vmatprep.subr.bf16.mxu0 %v2077
      %2289 = vmatpush1.bf16.msra.mxu0 %v2076
      %2290 = vmatprep.subr.bf16.mxu0 %v2085
      %2291 = vmatpush1.bf16.msra.mxu0 %v2084
      %2292 = vmatprep.subr.bf16.mxu0 %v2093
      %2293 = vmatpush1.bf16.msra.mxu0 %v2092
      %2294 = vmatprep.subr.bf16.mxu0 %v2101
      %2295 = vmatpush1.bf16.msra.mxu0 %v2100
      %2296 = vmatprep.subr.bf16.mxu0 %v2109
      %2297 = vmatpush1.bf16.msra.mxu0 %v2108
      %2298 = vmatprep.subr.bf16.mxu0 0
      %2299 = vmatpush1.bf16.msra.mxu0 0
      %2300 = vmatprep.subr.bf16.mxu0 0
      %2301 = vmatpush1.bf16.msra.mxu0 0
      %2302 = vmatprep.subr.bf16.mxu0 0
      %2303 = vmatpush1.bf16.msra.mxu0 0
      %2304 = vmatprep.subr.bf16.mxu0 0
      %2305 = vmatpush1.bf16.msra.mxu0 0
      %2306 = vmatprep.subr.bf16.mxu0 0
      %2307 = vmatpush1.bf16.msra.mxu0 0
      %2308 = vmatprep.subr.bf16.mxu0 0
      %2309 = vmatpush1.bf16.msra.mxu0 0
      %2310 = vmatprep.subr.bf16.mxu0 0
      %2311 = vmatpush1.bf16.msra.mxu0 0
      %2312 = vmatprep.subr.bf16.mxu0 0
      %2313 = vmatpush1.bf16.msra.mxu0 0
      %2314 = vmatprep.mubr.bf16.mxu0 0
      %2315 = vmatmul.mubr.bf16.gmra.mrb[0].mxu0 %v1365
      %v2316 = vpop.f32.mrb[0].mxu0
      %v2317 = vadd.f32 %v1785, %v2316
      %v2318 = vpop.f32.mrb[0].mxu0
      %v2319 = vadd.f32 %v1787, %v2318
      %v2320 = vpop.f32.mrb[0].mxu0
      %v2321 = vadd.f32 %v1789, %v2320
      %v2322 = vpop.f32.mrb[0].mxu0
      %v2323 = vadd.f32 %v1791, %v2322
      %2324 = vmatprep.mubr.bf16.mxu0 0
      %2325 = vmatmul.mubr.bf16.gmra.mrb[0].mxu0 %v1366
      %v2326 = vpop.f32.mrb[0].mxu0
      %v2327 = vadd.f32 %v1795, %v2326
      %v2328 = vpop.f32.mrb[0].mxu0
      %v2329 = vadd.f32 %v1797, %v2328
      %v2330 = vpop.f32.mrb[0].mxu0
      %v2331 = vadd.f32 %v1799, %v2330
      %v2332 = vpop.f32.mrb[0].mxu0
      %v2333 = vadd.f32 %v1801, %v2332
      %2334 = vdwg.mxu0
      %2335 = vmatprep.subr.bf16.mxu0 %v2055
      %2336 = vmatpush1.bf16.msra.mxu0 %v2054
      %2337 = vmatprep.subr.bf16.mxu0 %v2063
      %2338 = vmatpush1.bf16.msra.mxu0 %v2062
      %2339 = vmatprep.subr.bf16.mxu0 %v2071
      %2340 = vmatpush1.bf16.msra.mxu0 %v2070
      %2341 = vmatprep.subr.bf16.mxu0 %v2079
      %2342 = vmatpush1.bf16.msra.mxu0 %v2078
      %2343 = vmatprep.subr.bf16.mxu0 %v2087
      %2344 = vmatpush1.bf16.msra.mxu0 %v2086
      %2345 = vmatprep.subr.bf16.mxu0 %v2095
      %2346 = vmatpush1.bf16.msra.mxu0 %v2094
      %2347 = vmatprep.subr.bf16.mxu0 %v2103
      %2348 = vmatpush1.bf16.msra.mxu0 %v2102
      %2349 = vmatprep.subr.bf16.mxu0 %v2111
      %2350 = vmatpush1.bf16.msra.mxu0 %v2110
      %2351 = vmatprep.subr.bf16.mxu0 0
      %2352 = vmatpush1.bf16.msra.mxu0 0
      %2353 = vmatprep.subr.bf16.mxu0 0
      %2354 = vmatpush1.bf16.msra.mxu0 0
      %2355 = vmatprep.subr.bf16.mxu0 0
      %2356 = vmatpush1.bf16.msra.mxu0 0
      %2357 = vmatprep.subr.bf16.mxu0 0
      %2358 = vmatpush1.bf16.msra.mxu0 0
      %2359 = vmatprep.subr.bf16.mxu0 0
      %2360 = vmatpush1.bf16.msra.mxu0 0
      %2361 = vmatprep.subr.bf16.mxu0 0
      %2362 = vmatpush1.bf16.msra.mxu0 0
      %2363 = vmatprep.subr.bf16.mxu0 0
      %2364 = vmatpush1.bf16.msra.mxu0 0
      %2365 = vmatprep.subr.bf16.mxu0 0
      %2366 = vmatpush1.bf16.msra.mxu0 0
      %2367 = vmatprep.mubr.bf16.mxu0 0
      %2368 = vmatmul.mubr.bf16.gmra.mrb[0].mxu0 %v1365
      %v2369 = vpop.f32.mrb[0].mxu0
      %v2370 = vadd.f32 %v1838, %v2369
      %v2371 = vpop.f32.mrb[0].mxu0
      %v2372 = vadd.f32 %v1840, %v2371
      %v2373 = vpop.f32.mrb[0].mxu0
      %v2374 = vadd.f32 %v1842, %v2373
      %v2375 = vpop.f32.mrb[0].mxu0
      %v2376 = vadd.f32 %v1844, %v2375
      %2377 = vmatprep.mubr.bf16.mxu0 0
      %2378 = vmatmul.mubr.bf16.gmra.mrb[0].mxu0 %v1366
      %v2379 = vpop.f32.mrb[0].mxu0
      %v2380 = vadd.f32 %v1848, %v2379
      %v2381 = vpop.f32.mrb[0].mxu0
      %v2382 = vadd.f32 %v1850, %v2381
      %v2383 = vpop.f32.mrb[0].mxu0
      %v2384 = vadd.f32 %v1852, %v2383
      %v2385 = vpop.f32.mrb[0].mxu0
      %v2386 = vadd.f32 %v1854, %v2385
      %2387 = vdwg.mxu0
      %v2388 = vld [vmem:[%s9] sm:$0xff]
      %v2390 = vlaneseq
      %v2391 = vshrl.u32 %v2390, 7
      %v2392 = vsub.s32 0, %v2391
      %v2393 = vrot.slane %v2388, %v2392
      %v2394 = vlaneseq
      %v2395 = vshrl.u32 %v2394, 7
      %v2396 = vsub.s32 1, %v2395
      %v2397 = vrot.slane %v2388, %v2396
      %v2398 = vlaneseq
      %v2399 = vshrl.u32 %v2398, 7
      %v2400 = vsub.s32 2, %v2399
      %v2401 = vrot.slane %v2388, %v2400
      %v2402 = vlaneseq
      %v2403 = vshrl.u32 %v2402, 7
      %v2404 = vsub.s32 3, %v2403
      %v2405 = vrot.slane %v2388, %v2404
      %v2406 = vlaneseq
      %v2407 = vshrl.u32 %v2406, 7
      %v2408 = vsub.s32 4, %v2407
      %v2409 = vrot.slane %v2388, %v2408
      %v2410 = vlaneseq
      %v2411 = vshrl.u32 %v2410, 7
      %v2412 = vsub.s32 5, %v2411
      %v2413 = vrot.slane %v2388, %v2412
      %v2414 = vlaneseq
      %v2415 = vshrl.u32 %v2414, 7
      %v2416 = vsub.s32 6, %v2415
      %v2417 = vrot.slane %v2388, %v2416
      %v2418 = vlaneseq
      %v2419 = vshrl.u32 %v2418, 7
      %v2420 = vsub.s32 7, %v2419
      %v2421 = vrot.slane %v2388, %v2420
      %v2430 = vadd.f32 %v2211, %v2393
      %v2431 = vadd.f32 %v2213, %v2397
      %v2432 = vadd.f32 %v2264, %v2401
      %v2433 = vadd.f32 %v2266, %v2405
      %v2434 = vadd.f32 %v2317, %v2409
      %v2435 = vadd.f32 %v2319, %v2413
      %v2436 = vadd.f32 %v2370, %v2417
      %v2437 = vadd.f32 %v2372, %v2421
      %v2438 = vadd.f32 %v2215, %v2393
      %v2439 = vadd.f32 %v2217, %v2397
      %v2440 = vadd.f32 %v2268, %v2401
      %v2441 = vadd.f32 %v2270, %v2405
      %v2442 = vadd.f32 %v2321, %v2409
      %v2443 = vadd.f32 %v2323, %v2413
      %v2444 = vadd.f32 %v2374, %v2417
      %v2445 = vadd.f32 %v2376, %v2421
      %v2446 = vadd.f32 %v2221, %v2393
      %v2447 = vadd.f32 %v2223, %v2397
      %v2448 = vadd.f32 %v2274, %v2401
      %v2449 = vadd.f32 %v2276, %v2405
      %v2450 = vadd.f32 %v2327, %v2409
      %v2451 = vadd.f32 %v2329, %v2413
      %v2452 = vadd.f32 %v2380, %v2417
      %v2453 = vadd.f32 %v2382, %v2421
      %v2454 = vadd.f32 %v2225, %v2393
      %v2455 = vadd.f32 %v2227, %v2397
      %v2456 = vadd.f32 %v2278, %v2401
      %v2457 = vadd.f32 %v2280, %v2405
      %v2458 = vadd.f32 %v2331, %v2409
      %v2459 = vadd.f32 %v2333, %v2413
      %v2460 = vadd.f32 %v2384, %v2417
      %v2461 = vadd.f32 %v2386, %v2421
      %v2462 = vpack.c.bf16 %v2438, %v2430
      %v2463 = vpack.c.bf16 %v2439, %v2431
      %v2464 = vpack.c.bf16 %v2440, %v2432
      %v2465 = vpack.c.bf16 %v2441, %v2433
      %v2466 = vpack.c.bf16 %v2442, %v2434
      %v2467 = vpack.c.bf16 %v2443, %v2435
      %v2468 = vpack.c.bf16 %v2444, %v2436
      %v2469 = vpack.c.bf16 %v2445, %v2437
      %v2470 = vpack.c.bf16 %v2454, %v2446
      %v2471 = vpack.c.bf16 %v2455, %v2447
      %v2472 = vpack.c.bf16 %v2456, %v2448
      %v2473 = vpack.c.bf16 %v2457, %v2449
      %v2474 = vpack.c.bf16 %v2458, %v2450
      %v2475 = vpack.c.bf16 %v2459, %v2451
      %v2476 = vpack.c.bf16 %v2460, %v2452
      %v2477 = vpack.c.bf16 %v2461, %v2453
      %v2478 = vld [vmem:[%s10] sm:$0xf]
      %v2479 = vld [vmem:[%s10 + $0x4] sm:$0xf]
      %v2480 = vld [vmem:[%s10 + $0x8] sm:$0xf]
      %v2481 = vld [vmem:[%s10 + $0xc] sm:$0xf]
      %v2482 = vld [vmem:[%s10 + $0x10] sm:$0xf]
      %v2483 = vld [vmem:[%s10 + $0x14] sm:$0xf]
      %v2484 = vld [vmem:[%s10 + $0x18] sm:$0xf]
      %v2485 = vld [vmem:[%s10 + $0x1c] sm:$0xf]
      %v2486 = vld [vmem:[%s10 + $0x20] sm:$0xf]
      %v2487 = vld [vmem:[%s10 + $0x24] sm:$0xf]
      %v2488 = vld [vmem:[%s10 + $0x28] sm:$0xf]
      %v2489 = vld [vmem:[%s10 + $0x2c] sm:$0xf]
      %v2490 = vld [vmem:[%s10 + $0x30] sm:$0xf]
      %v2491 = vld [vmem:[%s10 + $0x34] sm:$0xf]
      %v2492 = vld [vmem:[%s10 + $0x38] sm:$0xf]
      %v2493 = vld [vmem:[%s10 + $0x3c] sm:$0xf]
      %v2494 = vld [vmem:[%s10 + $0x40] sm:$0xf]
      %v2495 = vld [vmem:[%s10 + $0x44] sm:$0xf]
      %v2496 = vld [vmem:[%s10 + $0x48] sm:$0xf]
      %v2497 = vld [vmem:[%s10 + $0x4c] sm:$0xf]
      %v2498 = vld [vmem:[%s10 + $0x50] sm:$0xf]
      %v2499 = vld [vmem:[%s10 + $0x54] sm:$0xf]
      %v2500 = vld [vmem:[%s10 + $0x58] sm:$0xf]
      %v2501 = vld [vmem:[%s10 + $0x5c] sm:$0xf]
      %v2502 = vld [vmem:[%s10 + $0x60] sm:$0xf]
      %v2503 = vld [vmem:[%s10 + $0x64] sm:$0xf]
      %v2504 = vld [vmem:[%s10 + $0x68] sm:$0xf]
      %v2505 = vld [vmem:[%s10 + $0x6c] sm:$0xf]
      %v2506 = vld [vmem:[%s10 + $0x70] sm:$0xf]
      %v2507 = vld [vmem:[%s10 + $0x74] sm:$0xf]
      %v2508 = vld [vmem:[%s10 + $0x78] sm:$0xf]
      %v2509 = vld [vmem:[%s10 + $0x7c] sm:$0xf]
      %v2510 = vld [vmem:[%s10 + $0x80] sm:$0xf]
      %v2511 = vld [vmem:[%s10 + $0x84] sm:$0xf]
      %v2512 = vld [vmem:[%s10 + $0x88] sm:$0xf]
      %v2513 = vld [vmem:[%s10 + $0x8c] sm:$0xf]
      %v2514 = vld [vmem:[%s10 + $0x90] sm:$0xf]
      %v2515 = vld [vmem:[%s10 + $0x94] sm:$0xf]
      %v2516 = vld [vmem:[%s10 + $0x98] sm:$0xf]
      %v2517 = vld [vmem:[%s10 + $0x9c] sm:$0xf]
      %v2518 = vld [vmem:[%s10 + $0xa0] sm:$0xf]
      %v2519 = vld [vmem:[%s10 + $0xa4] sm:$0xf]
      %v2520 = vld [vmem:[%s10 + $0xa8] sm:$0xf]
      %v2521 = vld [vmem:[%s10 + $0xac] sm:$0xf]
      %v2522 = vld [vmem:[%s10 + $0xb0] sm:$0xf]
      %v2523 = vld [vmem:[%s10 + $0xb4] sm:$0xf]
      %v2524 = vld [vmem:[%s10 + $0xb8] sm:$0xf]
      %v2525 = vld [vmem:[%s10 + $0xbc] sm:$0xf]
      %v2526 = vld [vmem:[%s10 + $0xc0] sm:$0xf]
      %v2527 = vld [vmem:[%s10 + $0xc4] sm:$0xf]
      %v2528 = vld [vmem:[%s10 + $0xc8] sm:$0xf]
      %v2529 = vld [vmem:[%s10 + $0xcc] sm:$0xf]
      %v2530 = vld [vmem:[%s10 + $0xd0] sm:$0xf]
      %v2531 = vld [vmem:[%s10 + $0xd4] sm:$0xf]
      %v2532 = vld [vmem:[%s10 + $0xd8] sm:$0xf]
      %v2533 = vld [vmem:[%s10 + $0xdc] sm:$0xf]
      %v2534 = vld [vmem:[%s10 + $0xe0] sm:$0xf]
      %v2535 = vld [vmem:[%s10 + $0xe4] sm:$0xf]
      %v2536 = vld [vmem:[%s10 + $0xe8] sm:$0xf]
      %v2537 = vld [vmem:[%s10 + $0xec] sm:$0xf]
      %v2538 = vld [vmem:[%s10 + $0xf0] sm:$0xf]
      %v2539 = vld [vmem:[%s10 + $0xf4] sm:$0xf]
      %v2540 = vld [vmem:[%s10 + $0xf8] sm:$0xf]
      %v2541 = vld [vmem:[%s10 + $0xfc] sm:$0xf]
      %v2542 = vld [vmem:[%s10 + $0x100] sm:$0xf]
      %v2543 = vld [vmem:[%s10 + $0x104] sm:$0xf]
      %v2544 = vld [vmem:[%s10 + $0x108] sm:$0xf]
      %v2545 = vld [vmem:[%s10 + $0x10c] sm:$0xf]
      %v2546 = vld [vmem:[%s10 + $0x110] sm:$0xf]
      %v2547 = vld [vmem:[%s10 + $0x114] sm:$0xf]
      %v2548 = vld [vmem:[%s10 + $0x118] sm:$0xf]
      %v2549 = vld [vmem:[%s10 + $0x11c] sm:$0xf]
      %v2550 = vld [vmem:[%s10 + $0x120] sm:$0xf]
      %v2551 = vld [vmem:[%s10 + $0x124] sm:$0xf]
      %v2552 = vld [vmem:[%s10 + $0x128] sm:$0xf]
      %v2553 = vld [vmem:[%s10 + $0x12c] sm:$0xf]
      %v2554 = vld [vmem:[%s10 + $0x130] sm:$0xf]
      %v2555 = vld [vmem:[%s10 + $0x134] sm:$0xf]
      %v2556 = vld [vmem:[%s10 + $0x138] sm:$0xf]
      %v2557 = vld [vmem:[%s10 + $0x13c] sm:$0xf]
      %v2558 = vld [vmem:[%s10 + $0x140] sm:$0xf]
      %v2559 = vld [vmem:[%s10 + $0x144] sm:$0xf]
      %v2560 = vld [vmem:[%s10 + $0x148] sm:$0xf]
      %v2561 = vld [vmem:[%s10 + $0x14c] sm:$0xf]
      %v2562 = vld [vmem:[%s10 + $0x150] sm:$0xf]
      %v2563 = vld [vmem:[%s10 + $0x154] sm:$0xf]
      %v2564 = vld [vmem:[%s10 + $0x158] sm:$0xf]
      %v2565 = vld [vmem:[%s10 + $0x15c] sm:$0xf]
      %v2566 = vld [vmem:[%s10 + $0x160] sm:$0xf]
      %v2567 = vld [vmem:[%s10 + $0x164] sm:$0xf]
      %v2568 = vld [vmem:[%s10 + $0x168] sm:$0xf]
      %v2569 = vld [vmem:[%s10 + $0x16c] sm:$0xf]
      %v2570 = vld [vmem:[%s10 + $0x170] sm:$0xf]
      %v2571 = vld [vmem:[%s10 + $0x174] sm:$0xf]
      %v2572 = vld [vmem:[%s10 + $0x178] sm:$0xf]
      %v2573 = vld [vmem:[%s10 + $0x17c] sm:$0xf]
      %v2574 = vld [vmem:[%s10 + $0x180] sm:$0xf]
      %v2575 = vld [vmem:[%s10 + $0x184] sm:$0xf]
      %v2576 = vld [vmem:[%s10 + $0x188] sm:$0xf]
      %v2577 = vld [vmem:[%s10 + $0x18c] sm:$0xf]
      %v2578 = vld [vmem:[%s10 + $0x190] sm:$0xf]
      %v2579 = vld [vmem:[%s10 + $0x194] sm:$0xf]
      %v2580 = vld [vmem:[%s10 + $0x198] sm:$0xf]
      %v2581 = vld [vmem:[%s10 + $0x19c] sm:$0xf]
      %v2582 = vld [vmem:[%s10 + $0x1a0] sm:$0xf]
      %v2583 = vld [vmem:[%s10 + $0x1a4] sm:$0xf]
      %v2584 = vld [vmem:[%s10 + $0x1a8] sm:$0xf]
      %v2585 = vld [vmem:[%s10 + $0x1ac] sm:$0xf]
      %v2586 = vld [vmem:[%s10 + $0x1b0] sm:$0xf]
      %v2587 = vld [vmem:[%s10 + $0x1b4] sm:$0xf]
      %v2588 = vld [vmem:[%s10 + $0x1b8] sm:$0xf]
      %v2589 = vld [vmem:[%s10 + $0x1bc] sm:$0xf]
      %v2590 = vld [vmem:[%s10 + $0x1c0] sm:$0xf]
      %v2591 = vld [vmem:[%s10 + $0x1c4] sm:$0xf]
      %v2592 = vld [vmem:[%s10 + $0x1c8] sm:$0xf]
      %v2593 = vld [vmem:[%s10 + $0x1cc] sm:$0xf]
      %v2594 = vld [vmem:[%s10 + $0x1d0] sm:$0xf]
      %v2595 = vld [vmem:[%s10 + $0x1d4] sm:$0xf]
      %v2596 = vld [vmem:[%s10 + $0x1d8] sm:$0xf]
      %v2597 = vld [vmem:[%s10 + $0x1dc] sm:$0xf]
      %v2598 = vld [vmem:[%s10 + $0x1e0] sm:$0xf]
      %v2599 = vld [vmem:[%s10 + $0x1e4] sm:$0xf]
      %v2600 = vld [vmem:[%s10 + $0x1e8] sm:$0xf]
      %v2601 = vld [vmem:[%s10 + $0x1ec] sm:$0xf]
      %v2602 = vld [vmem:[%s10 + $0x1f0] sm:$0xf]
      %v2603 = vld [vmem:[%s10 + $0x1f4] sm:$0xf]
      %v2604 = vld [vmem:[%s10 + $0x1f8] sm:$0xf]
      %v2605 = vld [vmem:[%s10 + $0x1fc] sm:$0xf]
      %v2606 = vld [vmem:[%s529] sm:$0xf]
      %v2607 = vld [vmem:[%s529 + $0x4] sm:$0xf]
      %v2608 = vld [vmem:[%s529 + $0x8] sm:$0xf]
      %v2609 = vld [vmem:[%s529 + $0xc] sm:$0xf]
      %v2610 = vld [vmem:[%s11] sm:$0xf]
      %v2611 = vld [vmem:[%s11 + $0x4] sm:$0xf]
      %v2612 = vld [vmem:[%s11 + $0x8] sm:$0xf]
      %v2613 = vld [vmem:[%s11 + $0xc] sm:$0xf]
      %v2614 = vld [vmem:[%s11 + $0x10] sm:$0xf]
      %v2615 = vld [vmem:[%s11 + $0x14] sm:$0xf]
      %v2616 = vld [vmem:[%s11 + $0x18] sm:$0xf]
      %v2617 = vld [vmem:[%s11 + $0x1c] sm:$0xf]
      %v2618 = vld [vmem:[%s11 + $0x20] sm:$0xf]
      %v2619 = vld [vmem:[%s11 + $0x24] sm:$0xf]
      %v2620 = vld [vmem:[%s11 + $0x28] sm:$0xf]
      %v2621 = vld [vmem:[%s11 + $0x2c] sm:$0xf]
      %v2622 = vld [vmem:[%s11 + $0x30] sm:$0xf]
      %v2623 = vld [vmem:[%s11 + $0x34] sm:$0xf]
      %v2624 = vld [vmem:[%s11 + $0x38] sm:$0xf]
      %v2625 = vld [vmem:[%s11 + $0x3c] sm:$0xf]
      %v2630 = vunpack.c.l.b16 %v2606
      %v2631 = vunpack.c.l.b16 %v2607
      %v2632 = vunpack.c.l.b16 %v2608
      %v2633 = vunpack.c.l.b16 %v2609
      %v2634 = vpack.c.b16 %v2631, %v2630
      %v2635 = vpack.c.b16 %v2633, %v2632
      %v2654 = vunpack.c.l.b16 %v2610
      %v2655 = vunpack.c.l.b16 %v2611
      %v2656 = vunpack.c.l.b16 %v2612
      %v2657 = vunpack.c.l.b16 %v2613
      %v2658 = vunpack.c.l.b16 %v2614
      %v2659 = vunpack.c.l.b16 %v2615
      %v2660 = vunpack.c.l.b16 %v2616
      %v2661 = vunpack.c.l.b16 %v2617
      %v2662 = vunpack.c.l.b16 %v2618
      %v2663 = vunpack.c.l.b16 %v2619
      %v2664 = vunpack.c.l.b16 %v2620
      %v2665 = vunpack.c.l.b16 %v2621
      %v2666 = vunpack.c.l.b16 %v2622
      %v2667 = vunpack.c.l.b16 %v2623
      %v2668 = vunpack.c.l.b16 %v2624
      %v2669 = vunpack.c.l.b16 %v2625
      %v2670 = vpack.c.b16 %v2655, %v2654
      %v2671 = vpack.c.b16 %v2657, %v2656
      %v2672 = vpack.c.b16 %v2659, %v2658
      %v2673 = vpack.c.b16 %v2661, %v2660
      %v2674 = vpack.c.b16 %v2663, %v2662
      %v2675 = vpack.c.b16 %v2665, %v2664
      %v2676 = vpack.c.b16 %v2667, %v2666
      %v2677 = vpack.c.b16 %v2669, %v2668
      %2686 = vmatprep.subr.bf16.mxu0 0
      %2687 = vmatpush1.bf16.msra.mxu0 %v2670
      %2688 = vmatprep.subr.bf16.mxu0 0
      %2689 = vmatpush1.bf16.msra.mxu0 %v2671
      %2690 = vmatprep.subr.bf16.mxu0 0
      %2691 = vmatpush1.bf16.msra.mxu0 %v2672
      %2692 = vmatprep.subr.bf16.mxu0 0
      %2693 = vmatpush1.bf16.msra.mxu0 %v2673
      %2694 = vmatprep.subr.bf16.mxu0 0
      %2695 = vmatpush1.bf16.msra.mxu0 %v2674
      %2696 = vmatprep.subr.bf16.mxu0 0
      %2697 = vmatpush1.bf16.msra.mxu0 %v2675
      %2698 = vmatprep.subr.bf16.mxu0 0
      %2699 = vmatpush1.bf16.msra.mxu0 %v2676
      %2700 = vmatprep.subr.bf16.mxu0 0
      %2701 = vmatpush1.bf16.msra.mxu0 %v2677
      %2702 = vmatprep.subr.bf16.mxu0 0
      %2703 = vmatpush1.bf16.msra.mxu0 0
      %2704 = vmatprep.subr.bf16.mxu0 0
      %2705 = vmatpush1.bf16.msra.mxu0 0
      %2706 = vmatprep.subr.bf16.mxu0 0
      %2707 = vmatpush1.bf16.msra.mxu0 0
      %2708 = vmatprep.subr.bf16.mxu0 0
      %2709 = vmatpush1.bf16.msra.mxu0 0
      %2710 = vmatprep.subr.bf16.mxu0 0
      %2711 = vmatpush1.bf16.msra.mxu0 0
      %2712 = vmatprep.subr.bf16.mxu0 0
      %2713 = vmatpush1.bf16.msra.mxu0 0
      %2714 = vmatprep.subr.bf16.mxu0 0
      %2715 = vmatpush1.bf16.msra.mxu0 0
      %2716 = vmatprep.subr.bf16.mxu0 0
      %2717 = vmatpush1.bf16.msra.mxu0 0
      %2718 = vmatprep.mubr.bf16.mxu0 0
      %2719 = vmatmul.mubr.bf16.gmra.mrb[0].mxu0 %v2634
      %v2720 = vpop.f32.mrb[0].mxu0
      %v2721 = vadd.f32 0.0, %v2720
      %v2722 = vpop.f32.mrb[0].mxu0
      %v2723 = vpop.f32.mrb[0].mxu0
      %v2724 = vadd.f32 0.0, %v2723
      %v2725 = vpop.f32.mrb[0].mxu0
      %2726 = vmatprep.mubr.bf16.mxu0 0
      %2727 = vmatmul.mubr.bf16.gmra.mrb[0].mxu0 %v2635
      %v2728 = vpop.f32.mrb[0].mxu0
      %v2729 = vadd.f32 0.0, %v2728
      %v2730 = vpop.f32.mrb[0].mxu0
      %v2731 = vpop.f32.mrb[0].mxu0
      %v2732 = vadd.f32 0.0, %v2731
      %v2733 = vpop.f32.mrb[0].mxu0
      %2734 = vdwg.mxu0
      %v2863 = vunpack.c.l.b16 %v2478
      %v2864 = vunpack.c.l.b16 %v2479
      %v2865 = vunpack.c.l.b16 %v2480
      %v2866 = vunpack.c.l.b16 %v2481
      %v2867 = vunpack.c.l.b16 %v2482
      %v2868 = vunpack.c.l.b16 %v2483
      %v2869 = vunpack.c.l.b16 %v2484
      %v2870 = vunpack.c.l.b16 %v2485
      %v2871 = vunpack.c.l.b16 %v2486
      %v2872 = vunpack.c.l.b16 %v2487
      %v2873 = vunpack.c.l.b16 %v2488
      %v2874 = vunpack.c.l.b16 %v2489
      %v2875 = vunpack.c.l.b16 %v2490
      %v2876 = vunpack.c.l.b16 %v2491
      %v2877 = vunpack.c.l.b16 %v2492
      %v2878 = vunpack.c.l.b16 %v2493
      %v2879 = vunpack.c.l.b16 %v2494
      %v2880 = vunpack.c.l.b16 %v2495
      %v2881 = vunpack.c.l.b16 %v2496
      %v2882 = vunpack.c.l.b16 %v2497
      %v2883 = vunpack.c.l.b16 %v2498
      %v2884 = vunpack.c.l.b16 %v2499
      %v2885 = vunpack.c.l.b16 %v2500
      %v2886 = vunpack.c.l.b16 %v2501
      %v2887 = vunpack.c.l.b16 %v2502
      %v2888 = vunpack.c.l.b16 %v2503
      %v2889 = vunpack.c.l.b16 %v2504
      %v2890 = vunpack.c.l.b16 %v2505
      %v2891 = vunpack.c.l.b16 %v2506
      %v2892 = vunpack.c.l.b16 %v2507
      %v2893 = vunpack.c.l.b16 %v2508
      %v2894 = vunpack.c.l.b16 %v2509
      %v2895 = vunpack.c.l.b16 %v2510
      %v2896 = vunpack.c.l.b16 %v2511
      %v2897 = vunpack.c.l.b16 %v2512
      %v2898 = vunpack.c.l.b16 %v2513
      %v2899 = vunpack.c.l.b16 %v2514
      %v2900 = vunpack.c.l.b16 %v2515
      %v2901 = vunpack.c.l.b16 %v2516
      %v2902 = vunpack.c.l.b16 %v2517
      %v2903 = vunpack.c.l.b16 %v2518
      %v2904 = vunpack.c.l.b16 %v2519
      %v2905 = vunpack.c.l.b16 %v2520
      %v2906 = vunpack.c.l.b16 %v2521
      %v2907 = vunpack.c.l.b16 %v2522
      %v2908 = vunpack.c.l.b16 %v2523
      %v2909 = vunpack.c.l.b16 %v2524
      %v2910 = vunpack.c.l.b16 %v2525
      %v2911 = vunpack.c.l.b16 %v2526
      %v2912 = vunpack.c.l.b16 %v2527
      %v2913 = vunpack.c.l.b16 %v2528
      %v2914 = vunpack.c.l.b16 %v2529
      %v2915 = vunpack.c.l.b16 %v2530
      %v2916 = vunpack.c.l.b16 %v2531
      %v2917 = vunpack.c.l.b16 %v2532
      %v2918 = vunpack.c.l.b16 %v2533
      %v2919 = vunpack.c.l.b16 %v2534
      %v2920 = vunpack.c.l.b16 %v2535
      %v2921 = vunpack.c.l.b16 %v2536
      %v2922 = vunpack.c.l.b16 %v2537
      %v2923 = vunpack.c.l.b16 %v2538
      %v2924 = vunpack.c.l.b16 %v2539
      %v2925 = vunpack.c.l.b16 %v2540
      %v2926 = vunpack.c.l.b16 %v2541
      %v2927 = vunpack.c.l.b16 %v2542
      %v2928 = vunpack.c.l.b16 %v2543
      %v2929 = vunpack.c.l.b16 %v2544
      %v2930 = vunpack.c.l.b16 %v2545
      %v2931 = vunpack.c.l.b16 %v2546
      %v2932 = vunpack.c.l.b16 %v2547
      %v2933 = vunpack.c.l.b16 %v2548
      %v2934 = vunpack.c.l.b16 %v2549
      %v2935 = vunpack.c.l.b16 %v2550
      %v2936 = vunpack.c.l.b16 %v2551
      %v2937 = vunpack.c.l.b16 %v2552
      %v2938 = vunpack.c.l.b16 %v2553
      %v2939 = vunpack.c.l.b16 %v2554
      %v2940 = vunpack.c.l.b16 %v2555
      %v2941 = vunpack.c.l.b16 %v2556
      %v2942 = vunpack.c.l.b16 %v2557
      %v2943 = vunpack.c.l.b16 %v2558
      %v2944 = vunpack.c.l.b16 %v2559
      %v2945 = vunpack.c.l.b16 %v2560
      %v2946 = vunpack.c.l.b16 %v2561
      %v2947 = vunpack.c.l.b16 %v2562
      %v2948 = vunpack.c.l.b16 %v2563
      %v2949 = vunpack.c.l.b16 %v2564
      %v2950 = vunpack.c.l.b16 %v2565
      %v2951 = vunpack.c.l.b16 %v2566
      %v2952 = vunpack.c.l.b16 %v2567
      %v2953 = vunpack.c.l.b16 %v2568
      %v2954 = vunpack.c.l.b16 %v2569
      %v2955 = vunpack.c.l.b16 %v2570
      %v2956 = vunpack.c.l.b16 %v2571
      %v2957 = vunpack.c.l.b16 %v2572
      %v2958 = vunpack.c.l.b16 %v2573
      %v2959 = vunpack.c.l.b16 %v2574
      %v2960 = vunpack.c.l.b16 %v2575
      %v2961 = vunpack.c.l.b16 %v2576
      %v2962 = vunpack.c.l.b16 %v2577
      %v2963 = vunpack.c.l.b16 %v2578
      %v2964 = vunpack.c.l.b16 %v2579
      %v2965 = vunpack.c.l.b16 %v2580
      %v2966 = vunpack.c.l.b16 %v2581
      %v2967 = vunpack.c.l.b16 %v2582
      %v2968 = vunpack.c.l.b16 %v2583
      %v2969 = vunpack.c.l.b16 %v2584
      %v2970 = vunpack.c.l.b16 %v2585
      %v2971 = vunpack.c.l.b16 %v2586
      %v2972 = vunpack.c.l.b16 %v2587
      %v2973 = vunpack.c.l.b16 %v2588
      %v2974 = vunpack.c.l.b16 %v2589
      %v2975 = vunpack.c.l.b16 %v2590
      %v2976 = vunpack.c.l.b16 %v2591
      %v2977 = vunpack.c.l.b16 %v2592
      %v2978 = vunpack.c.l.b16 %v2593
      %v2979 = vunpack.c.l.b16 %v2594
      %v2980 = vunpack.c.l.b16 %v2595
      %v2981 = vunpack.c.l.b16 %v2596
      %v2982 = vunpack.c.l.b16 %v2597
      %v2983 = vunpack.c.l.b16 %v2598
      %v2984 = vunpack.c.l.b16 %v2599
      %v2985 = vunpack.c.l.b16 %v2600
      %v2986 = vunpack.c.l.b16 %v2601
      %v2987 = vunpack.c.l.b16 %v2602
      %v2988 = vunpack.c.l.b16 %v2603
      %v2989 = vunpack.c.l.b16 %v2604
      %v2990 = vunpack.c.l.b16 %v2605
      %v2991 = vpack.c.b16 %v2864, %v2863
      %v2992 = vpack.c.b16 %v2866, %v2865
      %v2993 = vpack.c.b16 %v2868, %v2867
      %v2994 = vpack.c.b16 %v2870, %v2869
      %v2995 = vpack.c.b16 %v2872, %v2871
      %v2996 = vpack.c.b16 %v2874, %v2873
      %v2997 = vpack.c.b16 %v2876, %v2875
      %v2998 = vpack.c.b16 %v2878, %v2877
      %v2999 = vpack.c.b16 %v2880, %v2879
      %v3000 = vpack.c.b16 %v2882, %v2881
      %v3001 = vpack.c.b16 %v2884, %v2883
      %v3002 = vpack.c.b16 %v2886, %v2885
      %v3003 = vpack.c.b16 %v2888, %v2887
      %v3004 = vpack.c.b16 %v2890, %v2889
      %v3005 = vpack.c.b16 %v2892, %v2891
      %v3006 = vpack.c.b16 %v2894, %v2893
      %v3007 = vpack.c.b16 %v2896, %v2895
      %v3008 = vpack.c.b16 %v2898, %v2897
      %v3009 = vpack.c.b16 %v2900, %v2899
      %v3010 = vpack.c.b16 %v2902, %v2901
      %v3011 = vpack.c.b16 %v2904, %v2903
      %v3012 = vpack.c.b16 %v2906, %v2905
      %v3013 = vpack.c.b16 %v2908, %v2907
      %v3014 = vpack.c.b16 %v2910, %v2909
      %v3015 = vpack.c.b16 %v2912, %v2911
      %v3016 = vpack.c.b16 %v2914, %v2913
      %v3017 = vpack.c.b16 %v2916, %v2915
      %v3018 = vpack.c.b16 %v2918, %v2917
      %v3019 = vpack.c.b16 %v2920, %v2919
      %v3020 = vpack.c.b16 %v2922, %v2921
      %v3021 = vpack.c.b16 %v2924, %v2923
      %v3022 = vpack.c.b16 %v2926, %v2925
      %v3023 = vpack.c.b16 %v2928, %v2927
      %v3024 = vpack.c.b16 %v2930, %v2929
      %v3025 = vpack.c.b16 %v2932, %v2931
      %v3026 = vpack.c.b16 %v2934, %v2933
      %v3027 = vpack.c.b16 %v2936, %v2935
      %v3028 = vpack.c.b16 %v2938, %v2937
      %v3029 = vpack.c.b16 %v2940, %v2939
      %v3030 = vpack.c.b16 %v2942, %v2941
      %v3031 = vpack.c.b16 %v2944, %v2943
      %v3032 = vpack.c.b16 %v2946, %v2945
      %v3033 = vpack.c.b16 %v2948, %v2947
      %v3034 = vpack.c.b16 %v2950, %v2949
      %v3035 = vpack.c.b16 %v2952, %v2951
      %v3036 = vpack.c.b16 %v2954, %v2953
      %v3037 = vpack.c.b16 %v2956, %v2955
      %v3038 = vpack.c.b16 %v2958, %v2957
      %v3039 = vpack.c.b16 %v2960, %v2959
      %v3040 = vpack.c.b16 %v2962, %v2961
      %v3041 = vpack.c.b16 %v2964, %v2963
      %v3042 = vpack.c.b16 %v2966, %v2965
      %v3043 = vpack.c.b16 %v2968, %v2967
      %v3044 = vpack.c.b16 %v2970, %v2969
      %v3045 = vpack.c.b16 %v2972, %v2971
      %v3046 = vpack.c.b16 %v2974, %v2973
      %v3047 = vpack.c.b16 %v2976, %v2975
      %v3048 = vpack.c.b16 %v2978, %v2977
      %v3049 = vpack.c.b16 %v2980, %v2979
      %v3050 = vpack.c.b16 %v2982, %v2981
      %v3051 = vpack.c.b16 %v2984, %v2983
      %v3052 = vpack.c.b16 %v2986, %v2985
      %v3053 = vpack.c.b16 %v2988, %v2987
      %v3054 = vpack.c.b16 %v2990, %v2989
      %3119 = vmatprep.subr.bf16.mxu0 0
      %3120 = vmatpush1.bf16.msra.mxu0 %v2991
      %3121 = vmatprep.subr.bf16.mxu0 0
      %3122 = vmatpush1.bf16.msra.mxu0 %v2992
      %3123 = vmatprep.subr.bf16.mxu0 0
      %3124 = vmatpush1.bf16.msra.mxu0 %v2993
      %3125 = vmatprep.subr.bf16.mxu0 0
      %3126 = vmatpush1.bf16.msra.mxu0 %v2994
      %3127 = vmatprep.subr.bf16.mxu0 0
      %3128 = vmatpush1.bf16.msra.mxu0 %v2995
      %3129 = vmatprep.subr.bf16.mxu0 0
      %3130 = vmatpush1.bf16.msra.mxu0 %v2996
      %3131 = vmatprep.subr.bf16.mxu0 0
      %3132 = vmatpush1.bf16.msra.mxu0 %v2997
      %3133 = vmatprep.subr.bf16.mxu0 0
      %3134 = vmatpush1.bf16.msra.mxu0 %v2998
      %3135 = vmatprep.subr.bf16.mxu0 0
      %3136 = vmatpush1.bf16.msra.mxu0 %v2999
      %3137 = vmatprep.subr.bf16.mxu0 0
      %3138 = vmatpush1.bf16.msra.mxu0 %v3000
      %3139 = vmatprep.subr.bf16.mxu0 0
      %3140 = vmatpush1.bf16.msra.mxu0 %v3001
      %3141 = vmatprep.subr.bf16.mxu0 0
      %3142 = vmatpush1.bf16.msra.mxu0 %v3002
      %3143 = vmatprep.subr.bf16.mxu0 0
      %3144 = vmatpush1.bf16.msra.mxu0 %v3003
      %3145 = vmatprep.subr.bf16.mxu0 0
      %3146 = vmatpush1.bf16.msra.mxu0 %v3004
      %3147 = vmatprep.subr.bf16.mxu0 0
      %3148 = vmatpush1.bf16.msra.mxu0 %v3005
      %3149 = vmatprep.subr.bf16.mxu0 0
      %3150 = vmatpush1.bf16.msra.mxu0 %v3006
      %3151 = vmatprep.mubr.bf16.mxu0 %v2463
      %3152 = vmatmul.mubr.bf16.gmra.mrb[0].mxu0 %v2462
      %v3153 = vpop.f32.mrb[0].mxu0
      %v3154 = vadd.f32 %v2721, %v3153
      %v3155 = vpop.f32.mrb[0].mxu0
      %v3156 = vpop.f32.mrb[0].mxu0
      %v3157 = vadd.f32 %v2724, %v3156
      %v3158 = vpop.f32.mrb[0].mxu0
      %3159 = vmatprep.mubr.bf16.mxu0 %v2471
      %3160 = vmatmul.mubr.bf16.gmra.mrb[0].mxu0 %v2470
      %v3161 = vpop.f32.mrb[0].mxu0
      %v3162 = vadd.f32 %v2729, %v3161
      %v3163 = vpop.f32.mrb[0].mxu0
      %v3164 = vpop.f32.mrb[0].mxu0
      %v3165 = vadd.f32 %v2732, %v3164
      %v3166 = vpop.f32.mrb[0].mxu0
      %3167 = vdwg.mxu0
      %3168 = vmatprep.subr.bf16.mxu0 0
      %3169 = vmatpush1.bf16.msra.mxu0 %v3007
      %3170 = vmatprep.subr.bf16.mxu0 0
      %3171 = vmatpush1.bf16.msra.mxu0 %v3008
      %3172 = vmatprep.subr.bf16.mxu0 0
      %3173 = vmatpush1.bf16.msra.mxu0 %v3009
      %3174 = vmatprep.subr.bf16.mxu0 0
      %3175 = vmatpush1.bf16.msra.mxu0 %v3010
      %3176 = vmatprep.subr.bf16.mxu0 0
      %3177 = vmatpush1.bf16.msra.mxu0 %v3011
      %3178 = vmatprep.subr.bf16.mxu0 0
      %3179 = vmatpush1.bf16.msra.mxu0 %v3012
      %3180 = vmatprep.subr.bf16.mxu0 0
      %3181 = vmatpush1.bf16.msra.mxu0 %v3013
      %3182 = vmatprep.subr.bf16.mxu0 0
      %3183 = vmatpush1.bf16.msra.mxu0 %v3014
      %3184 = vmatprep.subr.bf16.mxu0 0
      %3185 = vmatpush1.bf16.msra.mxu0 %v3015
      %3186 = vmatprep.subr.bf16.mxu0 0
      %3187 = vmatpush1.bf16.msra.mxu0 %v3016
      %3188 = vmatprep.subr.bf16.mxu0 0
      %3189 = vmatpush1.bf16.msra.mxu0 %v3017
      %3190 = vmatprep.subr.bf16.mxu0 0
      %3191 = vmatpush1.bf16.msra.mxu0 %v3018
      %3192 = vmatprep.subr.bf16.mxu0 0
      %3193 = vmatpush1.bf16.msra.mxu0 %v3019
      %3194 = vmatprep.subr.bf16.mxu0 0
      %3195 = vmatpush1.bf16.msra.mxu0 %v3020
      %3196 = vmatprep.subr.bf16.mxu0 0
      %3197 = vmatpush1.bf16.msra.mxu0 %v3021
      %3198 = vmatprep.subr.bf16.mxu0 0
      %3199 = vmatpush1.bf16.msra.mxu0 %v3022
      %3200 = vmatprep.mubr.bf16.mxu0 %v2465
      %3201 = vmatmul.mubr.bf16.gmra.mrb[0].mxu0 %v2464
      %v3202 = vpop.f32.mrb[0].mxu0
      %v3203 = vadd.f32 %v3154, %v3202
      %v3204 = vpop.f32.mrb[0].mxu0
      %v3205 = vpop.f32.mrb[0].mxu0
      %v3206 = vadd.f32 %v3157, %v3205
      %v3207 = vpop.f32.mrb[0].mxu0
      %3208 = vmatprep.mubr.bf16.mxu0 %v2473
      %3209 = vmatmul.mubr.bf16.gmra.mrb[0].mxu0 %v2472
      %v3210 = vpop.f32.mrb[0].mxu0
      %v3211 = vadd.f32 %v3162, %v3210
      %v3212 = vpop.f32.mrb[0].mxu0
      %v3213 = vpop.f32.mrb[0].mxu0
      %v3214 = vadd.f32 %v3165, %v3213
      %v3215 = vpop.f32.mrb[0].mxu0
      %3216 = vdwg.mxu0
      %3217 = vmatprep.subr.bf16.mxu0 0
      %3218 = vmatpush1.bf16.msra.mxu0 %v3023
      %3219 = vmatprep.subr.bf16.mxu0 0
      %3220 = vmatpush1.bf16.msra.mxu0 %v3024
      %3221 = vmatprep.subr.bf16.mxu0 0
      %3222 = vmatpush1.bf16.msra.mxu0 %v3025
      %3223 = vmatprep.subr.bf16.mxu0 0
      %3224 = vmatpush1.bf16.msra.mxu0 %v3026
      %3225 = vmatprep.subr.bf16.mxu0 0
      %3226 = vmatpush1.bf16.msra.mxu0 %v3027
      %3227 = vmatprep.subr.bf16.mxu0 0
      %3228 = vmatpush1.bf16.msra.mxu0 %v3028
      %3229 = vmatprep.subr.bf16.mxu0 0
      %3230 = vmatpush1.bf16.msra.mxu0 %v3029
      %3231 = vmatprep.subr.bf16.mxu0 0
      %3232 = vmatpush1.bf16.msra.mxu0 %v3030
      %3233 = vmatprep.subr.bf16.mxu0 0
      %3234 = vmatpush1.bf16.msra.mxu0 %v3031
      %3235 = vmatprep.subr.bf16.mxu0 0
      %3236 = vmatpush1.bf16.msra.mxu0 %v3032
      %3237 = vmatprep.subr.bf16.mxu0 0
      %3238 = vmatpush1.bf16.msra.mxu0 %v3033
      %3239 = vmatprep.subr.bf16.mxu0 0
      %3240 = vmatpush1.bf16.msra.mxu0 %v3034
      %3241 = vmatprep.subr.bf16.mxu0 0
      %3242 = vmatpush1.bf16.msra.mxu0 %v3035
      %3243 = vmatprep.subr.bf16.mxu0 0
      %3244 = vmatpush1.bf16.msra.mxu0 %v3036
      %3245 = vmatprep.subr.bf16.mxu0 0
      %3246 = vmatpush1.bf16.msra.mxu0 %v3037
      %3247 = vmatprep.subr.bf16.mxu0 0
      %3248 = vmatpush1.bf16.msra.mxu0 %v3038
      %3249 = vmatprep.mubr.bf16.mxu0 %v2467
      %3250 = vmatmul.mubr.bf16.gmra.mrb[0].mxu0 %v2466
      %v3251 = vpop.f32.mrb[0].mxu0
      %v3252 = vadd.f32 %v3203, %v3251
      %v3253 = vpop.f32.mrb[0].mxu0
      %v3254 = vpop.f32.mrb[0].mxu0
      %v3255 = vadd.f32 %v3206, %v3254
      %v3256 = vpop.f32.mrb[0].mxu0
      %3257 = vmatprep.mubr.bf16.mxu0 %v2475
      %3258 = vmatmul.mubr.bf16.gmra.mrb[0].mxu0 %v2474
      %v3259 = vpop.f32.mrb[0].mxu0
      %v3260 = vadd.f32 %v3211, %v3259
      %v3261 = vpop.f32.mrb[0].mxu0
      %v3262 = vpop.f32.mrb[0].mxu0
      %v3263 = vadd.f32 %v3214, %v3262
      %v3264 = vpop.f32.mrb[0].mxu0
      %3265 = vdwg.mxu0
      %3266 = vmatprep.subr.bf16.mxu0 0
      %3267 = vmatpush1.bf16.msra.mxu0 %v3039
      %3268 = vmatprep.subr.bf16.mxu0 0
      %3269 = vmatpush1.bf16.msra.mxu0 %v3040
      %3270 = vmatprep.subr.bf16.mxu0 0
      %3271 = vmatpush1.bf16.msra.mxu0 %v3041
      %3272 = vmatprep.subr.bf16.mxu0 0
      %3273 = vmatpush1.bf16.msra.mxu0 %v3042
      %3274 = vmatprep.subr.bf16.mxu0 0
      %3275 = vmatpush1.bf16.msra.mxu0 %v3043
      %3276 = vmatprep.subr.bf16.mxu0 0
      %3277 = vmatpush1.bf16.msra.mxu0 %v3044
      %3278 = vmatprep.subr.bf16.mxu0 0
      %3279 = vmatpush1.bf16.msra.mxu0 %v3045
      %3280 = vmatprep.subr.bf16.mxu0 0
      %3281 = vmatpush1.bf16.msra.mxu0 %v3046
      %3282 = vmatprep.subr.bf16.mxu0 0
      %3283 = vmatpush1.bf16.msra.mxu0 %v3047
      %3284 = vmatprep.subr.bf16.mxu0 0
      %3285 = vmatpush1.bf16.msra.mxu0 %v3048
      %3286 = vmatprep.subr.bf16.mxu0 0
      %3287 = vmatpush1.bf16.msra.mxu0 %v3049
      %3288 = vmatprep.subr.bf16.mxu0 0
      %3289 = vmatpush1.bf16.msra.mxu0 %v3050
      %3290 = vmatprep.subr.bf16.mxu0 0
      %3291 = vmatpush1.bf16.msra.mxu0 %v3051
      %3292 = vmatprep.subr.bf16.mxu0 0
      %3293 = vmatpush1.bf16.msra.mxu0 %v3052
      %3294 = vmatprep.subr.bf16.mxu0 0
      %3295 = vmatpush1.bf16.msra.mxu0 %v3053
      %3296 = vmatprep.subr.bf16.mxu0 0
      %3297 = vmatpush1.bf16.msra.mxu0 %v3054
      %3298 = vmatprep.mubr.bf16.mxu0 %v2469
      %3299 = vmatmul.mubr.bf16.gmra.mrb[0].mxu0 %v2468
      %v3300 = vpop.f32.mrb[0].mxu0
      %v3301 = vadd.f32 %v3252, %v3300
      %v3302 = vpop.f32.mrb[0].mxu0
      %v3303 = vpop.f32.mrb[0].mxu0
      %v3304 = vadd.f32 %v3255, %v3303
      %v3305 = vpop.f32.mrb[0].mxu0
      %3306 = vmatprep.mubr.bf16.mxu0 %v2477
      %3307 = vmatmul.mubr.bf16.gmra.mrb[0].mxu0 %v2476
      %v3308 = vpop.f32.mrb[0].mxu0
      %v3309 = vadd.f32 %v3260, %v3308
      %v3310 = vpop.f32.mrb[0].mxu0
      %v3311 = vpop.f32.mrb[0].mxu0
      %v3312 = vadd.f32 %v3263, %v3311
      %v3313 = vpop.f32.mrb[0].mxu0
      %3314 = vdwg.mxu0
      %v3315 = vld [vmem:[%s12] sm:$0x1]
      %v3317 = vlaneseq
      %v3318 = vshrl.u32 %v3317, 7
      %v3319 = vsub.s32 0, %v3318
      %v3320 = vrot.slane %v3315, %v3319
      %v3322 = vadd.f32 %v3301, %v3320
      %v3323 = vadd.f32 %v3304, %v3320
      %v3324 = vadd.f32 %v3309, %v3320
      %v3325 = vadd.f32 %v3312, %v3320
      %vm3326 = vcmask 130048
      %3327 = vst.msk [vmem:[%s539] sm:$0xff] %vm3326, %v3322
      %3328 = vst.msk [vmem:[%s539 + $0x8] sm:$0xff] %vm3326, %v3323
      %3329 = vst.msk [vmem:[%s539 + $0x10] sm:$0xff] %vm3326, %v3324
      %3330 = vst.msk [vmem:[%s539 + $0x18] sm:$0xff] %vm3326, %v3325
      %s3331 = smul.u32 4, %s28
      %p3332 = scmp.lt.s32.totalorder %s29, 3
      %s3333 = scalar_select %p3332, %s29, 3
      %p3334 = scmp.lt.s32.totalorder %s3331, 3
      %s3335 = scalar_select %p3334, %s3331, 3
      %s3336 = smul.addr %s3333, 4
      %s3337 = sadd.s32 %s3335, %s3336
      %s3338 = smul.addr %s3337, 8
      %s3339 = scalar_lea.vmem %s13, %s3338
      // Predicated region
      $region77: #{table_decoder_forward.1} parent=71 // pred_check
        %p3340 = pneg %p348
      $region78: #{table_decoder_forward.1} parent=71 // pred_check_branch
        %3342 = sbr.rel (%p3340) target = $region80
      $region79: #{table_decoder_forward.1} parent=71 // pred_region
        %s3343 = smul.u32 4, %s28
      $region80: #{table_decoder_forward.1} parent=71 // pred_fallthru
        _
    $region72: #{table_decoder_forward.1} parent=5 // pred_fallthru
      _
    %p3344 = scmp.le.s32.totalorder 2, %s19
    // Predicated region
    $region81: #{table_decoder_forward.1} parent=5 // pred_check
      %p3345 = pneg %p3344
    $region82: #{table_decoder_forward.1} parent=5 // pred_check_branch
      %3347 = sbr.rel (%p3345) target = $region84
    $region83: #{table_decoder_forward.1} parent=5 // pred_region
      %s3348 = ssub.s32 %s19, 2
      // Predicated region
      $region85: #{table_decoder_forward.1} parent=83 // pred_check
        %p3349 = pneg %p354
      $region86: #{table_decoder_forward.1} parent=83 // pred_check_branch
        %3351 = sbr.rel (%p3349) target = $region88
      $region87: #{table_decoder_forward.1} parent=83 // pred_region
        %s3352 = smul.u32 4, %s30
        %p3353 = scmp.lt.s32.totalorder %s31, 3
        %s3354 = scalar_select %p3353, %s31, 3
        %p3355 = scmp.lt.s32.totalorder %s3352, 3
        %s3356 = scalar_select %p3355, %s3352, 3
        %s3357 = smul.addr %s3354, 4
        %s3358 = sadd.s32 %s3356, %s3357
        %s3359 = smul.addr %s3358, 8
        %s3360 = scalar_lea.vmem %s13, %s3359
      $region88: #{table_decoder_forward.1} parent=83 // pred_fallthru
        _
    $region84: #{table_decoder_forward.1} parent=5 // pred_fallthru
      _
  $region6: #{table_decoder_forward.1} parent=0 // loop_footer
    %s23 = sadd.s32 1, %s19
  $region7: #{table_decoder_forward.1} parent=0 // loop_footer_branch
    %18 = sbr.rel target = $region3
  $region8: #{table_decoder_forward.1} parent=0 // loop_exit
    _

</llo_original>
